<compile_context>
chip_gen: v6e
topology: v6e:2x2x1
jax: 0.10.0
libtpu: 0.0.40
codegen_flags: <defaults>
</compile_context>

<pallas_src>
from functools import partial

import jax
import jax.numpy as jnp
from jax.experimental import pallas as pl
from jax.experimental.pallas import tpu as pltpu

HIDDEN = 1280
EMBED = 128
TH = 256                      # hidden-dim tile (multiple of 128)
N_TILES = HIDDEN // TH        # 5


# ---------------- fused Pallas kernel ----------------

def _swav_kernel(p_ref, cw_ref, cb_ref, ew_ref, eb_ref,
                 w1_ref, b1_ref, g_ref, be_ref, w2_ref, b2_ref, wp_ref,
                 o_ref,
                 pooled_ref, feats_ref, zacc_ref, *, batch, hw):
    f32 = jnp.float32
    bf16 = jnp.bfloat16
    j = pl.program_id(0)

    # ---- stem + GAP + expand: run once (first hidden tile), cache result ----
    @pl.when(j == 0)
    def _():
        # Backbone stem: conv 3x3 / s2 as an im2col matmul (K padded 27->32),
        # + bias + SiLU.  Feature ordering of conv_general_dilated_patches is
        # channel-major (c, kh, kw), matching conv_w.reshape(32, C*9) in wmat.
        y = jnp.dot(p_ref[...], cw_ref[...], preferred_element_type=f32)
        y = y + cb_ref[...]
        feat = y * jax.nn.sigmoid(y)                    # [B*Ho*Wo, 32] f32

        # Per-image global average pool (plain 2-D sublane reduce per image).
        for b in range(batch):
            pooled_ref[pl.ds(b, 1), :] = jnp.mean(
                feat[b * hw:(b + 1) * hw, :], axis=0, keepdims=True)

        # TODO(synk): proxy for the pretrained EfficientNet-b0 MBConv stack:
        # GAP + Linear(32 -> 1280) + SiLU stands in for backbone(x).flatten(1).
        e = jnp.dot(pooled_ref[...].astype(bf16), ew_ref[...],
                    preferred_element_type=f32)
        e = e + eb_ref[...]
        feats_ref[...] = (e * jax.nn.sigmoid(e)).astype(bf16)   # [B, 1280]
        zacc_ref[...] = jnp.zeros_like(zacc_ref)

    # ---- SwaVProjectionHead(1280, 1280, 128), tiled over the hidden dim ----
    h = jnp.dot(feats_ref[...], w1_ref[...], preferred_element_type=f32)
    h = h + b1_ref[...]
    # TODO(synk): BatchNorm1d applied in eval form (running stats = identity),
    # not train-mode batch statistics.
    h = h * g_ref[...] + be_ref[...]
    h = jnp.maximum(h, 0.0)                             # ReLU, [B, TH] f32
    zacc_ref[...] += jnp.dot(h.astype(bf16), w2_ref[...],
                             preferred_element_type=f32)          # [B, 128]

    # ---- finalize: bias, L2 normalize, prototypes ----
    @pl.when(j == pl.num_programs(0) - 1)
    def _():
        z = zacc_ref[...] + b2_ref[...]
        # F.normalize(z, dim=1, p=2, eps=1e-12) via rsqrt (EUP)
        sumsq = jnp.sum(z * z, axis=1, keepdims=True)
        z = z * jax.lax.rsqrt(jnp.maximum(sumsq, 1e-24))
        # SwaVPrototypes: Linear(128 -> 1280, bias=False)
        o_ref[...] = jnp.dot(z.astype(bf16), wp_ref[...],
                             preferred_element_type=f32)


# ---------------- parameters (deterministic, synthetic) ----------------

def init_params(key):
    """All weight prep (reshape / transpose / pad / bf16 cast) happens here,
    once, so the jitted forward has no per-step weight plumbing."""
    ks = jax.random.split(key, 9)
    bf = jnp.bfloat16
    C, K, Kp = 3, 27, 32
    p = {}
    conv_w = jax.random.normal(ks[0], (32, C, 3, 3), jnp.float32) * 0.05
    # im2col matmul operand [Kp, 32]: flatten (C, kH, kW) -> channel-major K,
    # transpose, pad 27 -> 32.
    p["conv_wmat"] = jnp.pad(conv_w.reshape(32, K).T,
                             ((0, Kp - K), (0, 0))).astype(bf)
    p["conv_b"] = jax.random.normal(ks[1], (1, 32), jnp.float32) * 0.05
    p["exp_w"] = (jax.random.normal(ks[2], (32, HIDDEN), jnp.float32) * 0.05).astype(bf)
    p["exp_b"] = jax.random.normal(ks[3], (1, HIDDEN), jnp.float32) * 0.05
    p["w1"] = (jax.random.normal(ks[4], (HIDDEN, HIDDEN), jnp.float32) * 0.02).astype(bf)
    p["b1"] = jax.random.normal(ks[5], (1, HIDDEN), jnp.float32) * 0.02
    p["bn_g"] = jnp.ones((1, HIDDEN), jnp.float32)
    p["bn_b"] = jnp.zeros((1, HIDDEN), jnp.float32)
    p["w2"] = (jax.random.normal(ks[6], (HIDDEN, EMBED), jnp.float32) * 0.02).astype(bf)
    p["b2"] = jax.random.normal(ks[7], (1, EMBED), jnp.float32) * 0.02
    p["proto_w"] = (jax.random.normal(ks[8], (EMBED, HIDDEN), jnp.float32) * 0.02).astype(bf)
    return p


# ---------------- forward ----------------

def swav_forward(params, x_nchw):
    B, C, H, W = x_nchw.shape
    K, Kp = C * 9, 32

    # im2col built channel-last (transpose only the small image, not the 9x
    # larger patch tensor); feature ordering is channel-major (c, kh, kw).
    x_nhwc = jnp.transpose(x_nchw, (0, 2, 3, 1))
    patches = jax.lax.conv_general_dilated_patches(
        x_nhwc, filter_shape=(3, 3), window_strides=(2, 2),
        padding=((1, 1), (1, 1)),
        dimension_numbers=("NHWC", "HWIO", "NHWC"))        # [B, Ho, Wo, C*9]
    Ho, Wo = patches.shape[1], patches.shape[2]
    HW = Ho * Wo
    N = B * HW
    pmat = patches.reshape(N, K)
    pmat = jnp.pad(pmat, ((0, 0), (0, Kp - K))).astype(jnp.bfloat16)

    kernel = partial(_swav_kernel, batch=B, hw=HW)

    out = pl.pallas_call(
        kernel,
        out_shape=jax.ShapeDtypeStruct((B, HIDDEN), jnp.float32),
        grid_spec=pltpu.PrefetchScalarGridSpec(
            num_scalar_prefetch=0,
            grid=(N_TILES,),
            in_specs=[
                pl.BlockSpec((N, Kp), lambda j: (0, 0)),           # pmat
                pl.BlockSpec((Kp, 32), lambda j: (0, 0)),          # conv_wmat
                pl.BlockSpec((1, 32), lambda j: (0, 0)),           # conv_b
                pl.BlockSpec((32, HIDDEN), lambda j: (0, 0)),      # exp_w
                pl.BlockSpec((1, HIDDEN), lambda j: (0, 0)),       # exp_b
                pl.BlockSpec((HIDDEN, TH), lambda j: (0, j)),      # w1 (col tile)
                pl.BlockSpec((1, TH), lambda j: (0, j)),           # b1
                pl.BlockSpec((1, TH), lambda j: (0, j)),           # bn_g
                pl.BlockSpec((1, TH), lambda j: (0, j)),           # bn_b
                pl.BlockSpec((TH, EMBED), lambda j: (j, 0)),       # w2 (row tile)
                pl.BlockSpec((1, EMBED), lambda j: (0, 0)),        # b2
                pl.BlockSpec((EMBED, HIDDEN), lambda j: (0, 0)),   # proto_w
            ],
            out_specs=pl.BlockSpec((B, HIDDEN), lambda j: (0, 0)),
            scratch_shapes=[
                pltpu.VMEM((B, 32), jnp.float32),       # pooled
                pltpu.VMEM((B, HIDDEN), jnp.bfloat16),  # cached backbone feature
                pltpu.VMEM((B, EMBED), jnp.float32),    # z accumulator
            ],
        ),
        compiler_params=pltpu.CompilerParams(
            dimension_semantics=("arbitrary",),
            vmem_limit_bytes=12 * 1024 * 1024),
    )(pmat, params["conv_wmat"], params["conv_b"], params["exp_w"],
      params["exp_b"], params["w1"], params["b1"], params["bn_g"],
      params["bn_b"], params["w2"], params["b2"], params["proto_w"])
    return out


if __name__ == "__main__":
    key = jax.random.PRNGKey(0)
    pkey, xkey = jax.random.split(key)
    params = init_params(pkey)
    x = jax.random.normal(xkey, (2, 3, 32, 32), jnp.float32)   # small NCHW batch

    out = jax.jit(swav_forward)(params, x)
    out = jax.block_until_ready(out)

    assert out.shape == (2, HIDDEN), out.shape
    assert bool(jnp.all(jnp.isfinite(out)))
    print("KERNEL_OK")
</pallas_src>

<mosaic_0001>
module attributes {stable_mosaic.version = 11 : i64} {
  func.func @_swav_kernel(%arg0: i32, %arg1: memref<512x32xbf16, #tpu.memory_space<vmem>>, %arg2: memref<32x32xbf16, #tpu.memory_space<vmem>>, %arg3: memref<1x32xf32, #tpu.memory_space<vmem>>, %arg4: memref<32x1280xbf16, #tpu.memory_space<vmem>>, %arg5: memref<1x1280xf32, #tpu.memory_space<vmem>>, %arg6: memref<1280x256xbf16, #tpu.memory_space<vmem>>, %arg7: memref<1x256xf32, #tpu.memory_space<vmem>>, %arg8: memref<1x256xf32, #tpu.memory_space<vmem>>, %arg9: memref<1x256xf32, #tpu.memory_space<vmem>>, %arg10: memref<256x128xbf16, #tpu.memory_space<vmem>>, %arg11: memref<1x128xf32, #tpu.memory_space<vmem>>, %arg12: memref<128x1280xbf16, #tpu.memory_space<vmem>>, %arg13: memref<2x1280xf32, #tpu.memory_space<vmem>>, %arg14: memref<2x32xf32, #tpu.memory_space<vmem>>, %arg15: memref<2x1280xbf16, #tpu.memory_space<vmem>>, %arg16: memref<2x128xf32, #tpu.memory_space<vmem>>) attributes {dimension_semantics = [#tpu.dimension_semantics<arbitrary>], iteration_bounds = array<i64: 5>, scalar_prefetch = 0 : i64, scratch_operands = 3 : i64, tpu.core_type = #tpu.core_type<tc>, window_params = [{pipeline_mode = #tpu.pipeline_mode<synchronous>, transform_indices = @transform_0, window_bounds = array<i64: 512, 32>}, {pipeline_mode = #tpu.pipeline_mode<synchronous>, transform_indices = @transform_1, window_bounds = array<i64: 32, 32>}, {pipeline_mode = #tpu.pipeline_mode<synchronous>, transform_indices = @transform_2, window_bounds = array<i64: 1, 32>}, {pipeline_mode = #tpu.pipeline_mode<synchronous>, transform_indices = @transform_3, window_bounds = array<i64: 32, 1280>}, {pipeline_mode = #tpu.pipeline_mode<synchronous>, transform_indices = @transform_4, window_bounds = array<i64: 1, 1280>}, {transform_indices = @transform_5, window_bounds = array<i64: 1280, 256>}, {transform_indices = @transform_6, window_bounds = array<i64: 1, 256>}, {transform_indices = @transform_7, window_bounds = array<i64: 1, 256>}, {transform_indices = @transform_8, window_bounds = array<i64: 1, 256>}, {transform_indices = @transform_9, window_bounds = array<i64: 256, 128>}, {pipeline_mode = #tpu.pipeline_mode<synchronous>, transform_indices = @transform_10, window_bounds = array<i64: 1, 128>}, {pipeline_mode = #tpu.pipeline_mode<synchronous>, transform_indices = @transform_11, window_bounds = array<i64: 128, 1280>}, {pipeline_mode = #tpu.pipeline_mode<synchronous>, transform_indices = @transform_12, window_bounds = array<i64: 2, 1280>}]} {
    %c0_i32 = arith.constant 0 : i32
    %0 = arith.cmpi eq, %arg0, %c0_i32 : i32
    %1 = arith.extui %0 : i1 to i32
    %c0_i32_0 = arith.constant 0 : i32
    %2 = arith.cmpi ne, %1, %c0_i32_0 : i32
    scf.if %2 {
      %c0_19 = arith.constant 0 : index
      %c0_20 = arith.constant 0 : index
      %26 = vector.load %arg1[%c0_19, %c0_20] : memref<512x32xbf16, #tpu.memory_space<vmem>>, vector<512x32xbf16>
      %c0_21 = arith.constant 0 : index
      %c0_22 = arith.constant 0 : index
      %27 = vector.load %arg2[%c0_21, %c0_22] : memref<32x32xbf16, #tpu.memory_space<vmem>>, vector<32x32xbf16>
      %cst_23 = arith.constant dense<0.000000e+00> : vector<512x32xf32>
      %28 = tpu.matmul %26, %27, %cst_23 {dimension_numbers = #tpu.dot_dimension_numbers<[1], [0], [0], [1], [0, 0, 1, 1], [], []>} : vector<512x32xbf16>, vector<32x32xbf16>, vector<512x32xf32> -> vector<512x32xf32>
      %c0_24 = arith.constant 0 : index
      %c0_25 = arith.constant 0 : index
      %29 = vector.load %arg3[%c0_24, %c0_25] : memref<1x32xf32, #tpu.memory_space<vmem>>, vector<1x32xf32>
      %30 = vector.broadcast %29 : vector<1x32xf32> to vector<512x32xf32>
      %31 = arith.addf %28, %30 : vector<512x32xf32>
      %32 = arith.negf %31 : vector<512x32xf32>
      %33 = math.exp %32 : vector<512x32xf32>
      %cst_26 = arith.constant 1.000000e+00 : f32
      %34 = vector.broadcast %cst_26 : f32 to vector<512x32xf32>
      %35 = arith.addf %34, %33 : vector<512x32xf32>
      %36 = arith.divf %34, %35 : vector<512x32xf32>
      %37 = arith.mulf %31, %36 : vector<512x32xf32>
      %38 = vector.extract_strided_slice %37 {offsets = [0, 0], sizes = [256, 32], strides = [1, 1]} : vector<512x32xf32> to vector<256x32xf32>
      %cst_27 = arith.constant dense<0.000000e+00> : vector<32xf32>
      %39 = vector.multi_reduction <add>, %38, %cst_27 [0] : vector<256x32xf32> to vector<32xf32>
      %40 = vector.shape_cast %39 : vector<32xf32> to vector<1x32xf32>
      %cst_28 = arith.constant 2.560000e+02 : f32
      %41 = vector.broadcast %cst_28 : f32 to vector<1x32xf32>
      %42 = arith.divf %40, %41 : vector<1x32xf32>
      %c0_29 = arith.constant 0 : index
      %c0_30 = arith.constant 0 : index
      %43 = vector.load %arg14[%c0_29, %c0_30] : memref<2x32xf32, #tpu.memory_space<vmem>>, vector<1x32xf32>
      tpu.vector_store %arg14[%c0_29, %c0_30], %42 {strides = array<i32>} : memref<2x32xf32, #tpu.memory_space<vmem>>, vector<1x32xf32>,
      %44 = vector.extract_strided_slice %37 {offsets = [256, 0], sizes = [256, 32], strides = [1, 1]} : vector<512x32xf32> to vector<256x32xf32>
      %cst_31 = arith.constant dense<0.000000e+00> : vector<32xf32>
      %45 = vector.multi_reduction <add>, %44, %cst_31 [0] : vector<256x32xf32> to vector<32xf32>
      %46 = vector.shape_cast %45 : vector<32xf32> to vector<1x32xf32>
      %cst_32 = arith.constant 2.560000e+02 : f32
      %47 = vector.broadcast %cst_32 : f32 to vector<1x32xf32>
      %48 = arith.divf %46, %47 : vector<1x32xf32>
      %c1 = arith.constant 1 : index
      %c0_33 = arith.constant 0 : index
      %49 = vector.load %arg14[%c1, %c0_33] : memref<2x32xf32, #tpu.memory_space<vmem>>, vector<1x32xf32>
      tpu.vector_store %arg14[%c1, %c0_33], %48 {strides = array<i32>} : memref<2x32xf32, #tpu.memory_space<vmem>>, vector<1x32xf32>,
      %c0_34 = arith.constant 0 : index
      %c0_35 = arith.constant 0 : index
      %50 = vector.load %arg14[%c0_34, %c0_35] : memref<2x32xf32, #tpu.memory_space<vmem>>, vector<2x32xf32>
      %51 = arith.truncf %50 : vector<2x32xf32> to vector<2x32xbf16>
      %c0_36 = arith.constant 0 : index
      %c0_37 = arith.constant 0 : index
      %52 = vector.load %arg4[%c0_36, %c0_37] : memref<32x1280xbf16, #tpu.memory_space<vmem>>, vector<32x1280xbf16>
      %cst_38 = arith.constant dense<0.000000e+00> : vector<2x1280xf32>
      %53 = tpu.matmul %51, %52, %cst_38 {dimension_numbers = #tpu.dot_dimension_numbers<[1], [0], [0], [1], [0, 0, 1, 1], [], []>} : vector<2x32xbf16>, vector<32x1280xbf16>, vector<2x1280xf32> -> vector<2x1280xf32>
      %c0_39 = arith.constant 0 : index
      %c0_40 = arith.constant 0 : index
      %54 = vector.load %arg5[%c0_39, %c0_40] : memref<1x1280xf32, #tpu.memory_space<vmem>>, vector<1x1280xf32>
      %55 = vector.broadcast %54 : vector<1x1280xf32> to vector<2x1280xf32>
      %56 = arith.addf %53, %55 : vector<2x1280xf32>
      %57 = arith.negf %56 : vector<2x1280xf32>
      %58 = math.exp %57 : vector<2x1280xf32>
      %cst_41 = arith.constant 1.000000e+00 : f32
      %59 = vector.broadcast %cst_41 : f32 to vector<2x1280xf32>
      %60 = arith.addf %59, %58 : vector<2x1280xf32>
      %61 = arith.divf %59, %60 : vector<2x1280xf32>
      %62 = arith.mulf %56, %61 : vector<2x1280xf32>
      %63 = arith.truncf %62 : vector<2x1280xf32> to vector<2x1280xbf16>
      %c0_42 = arith.constant 0 : index
      %c0_43 = arith.constant 0 : index
      %64 = vector.load %arg15[%c0_42, %c0_43] : memref<2x1280xbf16, #tpu.memory_space<vmem>>, vector<2x1280xbf16>
      tpu.vector_store %arg15[%c0_42, %c0_43], %63 {strides = array<i32>} : memref<2x1280xbf16, #tpu.memory_space<vmem>>, vector<2x1280xbf16>,
      %cst_44 = arith.constant 0.000000e+00 : f32
      %65 = vector.broadcast %cst_44 : f32 to vector<2x128xf32>
      %c0_45 = arith.constant 0 : index
      %c0_46 = arith.constant 0 : index
      %66 = vector.load %arg16[%c0_45, %c0_46] : memref<2x128xf32, #tpu.memory_space<vmem>>, vector<2x128xf32>
      tpu.vector_store %arg16[%c0_45, %c0_46], %65 {strides = array<i32>} : memref<2x128xf32, #tpu.memory_space<vmem>>, vector<2x128xf32>,
    } else {
    }
    %c0 = arith.constant 0 : index
    %c0_1 = arith.constant 0 : index
    %3 = vector.load %arg15[%c0, %c0_1] : memref<2x1280xbf16, #tpu.memory_space<vmem>>, vector<2x1280xbf16>
    %c0_2 = arith.constant 0 : index
    %c0_3 = arith.constant 0 : index
    %4 = vector.load %arg6[%c0_2, %c0_3] : memref<1280x256xbf16, #tpu.memory_space<vmem>>, vector<1280x256xbf16>
    %cst = arith.constant dense<0.000000e+00> : vector<2x256xf32>
    %5 = tpu.matmul %3, %4, %cst {dimension_numbers = #tpu.dot_dimension_numbers<[1], [0], [0], [1], [0, 0, 1, 1], [], []>} : vector<2x1280xbf16>, vector<1280x256xbf16>, vector<2x256xf32> -> vector<2x256xf32>
    %c0_4 = arith.constant 0 : index
    %c0_5 = arith.constant 0 : index
    %6 = vector.load %arg7[%c0_4, %c0_5] : memref<1x256xf32, #tpu.memory_space<vmem>>, vector<1x256xf32>
    %7 = vector.broadcast %6 : vector<1x256xf32> to vector<2x256xf32>
    %8 = arith.addf %5, %7 : vector<2x256xf32>
    %c0_6 = arith.constant 0 : index
    %c0_7 = arith.constant 0 : index
    %9 = vector.load %arg8[%c0_6, %c0_7] : memref<1x256xf32, #tpu.memory_space<vmem>>, vector<1x256xf32>
    %10 = vector.broadcast %9 : vector<1x256xf32> to vector<2x256xf32>
    %11 = arith.mulf %8, %10 : vector<2x256xf32>
    %c0_8 = arith.constant 0 : index
    %c0_9 = arith.constant 0 : index
    %12 = vector.load %arg9[%c0_8, %c0_9] : memref<1x256xf32, #tpu.memory_space<vmem>>, vector<1x256xf32>
    %13 = vector.broadcast %12 : vector<1x256xf32> to vector<2x256xf32>
    %14 = arith.addf %11, %13 : vector<2x256xf32>
    %cst_10 = arith.constant 0.000000e+00 : f32
    %15 = vector.broadcast %cst_10 : f32 to vector<2x256xf32>
    %16 = arith.maximumf %14, %15 : vector<2x256xf32>
    %c0_11 = arith.constant 0 : index
    %c0_12 = arith.constant 0 : index
    %17 = vector.load %arg16[%c0_11, %c0_12] : memref<2x128xf32, #tpu.memory_space<vmem>>, vector<2x128xf32>
    %18 = arith.truncf %16 : vector<2x256xf32> to vector<2x256xbf16>
    %c0_13 = arith.constant 0 : index
    %c0_14 = arith.constant 0 : index
    %19 = vector.load %arg10[%c0_13, %c0_14] : memref<256x128xbf16, #tpu.memory_space<vmem>>, vector<256x128xbf16>
    %cst_15 = arith.constant dense<0.000000e+00> : vector<2x128xf32>
    %20 = tpu.matmul %18, %19, %cst_15 {dimension_numbers = #tpu.dot_dimension_numbers<[1], [0], [0], [1], [0, 0, 1, 1], [], []>} : vector<2x256xbf16>, vector<256x128xbf16>, vector<2x128xf32> -> vector<2x128xf32>
    %21 = arith.addf %17, %20 : vector<2x128xf32>
    %c0_16 = arith.constant 0 : index
    %c0_17 = arith.constant 0 : index
    %22 = vector.load %arg16[%c0_16, %c0_17] : memref<2x128xf32, #tpu.memory_space<vmem>>, vector<2x128xf32>
    tpu.vector_store %arg16[%c0_16, %c0_17], %21 {strides = array<i32>} : memref<2x128xf32, #tpu.memory_space<vmem>>, vector<2x128xf32>,
    %c4_i32 = arith.constant 4 : i32
    %23 = arith.cmpi eq, %arg0, %c4_i32 : i32
    %24 = arith.extui %23 : i1 to i32
    %c0_i32_18 = arith.constant 0 : i32
    %25 = arith.cmpi ne, %24, %c0_i32_18 : i32
    scf.if %25 {
      %c0_19 = arith.constant 0 : index
      %c0_20 = arith.constant 0 : index
      %26 = vector.load %arg16[%c0_19, %c0_20] : memref<2x128xf32, #tpu.memory_space<vmem>>, vector<2x128xf32>
      %c0_21 = arith.constant 0 : index
      %c0_22 = arith.constant 0 : index
      %27 = vector.load %arg11[%c0_21, %c0_22] : memref<1x128xf32, #tpu.memory_space<vmem>>, vector<1x128xf32>
      %28 = vector.broadcast %27 : vector<1x128xf32> to vector<2x128xf32>
      %29 = arith.addf %26, %28 : vector<2x128xf32>
      %30 = arith.mulf %29, %29 : vector<2x128xf32>
      %cst_23 = arith.constant dense<0.000000e+00> : vector<2xf32>
      %31 = vector.multi_reduction <add>, %30, %cst_23 [1] : vector<2x128xf32> to vector<2xf32>
      %32 = vector.shape_cast %31 : vector<2xf32> to vector<2x1xf32>
      %cst_24 = arith.constant 1.000000e-24 : f32
      %33 = vector.broadcast %cst_24 : f32 to vector<2x1xf32>
      %34 = arith.maximumf %32, %33 : vector<2x1xf32>
      %35 = math.rsqrt %34 : vector<2x1xf32>
      %36 = vector.broadcast %35 : vector<2x1xf32> to vector<2x128xf32>
      %37 = arith.mulf %29, %36 : vector<2x128xf32>
      %38 = arith.truncf %37 : vector<2x128xf32> to vector<2x128xbf16>
      %c0_25 = arith.constant 0 : index
      %c0_26 = arith.constant 0 : index
      %39 = vector.load %arg12[%c0_25, %c0_26] : memref<128x1280xbf16, #tpu.memory_space<vmem>>, vector<128x1280xbf16>
      %cst_27 = arith.constant dense<0.000000e+00> : vector<2x1280xf32>
      %40 = tpu.matmul %38, %39, %cst_27 {dimension_numbers = #tpu.dot_dimension_numbers<[1], [0], [0], [1], [0, 0, 1, 1], [], []>} : vector<2x128xbf16>, vector<128x1280xbf16>, vector<2x1280xf32> -> vector<2x1280xf32>
      %c0_28 = arith.constant 0 : index
      %c0_29 = arith.constant 0 : index
      %41 = vector.load %arg13[%c0_28, %c0_29] : memref<2x1280xf32, #tpu.memory_space<vmem>>, vector<2x1280xf32>
      tpu.vector_store %arg13[%c0_28, %c0_29], %40 {strides = array<i32>} : memref<2x1280xf32, #tpu.memory_space<vmem>>, vector<2x1280xf32>,
    } else {
    }
    return
  }
  func.func @transform_0(%arg0: i32) -> (i32, i32) {
    %c0_i32 = arith.constant 0 : i32
    %c0_i32_0 = arith.constant 0 : i32
    %c0_i32_1 = arith.constant 0 : i32
    return %c0_i32, %c0_i32_0 : i32, i32
  }
  func.func @transform_1(%arg0: i32) -> (i32, i32) {
    %c0_i32 = arith.constant 0 : i32
    %c0_i32_0 = arith.constant 0 : i32
    %c0_i32_1 = arith.constant 0 : i32
    return %c0_i32, %c0_i32_0 : i32, i32
  }
  func.func @transform_2(%arg0: i32) -> (i32, i32) {
    %c0_i32 = arith.constant 0 : i32
    %c0_i32_0 = arith.constant 0 : i32
    %c0_i32_1 = arith.constant 0 : i32
    return %c0_i32, %c0_i32_0 : i32, i32
  }
  func.func @transform_3(%arg0: i32) -> (i32, i32) {
    %c0_i32 = arith.constant 0 : i32
    %c0_i32_0 = arith.constant 0 : i32
    %c0_i32_1 = arith.constant 0 : i32
    return %c0_i32, %c0_i32_0 : i32, i32
  }
  func.func @transform_4(%arg0: i32) -> (i32, i32) {
    %c0_i32 = arith.constant 0 : i32
    %c0_i32_0 = arith.constant 0 : i32
    %c0_i32_1 = arith.constant 0 : i32
    return %c0_i32, %c0_i32_0 : i32, i32
  }
  func.func @transform_5(%arg0: i32) -> (i32, i32) {
    %c0_i32 = arith.constant 0 : i32
    %c0_i32_0 = arith.constant 0 : i32
    return %c0_i32, %arg0 : i32, i32
  }
  func.func @transform_6(%arg0: i32) -> (i32, i32) {
    %c0_i32 = arith.constant 0 : i32
    %c0_i32_0 = arith.constant 0 : i32
    return %c0_i32, %arg0 : i32, i32
  }
  func.func @transform_7(%arg0: i32) -> (i32, i32) {
    %c0_i32 = arith.constant 0 : i32
    %c0_i32_0 = arith.constant 0 : i32
    return %c0_i32, %arg0 : i32, i32
  }
  func.func @transform_8(%arg0: i32) -> (i32, i32) {
    %c0_i32 = arith.constant 0 : i32
    %c0_i32_0 = arith.constant 0 : i32
    return %c0_i32, %arg0 : i32, i32
  }
  func.func @transform_9(%arg0: i32) -> (i32, i32) {
    %c0_i32 = arith.constant 0 : i32
    %c0_i32_0 = arith.constant 0 : i32
    return %arg0, %c0_i32 : i32, i32
  }
  func.func @transform_10(%arg0: i32) -> (i32, i32) {
    %c0_i32 = arith.constant 0 : i32
    %c0_i32_0 = arith.constant 0 : i32
    %c0_i32_1 = arith.constant 0 : i32
    return %c0_i32, %c0_i32_0 : i32, i32
  }
  func.func @transform_11(%arg0: i32) -> (i32, i32) {
    %c0_i32 = arith.constant 0 : i32
    %c0_i32_0 = arith.constant 0 : i32
    %c0_i32_1 = arith.constant 0 : i32
    return %c0_i32, %c0_i32_0 : i32, i32
  }
  func.func @transform_12(%arg0: i32) -> (i32, i32) {
    %c0_i32 = arith.constant 0 : i32
    %c0_i32_0 = arith.constant 0 : i32
    %c0_i32_1 = arith.constant 0 : i32
    return %c0_i32, %c0_i32_0 : i32, i32
  }
}

</mosaic_0001>

<llo_original>
// kernel: swav_forward.1
$region0: #{swav_forward.1}
  #allocation0 [shape = 'u32[]', space=smem, size = 0x4, offset = 0x4, fixed_abs, tag = 'smem constant byte address 0x4 - core index']
  #allocation1 [shape = 'u32[144,128]{1,0:T(1,128)}', space=vmem, size = 0x12000, scoped, tag = 'internal scratch']
  #allocation2 [shape = 'f32[2,32]{1,0:T(2,128)}', space=vmem, size = 0x400, scoped, tag = 'scratch operand']
  #allocation3 [shape = 'bf16[2,1280]{1,0:T(2,128)(2,1)}', space=vmem, size = 0x1400, scoped, tag = 'scratch operand']
  #allocation4 [shape = 'f32[2,128]{1,0:T(2,128)}', space=vmem, size = 0x400, scoped, tag = 'scratch operand']
  %s0 = inlined_call_operand.vmem [shape: bf16[512,32], index: 0, kind: input, shape index: {}]
  %s1 = inlined_call_operand.hbm [shape: bf16[32,32], index: 1, kind: input, shape index: {}]
  %s2 = inlined_call_operand.hbm [shape: f32[1,32], index: 2, kind: input, shape index: {}]
  %s3 = inlined_call_operand.hbm [shape: bf16[32,1280], index: 3, kind: input, shape index: {}]
  %s4 = inlined_call_operand.hbm [shape: f32[1,1280], index: 4, kind: input, shape index: {}]
  %s5 = inlined_call_operand.hbm [shape: bf16[1280,1280], index: 5, kind: input, shape index: {}]
  %s6 = inlined_call_operand.hbm [shape: f32[1,1280], index: 6, kind: input, shape index: {}]
  %s7 = inlined_call_operand.hbm [shape: f32[1,1280], index: 7, kind: input, shape index: {}]
  %s8 = inlined_call_operand.hbm [shape: f32[1,1280], index: 8, kind: input, shape index: {}]
  %s9 = inlined_call_operand.hbm [shape: bf16[1280,128], index: 9, kind: input, shape index: {}]
  %s10 = inlined_call_operand.hbm [shape: f32[1,128], index: 10, kind: input, shape index: {}]
  %s11 = inlined_call_operand.hbm [shape: bf16[128,1280], index: 11, kind: input, shape index: {}]
  %s12 = inlined_call_operand.hbm [shape: f32[2,1280], index: 12, kind: output, shape index: {}]
  %s13 = sld [smem:[#allocation0]]
  $region133: #{swav_forward.1} parent=0
    _
  %s15 = ssub.s32 1, %s13
  %s16 = scalar_select 0, %s15, %s13
  $region1: #{swav_forward.1} parent=0
    #allocation5 [shape = 'u8[8192]{0}', space=vmem, size = 0x2000, scoped, tag = 'input window, operand 1, single buffered']
    #allocation6 [shape = 's32[2]{0}', space=sflag, size = 0x8, scoped, tag = 'scoped memory for swav_forward.1']
    #allocation7 [shape = 's32[2]{0}', space=sflag, size = 0x8, scoped, tag = 'scoped memory for swav_forward.1']
    #allocation8 [shape = 'u8[512]{0}', space=vmem, size = 0x400, scoped, tag = 'input window, operand 2, single buffered']
    #allocation9 [shape = 's32[1]{0}', space=sflag, size = 0x4, scoped, tag = 'scoped memory for swav_forward.1']
    #allocation10 [shape = 'u8[81920]{0}', space=vmem, size = 0x14000, scoped, tag = 'input window, operand 3, single buffered']
    #allocation11 [shape = 'u8[5120]{0}', space=vmem, size = 0x1400, scoped, tag = 'input window, operand 4, single buffered']
    #allocation12 [shape = 's32[1]{0}', space=sflag, size = 0x4, scoped, tag = 'scoped memory for swav_forward.1']
    #allocation13 [shape = 'u8[1310720]{0}', space=vmem, size = 0x140000, scoped, tag = 'input window, operand 5']
    #allocation14 [shape = 'u8[2048]{0}', space=vmem, size = 0x800, scoped, tag = 'input window, operand 6']
    #allocation15 [shape = 'u8[2048]{0}', space=vmem, size = 0x800, scoped, tag = 'input window, operand 7']
    #allocation16 [shape = 'u8[2048]{0}', space=vmem, size = 0x800, scoped, tag = 'input window, operand 8']
    #allocation17 [shape = 'u8[131072]{0}', space=vmem, size = 0x20000, scoped, tag = 'input window, operand 9']
    #allocation18 [shape = 'u8[512]{0}', space=vmem, size = 0x400, scoped, tag = 'input window, operand 10, single buffered']
    #allocation19 [shape = 'u8[327680]{0}', space=vmem, size = 0x50000, scoped, tag = 'input window, operand 11, single buffered']
    #allocation20 [shape = 'u8[10240]{0}', space=vmem, size = 0x2800, scoped, tag = 'output window, operand 0, single buffered']
    %17 = vsyncpa [#allocation6], 0
    %18 = vsyncpa [#allocation9], 0
    %19 = vsyncpa [#allocation12], 0
    %20 = vsyncpa [#allocation7], 0
    loop: start=0, step=1, limit=7
    $region2: #{swav_forward.1} parent=1 // loop_pre_header
      _
    $region3: #{swav_forward.1} parent=1 // loop_header
      %s22 = sphi 0, %s26
      %p23 = scmp.ge.s32.totalorder %s22, 7
      %s30 = sphi 0, %s30
      %s32 = sphi 0, %s30
      %s33 = sphi 0, %s32
      %s47 = sphi 0, %s33
      %s51 = sphi 0, %s51
      %s53 = sphi 0, %s51
      %s54 = sphi 0, %s53
      %s68 = sphi 0, %s54
      %s72 = sphi 0, %s72
      %s74 = sphi 0, %s72
      %s75 = sphi 0, %s74
      %s89 = sphi 0, %s75
      %s93 = sphi 0, %s93
      %s95 = sphi 0, %s93
      %s96 = sphi 0, %s95
      %s110 = sphi 0, %s96
      %s114 = sphi 0, %s114
      %s116 = sphi 0, %s114
      %s117 = sphi 0, %s116
      %s131 = sphi 0, %s117
      %s137 = sphi 0, %s139
      %s140 = sphi 0, %s137
      %s141 = sphi 0, %s140
      %s157 = sphi 0, %s141
      %s163 = sphi 0, %s165
      %s166 = sphi 0, %s163
      %s167 = sphi 0, %s166
      %s183 = sphi 0, %s167
      %s189 = sphi 0, %s191
      %s192 = sphi 0, %s189
      %s193 = sphi 0, %s192
      %s209 = sphi 0, %s193
      %s215 = sphi 0, %s217
      %s218 = sphi 0, %s215
      %s219 = sphi 0, %s218
      %s235 = sphi 0, %s219
      %s241 = sphi 0, %s243
      %s244 = sphi 0, %s241
      %s245 = sphi 0, %s244
      %s261 = sphi 0, %s245
      %s265 = sphi 0, %s265
      %s267 = sphi 0, %s265
      %s268 = sphi 0, %s267
      %s282 = sphi 0, %s268
      %s286 = sphi 0, %s286
      %s288 = sphi 0, %s286
      %s289 = sphi 0, %s288
      %s303 = sphi 0, %s289
      %s307 = sphi 0, %s307
      %s309 = sphi 0, %s307
      %s310 = sphi 0, %s309
      %s324 = sphi 0, %s310
    $region4: #{swav_forward.1} parent=1 // loop_header_branch
      %25 = sbr.rel (%p23) target = $region8
    $region5: #{swav_forward.1} parent=1 // loop_body
      %s27 = ssub.s32 %s22, 1
      %s28 = ssub.s32 %s22, 2
      %s29 = sadd.s32 %s22, 1
      %s31 = sadd.s32 %s30, 1
      %p34 = scmp.eq.s32.totalorder %s22, 4
      %p35 = scmp.ne.s32.totalorder %s30, %s32
      %p36 = scmp.eq.s32.totalorder %s22, 0
      %p37 = por %p35, %p36
      %p38 = scmp.ne.s32.totalorder %s30, %s32
      %p39 = scmp.eq.s32.totalorder %s27, 4
      %p40 = por %p38, %p39
      %p41 = scmp.ne.s32.totalorder %s32, %s33
      %p42 = scmp.eq.s32.totalorder %s27, 0
      %p43 = por %p41, %p42
      %p44 = scmp.ne.s32.totalorder %s32, %s33
      %p45 = scmp.eq.s32.totalorder %s28, 4
      %p46 = por %p44, %p45
      %p48 = scmp.ne.s32.totalorder %s33, %s47
      %p49 = scmp.eq.s32.totalorder %s28, 0
      %p50 = por %p48, %p49
      %s52 = sadd.s32 %s51, 1
      %p55 = scmp.eq.s32.totalorder %s22, 4
      %p56 = scmp.ne.s32.totalorder %s51, %s53
      %p57 = scmp.eq.s32.totalorder %s22, 0
      %p58 = por %p56, %p57
      %p59 = scmp.ne.s32.totalorder %s51, %s53
      %p60 = scmp.eq.s32.totalorder %s27, 4
      %p61 = por %p59, %p60
      %p62 = scmp.ne.s32.totalorder %s53, %s54
      %p63 = scmp.eq.s32.totalorder %s27, 0
      %p64 = por %p62, %p63
      %p65 = scmp.ne.s32.totalorder %s53, %s54
      %p66 = scmp.eq.s32.totalorder %s28, 4
      %p67 = por %p65, %p66
      %p69 = scmp.ne.s32.totalorder %s54, %s68
      %p70 = scmp.eq.s32.totalorder %s28, 0
      %p71 = por %p69, %p70
      %s73 = sadd.s32 %s72, 1
      %p76 = scmp.eq.s32.totalorder %s22, 4
      %p77 = scmp.ne.s32.totalorder %s72, %s74
      %p78 = scmp.eq.s32.totalorder %s22, 0
      %p79 = por %p77, %p78
      %p80 = scmp.ne.s32.totalorder %s72, %s74
      %p81 = scmp.eq.s32.totalorder %s27, 4
      %p82 = por %p80, %p81
      %p83 = scmp.ne.s32.totalorder %s74, %s75
      %p84 = scmp.eq.s32.totalorder %s27, 0
      %p85 = por %p83, %p84
      %p86 = scmp.ne.s32.totalorder %s74, %s75
      %p87 = scmp.eq.s32.totalorder %s28, 4
      %p88 = por %p86, %p87
      %p90 = scmp.ne.s32.totalorder %s75, %s89
      %p91 = scmp.eq.s32.totalorder %s28, 0
      %p92 = por %p90, %p91
      %s94 = sadd.s32 %s93, 1
      %p97 = scmp.eq.s32.totalorder %s22, 4
      %p98 = scmp.ne.s32.totalorder %s93, %s95
      %p99 = scmp.eq.s32.totalorder %s22, 0
      %p100 = por %p98, %p99
      %p101 = scmp.ne.s32.totalorder %s93, %s95
      %p102 = scmp.eq.s32.totalorder %s27, 4
      %p103 = por %p101, %p102
      %p104 = scmp.ne.s32.totalorder %s95, %s96
      %p105 = scmp.eq.s32.totalorder %s27, 0
      %p106 = por %p104, %p105
      %p107 = scmp.ne.s32.totalorder %s95, %s96
      %p108 = scmp.eq.s32.totalorder %s28, 4
      %p109 = por %p107, %p108
      %p111 = scmp.ne.s32.totalorder %s96, %s110
      %p112 = scmp.eq.s32.totalorder %s28, 0
      %p113 = por %p111, %p112
      %s115 = sadd.s32 %s114, 1
      %p118 = scmp.eq.s32.totalorder %s22, 4
      %p119 = scmp.ne.s32.totalorder %s114, %s116
      %p120 = scmp.eq.s32.totalorder %s22, 0
      %p121 = por %p119, %p120
      %p122 = scmp.ne.s32.totalorder %s114, %s116
      %p123 = scmp.eq.s32.totalorder %s27, 4
      %p124 = por %p122, %p123
      %p125 = scmp.ne.s32.totalorder %s116, %s117
      %p126 = scmp.eq.s32.totalorder %s27, 0
      %p127 = por %p125, %p126
      %p128 = scmp.ne.s32.totalorder %s116, %s117
      %p129 = scmp.eq.s32.totalorder %s28, 4
      %p130 = por %p128, %p129
      %p132 = scmp.ne.s32.totalorder %s117, %s131
      %p133 = scmp.eq.s32.totalorder %s28, 0
      %p134 = por %p132, %p133
      %s135 = ssub.s32 %s22, %s29
      %p136 = scmp.eq.s32.totalorder %s135, 0
      %s138 = sadd.s32 %s137, 1
      %s139 = scalar_select %p136, %s137, %s138
      %p142 = pneg %p136
      %p143 = scmp.eq.s32.totalorder %s22, 4
      %p144 = por %p142, %p143
      %p145 = scmp.ne.s32.totalorder %s137, %s140
      %p146 = scmp.eq.s32.totalorder %s22, 0
      %p147 = por %p145, %p146
      %p148 = scmp.ne.s32.totalorder %s137, %s140
      %p149 = scmp.eq.s32.totalorder %s27, 4
      %p150 = por %p148, %p149
      %p151 = scmp.ne.s32.totalorder %s140, %s141
      %p152 = scmp.eq.s32.totalorder %s27, 0
      %p153 = por %p151, %p152
      %p154 = scmp.ne.s32.totalorder %s140, %s141
      %p155 = scmp.eq.s32.totalorder %s28, 4
      %p156 = por %p154, %p155
      %p158 = scmp.ne.s32.totalorder %s141, %s157
      %p159 = scmp.eq.s32.totalorder %s28, 0
      %p160 = por %p158, %p159
      %s161 = ssub.s32 %s22, %s29
      %p162 = scmp.eq.s32.totalorder %s161, 0
      %s164 = sadd.s32 %s163, 1
      %s165 = scalar_select %p162, %s163, %s164
      %p168 = pneg %p162
      %p169 = scmp.eq.s32.totalorder %s22, 4
      %p170 = por %p168, %p169
      %p171 = scmp.ne.s32.totalorder %s163, %s166
      %p172 = scmp.eq.s32.totalorder %s22, 0
      %p173 = por %p171, %p172
      %p174 = scmp.ne.s32.totalorder %s163, %s166
      %p175 = scmp.eq.s32.totalorder %s27, 4
      %p176 = por %p174, %p175
      %p177 = scmp.ne.s32.totalorder %s166, %s167
      %p178 = scmp.eq.s32.totalorder %s27, 0
      %p179 = por %p177, %p178
      %p180 = scmp.ne.s32.totalorder %s166, %s167
      %p181 = scmp.eq.s32.totalorder %s28, 4
      %p182 = por %p180, %p181
      %p184 = scmp.ne.s32.totalorder %s167, %s183
      %p185 = scmp.eq.s32.totalorder %s28, 0
      %p186 = por %p184, %p185
      %s187 = ssub.s32 %s22, %s29
      %p188 = scmp.eq.s32.totalorder %s187, 0
      %s190 = sadd.s32 %s189, 1
      %s191 = scalar_select %p188, %s189, %s190
      %p194 = pneg %p188
      %p195 = scmp.eq.s32.totalorder %s22, 4
      %p196 = por %p194, %p195
      %p197 = scmp.ne.s32.totalorder %s189, %s192
      %p198 = scmp.eq.s32.totalorder %s22, 0
      %p199 = por %p197, %p198
      %p200 = scmp.ne.s32.totalorder %s189, %s192
      %p201 = scmp.eq.s32.totalorder %s27, 4
      %p202 = por %p200, %p201
      %p203 = scmp.ne.s32.totalorder %s192, %s193
      %p204 = scmp.eq.s32.totalorder %s27, 0
      %p205 = por %p203, %p204
      %p206 = scmp.ne.s32.totalorder %s192, %s193
      %p207 = scmp.eq.s32.totalorder %s28, 4
      %p208 = por %p206, %p207
      %p210 = scmp.ne.s32.totalorder %s193, %s209
      %p211 = scmp.eq.s32.totalorder %s28, 0
      %p212 = por %p210, %p211
      %s213 = ssub.s32 %s22, %s29
      %p214 = scmp.eq.s32.totalorder %s213, 0
      %s216 = sadd.s32 %s215, 1
      %s217 = scalar_select %p214, %s215, %s216
      %p220 = pneg %p214
      %p221 = scmp.eq.s32.totalorder %s22, 4
      %p222 = por %p220, %p221
      %p223 = scmp.ne.s32.totalorder %s215, %s218
      %p224 = scmp.eq.s32.totalorder %s22, 0
      %p225 = por %p223, %p224
      %p226 = scmp.ne.s32.totalorder %s215, %s218
      %p227 = scmp.eq.s32.totalorder %s27, 4
      %p228 = por %p226, %p227
      %p229 = scmp.ne.s32.totalorder %s218, %s219
      %p230 = scmp.eq.s32.totalorder %s27, 0
      %p231 = por %p229, %p230
      %p232 = scmp.ne.s32.totalorder %s218, %s219
      %p233 = scmp.eq.s32.totalorder %s28, 4
      %p234 = por %p232, %p233
      %p236 = scmp.ne.s32.totalorder %s219, %s235
      %p237 = scmp.eq.s32.totalorder %s28, 0
      %p238 = por %p236, %p237
      %s239 = ssub.s32 %s22, %s29
      %p240 = scmp.eq.s32.totalorder %s239, 0
      %s242 = sadd.s32 %s241, 1
      %s243 = scalar_select %p240, %s241, %s242
      %p246 = pneg %p240
      %p247 = scmp.eq.s32.totalorder %s22, 4
      %p248 = por %p246, %p247
      %p249 = scmp.ne.s32.totalorder %s241, %s244
      %p250 = scmp.eq.s32.totalorder %s22, 0
      %p251 = por %p249, %p250
      %p252 = scmp.ne.s32.totalorder %s241, %s244
      %p253 = scmp.eq.s32.totalorder %s27, 4
      %p254 = por %p252, %p253
      %p255 = scmp.ne.s32.totalorder %s244, %s245
      %p256 = scmp.eq.s32.totalorder %s27, 0
      %p257 = por %p255, %p256
      %p258 = scmp.ne.s32.totalorder %s244, %s245
      %p259 = scmp.eq.s32.totalorder %s28, 4
      %p260 = por %p258, %p259
      %p262 = scmp.ne.s32.totalorder %s245, %s261
      %p263 = scmp.eq.s32.totalorder %s28, 0
      %p264 = por %p262, %p263
      %s266 = sadd.s32 %s265, 1
      %p269 = scmp.eq.s32.totalorder %s22, 4
      %p270 = scmp.ne.s32.totalorder %s265, %s267
      %p271 = scmp.eq.s32.totalorder %s22, 0
      %p272 = por %p270, %p271
      %p273 = scmp.ne.s32.totalorder %s265, %s267
      %p274 = scmp.eq.s32.totalorder %s27, 4
      %p275 = por %p273, %p274
      %p276 = scmp.ne.s32.totalorder %s267, %s268
      %p277 = scmp.eq.s32.totalorder %s27, 0
      %p278 = por %p276, %p277
      %p279 = scmp.ne.s32.totalorder %s267, %s268
      %p280 = scmp.eq.s32.totalorder %s28, 4
      %p281 = por %p279, %p280
      %p283 = scmp.ne.s32.totalorder %s268, %s282
      %p284 = scmp.eq.s32.totalorder %s28, 0
      %p285 = por %p283, %p284
      %s287 = sadd.s32 %s286, 1
      %p290 = scmp.eq.s32.totalorder %s22, 4
      %p291 = scmp.ne.s32.totalorder %s286, %s288
      %p292 = scmp.eq.s32.totalorder %s22, 0
      %p293 = por %p291, %p292
      %p294 = scmp.ne.s32.totalorder %s286, %s288
      %p295 = scmp.eq.s32.totalorder %s27, 4
      %p296 = por %p294, %p295
      %p297 = scmp.ne.s32.totalorder %s288, %s289
      %p298 = scmp.eq.s32.totalorder %s27, 0
      %p299 = por %p297, %p298
      %p300 = scmp.ne.s32.totalorder %s288, %s289
      %p301 = scmp.eq.s32.totalorder %s28, 4
      %p302 = por %p300, %p301
      %p304 = scmp.ne.s32.totalorder %s289, %s303
      %p305 = scmp.eq.s32.totalorder %s28, 0
      %p306 = por %p304, %p305
      %s308 = sadd.s32 %s307, 1
      %p311 = scmp.eq.s32.totalorder %s22, 4
      %p312 = scmp.ne.s32.totalorder %s307, %s309
      %p313 = scmp.eq.s32.totalorder %s22, 0
      %p314 = por %p312, %p313
      %p315 = scmp.ne.s32.totalorder %s307, %s309
      %p316 = scmp.eq.s32.totalorder %s27, 4
      %p317 = por %p315, %p316
      %p318 = scmp.ne.s32.totalorder %s309, %s310
      %p319 = scmp.eq.s32.totalorder %s27, 0
      %p320 = por %p318, %p319
      %p321 = scmp.ne.s32.totalorder %s309, %s310
      %p322 = scmp.eq.s32.totalorder %s28, 4
      %p323 = por %p321, %p322
      %p325 = scmp.ne.s32.totalorder %s310, %s324
      %p326 = scmp.eq.s32.totalorder %s28, 0
      %p327 = por %p325, %p326
      %p328 = scmp.le.s32.totalorder 1, %s22
      %p329 = scmp.lt.s32.totalorder %s22, 6
      %p330 = pnand %p328, %p329
      %p331 = pneg %p330
      // Predicated region
      $region9: #{swav_forward.1} parent=5 // pred_check
        _
      $region10: #{swav_forward.1} parent=5 // pred_check_branch
        %333 = sbr.rel (%p330) target = $region12
      $region11: #{swav_forward.1} parent=5 // pred_region
        %s334 = ssub.s32 %s22, 1
        // Predicated region
        $region13: #{swav_forward.1} parent=11 // pred_check
          %p335 = pneg %p43
        $region14: #{swav_forward.1} parent=11 // pred_check_branch
          %337 = sbr.rel (%p335) target = $region16
        $region15: #{swav_forward.1} parent=11 // pred_region
          _
        $region16: #{swav_forward.1} parent=11 // pred_fallthru
          _
        // Predicated region
        $region17: #{swav_forward.1} parent=11 // pred_check
          %p338 = pneg %p64
        $region18: #{swav_forward.1} parent=11 // pred_check_branch
          %340 = sbr.rel (%p338) target = $region20
        $region19: #{swav_forward.1} parent=11 // pred_region
          %s342 = ssub.s32 256, 256
          %343 = vsyncadd [#allocation6], %s342
          %s344 = sshll.u32 [#allocation5], 4
          %s345 = int_to_ptr.vmem [resolvable:$true] %s344
          %350 = dma.hbm_to_vmem [thread:$0]  %s1, 256, %s345, [#allocation6], 64, 64, 4
        $region20: #{swav_forward.1} parent=11 // pred_fallthru
          _
        // Predicated region
        $region21: #{swav_forward.1} parent=11 // pred_check
          %p351 = pneg %p85
        $region22: #{swav_forward.1} parent=11 // pred_check_branch
          %353 = sbr.rel (%p351) target = $region24
        $region23: #{swav_forward.1} parent=11 // pred_region
          %s355 = ssub.s32 16, 16
          %356 = vsyncadd [#allocation9], %s355
          %s358 = sshll.u32 [#allocation8], 4
          %s359 = int_to_ptr.vmem [resolvable:$true] %s358
          %361 = dma.hbm_to_vmem [thread:$0]  %s2, 16, %s359, [#allocation9]
        $region24: #{swav_forward.1} parent=11 // pred_fallthru
          _
        // Predicated region
        $region25: #{swav_forward.1} parent=11 // pred_check
          %p362 = pneg %p106
        $region26: #{swav_forward.1} parent=11 // pred_check_branch
          %364 = sbr.rel (%p362) target = $region28
        $region27: #{swav_forward.1} parent=11 // pred_region
          %s366 = ssub.s32 2560, 2560
          %367 = vsyncadd [#allocation9], %s366
          %s368 = sshll.u32 [#allocation10], 4
          %s369 = int_to_ptr.vmem [resolvable:$true] %s368
          %374 = dma.hbm_to_vmem [thread:$0]  %s3, 2560, %s369, [#allocation9], 640, 640, 40
        $region28: #{swav_forward.1} parent=11 // pred_fallthru
          _
        // Predicated region
        $region29: #{swav_forward.1} parent=11 // pred_check
          %p375 = pneg %p127
        $region30: #{swav_forward.1} parent=11 // pred_check_branch
          %377 = sbr.rel (%p375) target = $region32
        $region31: #{swav_forward.1} parent=11 // pred_region
          %s379 = ssub.s32 160, 160
          %380 = vsyncadd [#allocation12], %s379
          %s382 = sshll.u32 [#allocation11], 4
          %s383 = int_to_ptr.vmem [resolvable:$true] %s382
          %385 = dma.hbm_to_vmem [thread:$0]  %s4, 160, %s383, [#allocation12]
        $region32: #{swav_forward.1} parent=11 // pred_fallthru
          _
        // Predicated region
        $region33: #{swav_forward.1} parent=11 // pred_check
          %p386 = pneg %p278
        $region34: #{swav_forward.1} parent=11 // pred_check_branch
          %388 = sbr.rel (%p386) target = $region36
        $region35: #{swav_forward.1} parent=11 // pred_region
          %s390 = ssub.s32 16, 16
          %391 = vsyncadd [#allocation9], %s390
          %s393 = sshll.u32 [#allocation18], 4
          %s394 = int_to_ptr.vmem [resolvable:$true] %s393
          %396 = dma.hbm_to_vmem [thread:$0]  %s10, 16, %s394, [#allocation9]
        $region36: #{swav_forward.1} parent=11 // pred_fallthru
          _
        // Predicated region
        $region37: #{swav_forward.1} parent=11 // pred_check
          %p397 = pneg %p299
        $region38: #{swav_forward.1} parent=11 // pred_check_branch
          %399 = sbr.rel (%p397) target = $region40
        $region39: #{swav_forward.1} parent=11 // pred_region
          %s401 = ssub.s32 10240, 10240
          %402 = vsyncadd [#allocation12], %s401
          %s403 = sshll.u32 [#allocation19], 4
          %s404 = int_to_ptr.vmem [resolvable:$true] %s403
          %409 = dma.hbm_to_vmem [thread:$0]  %s11, 10240, %s404, [#allocation12], 640, 640, 40
        $region40: #{swav_forward.1} parent=11 // pred_fallthru
          _
      $region12: #{swav_forward.1} parent=5 // pred_fallthru
        _
      %p410 = scmp.lt.s32.totalorder %s22, 5
      // Predicated region
      $region41: #{swav_forward.1} parent=5 // pred_check
        %p411 = pneg %p410
      $region42: #{swav_forward.1} parent=5 // pred_check_branch
        %413 = sbr.rel (%p411) target = $region44
      $region43: #{swav_forward.1} parent=5 // pred_region
        // Predicated region
        $region45: #{swav_forward.1} parent=43 // pred_check
          %p414 = pneg %p147
        $region46: #{swav_forward.1} parent=43 // pred_check_branch
          %416 = sbr.rel (%p414) target = $region48
        $region47: #{swav_forward.1} parent=43 // pred_region
          %s417 = sand.u32 %s22, 1
          %s418 = scalar_lea.sflag [#allocation6], %s417
          %s419 = sand.u32 %s137, 1
          %s420 = smul.addr %s419, 1280
          %s421 = scalar_lea.vmem [#allocation13], %s420
          %s422 = smul.u32 2, %s22
          %s424 = ssub.s32 20480, 20480
          %425 = vsyncadd %s418, %s424
          %s426 = smul.addr %s422, 64
          %s427 = scalar_lea.hbm %s5, %s426
          %s428 = sshll.u32 %s421, 4
          %s429 = int_to_ptr.vmem [resolvable:$true] %s428
          %434 = dma.hbm_to_vmem [thread:$0]  %s427, 20480, %s429, %s418, 640, 128, 8
        $region48: #{swav_forward.1} parent=43 // pred_fallthru
          _
        // Predicated region
        $region49: #{swav_forward.1} parent=43 // pred_check
          %p435 = pneg %p173
        $region50: #{swav_forward.1} parent=43 // pred_check_branch
          %437 = sbr.rel (%p435) target = $region52
        $region51: #{swav_forward.1} parent=43 // pred_region
          %s438 = sand.u32 %s22, 1
          %s439 = scalar_lea.sflag [#allocation6], %s438
          %s440 = sand.u32 %s163, 1
          %s441 = smul.addr %s440, 2
          %s442 = scalar_lea.vmem [#allocation14], %s441
          %s443 = smul.u32 2, %s22
          %s445 = ssub.s32 32, 32
          %446 = vsyncadd %s439, %s445
          %s447 = smul.addr %s443, 16
          %s448 = scalar_lea.hbm %s6, %s447
          %s450 = sshll.u32 %s442, 4
          %s451 = int_to_ptr.vmem [resolvable:$true] %s450
          %453 = dma.hbm_to_vmem [thread:$0]  %s448, 32, %s451, %s439
        $region52: #{swav_forward.1} parent=43 // pred_fallthru
          _
        // Predicated region
        $region53: #{swav_forward.1} parent=43 // pred_check
          %p454 = pneg %p199
        $region54: #{swav_forward.1} parent=43 // pred_check_branch
          %456 = sbr.rel (%p454) target = $region56
        $region55: #{swav_forward.1} parent=43 // pred_region
          %s457 = sand.u32 %s22, 1
          %s458 = scalar_lea.sflag [#allocation6], %s457
          %s459 = sand.u32 %s189, 1
          %s460 = smul.addr %s459, 2
          %s461 = scalar_lea.vmem [#allocation15], %s460
          %s462 = smul.u32 2, %s22
          %s464 = ssub.s32 32, 32
          %465 = vsyncadd %s458, %s464
          %s466 = smul.addr %s462, 16
          %s467 = scalar_lea.hbm %s7, %s466
          %s469 = sshll.u32 %s461, 4
          %s470 = int_to_ptr.vmem [resolvable:$true] %s469
          %472 = dma.hbm_to_vmem [thread:$0]  %s467, 32, %s470, %s458
        $region56: #{swav_forward.1} parent=43 // pred_fallthru
          _
        // Predicated region
        $region57: #{swav_forward.1} parent=43 // pred_check
          %p473 = pneg %p225
        $region58: #{swav_forward.1} parent=43 // pred_check_branch
          %475 = sbr.rel (%p473) target = $region60
        $region59: #{swav_forward.1} parent=43 // pred_region
          %s476 = sand.u32 %s22, 1
          %s477 = scalar_lea.sflag [#allocation6], %s476
          %s478 = sand.u32 %s215, 1
          %s479 = smul.addr %s478, 2
          %s480 = scalar_lea.vmem [#allocation16], %s479
          %s481 = smul.u32 2, %s22
          %s483 = ssub.s32 32, 32
          %484 = vsyncadd %s477, %s483
          %s485 = smul.addr %s481, 16
          %s486 = scalar_lea.hbm %s8, %s485
          %s488 = sshll.u32 %s480, 4
          %s489 = int_to_ptr.vmem [resolvable:$true] %s488
          %491 = dma.hbm_to_vmem [thread:$0]  %s486, 32, %s489, %s477
        $region60: #{swav_forward.1} parent=43 // pred_fallthru
          _
        // Predicated region
        $region61: #{swav_forward.1} parent=43 // pred_check
          %p492 = pneg %p251
        $region62: #{swav_forward.1} parent=43 // pred_check_branch
          %494 = sbr.rel (%p492) target = $region64
        $region63: #{swav_forward.1} parent=43 // pred_region
          %s495 = sand.u32 %s22, 1
          %s496 = scalar_lea.sflag [#allocation6], %s495
          %s497 = sand.u32 %s241, 1
          %s498 = smul.addr %s497, 128
          %s499 = scalar_lea.vmem [#allocation17], %s498
          %s500 = smul.u32 32, %s22
          %s502 = ssub.s32 2048, 2048
          %503 = vsyncadd %s496, %s502
          %s504 = smul.addr %s500, 64
          %s505 = scalar_lea.hbm %s9, %s504
          %s506 = sshll.u32 %s499, 4
          %s507 = int_to_ptr.vmem [resolvable:$true] %s506
          %512 = dma.hbm_to_vmem [thread:$0]  %s505, 2048, %s507, %s496, 64, 64, 4
        $region64: #{swav_forward.1} parent=43 // pred_fallthru
          _
      $region44: #{swav_forward.1} parent=5 // pred_fallthru
        _
      %p513 = scmp.le.s32.totalorder 1, %s22
      %p514 = scmp.lt.s32.totalorder %s22, 6
      %p515 = pnand %p513, %p514
      %p516 = pneg %p515
      // Predicated region
      $region65: #{swav_forward.1} parent=5 // pred_check
        _
      $region66: #{swav_forward.1} parent=5 // pred_check_branch
        %518 = sbr.rel (%p515) target = $region68
      $region67: #{swav_forward.1} parent=5 // pred_region
        %s519 = ssub.s32 %s22, 1
        // Predicated region
        $region69: #{swav_forward.1} parent=67 // pred_check
          %p520 = pneg %p64
        $region70: #{swav_forward.1} parent=67 // pred_check_branch
          %522 = sbr.rel (%p520) target = $region72
        $region71: #{swav_forward.1} parent=67 // pred_region
          %523 = dma.done [#allocation6], 256
        $region72: #{swav_forward.1} parent=67 // pred_fallthru
          _
        // Predicated region
        $region73: #{swav_forward.1} parent=67 // pred_check
          %p524 = pneg %p85
        $region74: #{swav_forward.1} parent=67 // pred_check_branch
          %526 = sbr.rel (%p524) target = $region76
        $region75: #{swav_forward.1} parent=67 // pred_region
          %527 = dma.done [#allocation9], 16
        $region76: #{swav_forward.1} parent=67 // pred_fallthru
          _
        // Predicated region
        $region77: #{swav_forward.1} parent=67 // pred_check
          %p528 = pneg %p106
        $region78: #{swav_forward.1} parent=67 // pred_check_branch
          %530 = sbr.rel (%p528) target = $region80
        $region79: #{swav_forward.1} parent=67 // pred_region
          %531 = dma.done [#allocation9], 2560
        $region80: #{swav_forward.1} parent=67 // pred_fallthru
          _
        // Predicated region
        $region81: #{swav_forward.1} parent=67 // pred_check
          %p532 = pneg %p127
        $region82: #{swav_forward.1} parent=67 // pred_check_branch
          %534 = sbr.rel (%p532) target = $region84
        $region83: #{swav_forward.1} parent=67 // pred_region
          %535 = dma.done [#allocation12], 160
        $region84: #{swav_forward.1} parent=67 // pred_fallthru
          _
        %s536 = sand.u32 %s27, 1
        %s537 = scalar_lea.sflag [#allocation6], %s536
        %s538 = sand.u32 %s140, 1
        %s539 = smul.addr %s538, 1280
        %s540 = scalar_lea.vmem [#allocation13], %s539
        // Predicated region
        $region85: #{swav_forward.1} parent=67 // pred_check
          %p541 = pneg %p153
        $region86: #{swav_forward.1} parent=67 // pred_check_branch
          %543 = sbr.rel (%p541) target = $region88
        $region87: #{swav_forward.1} parent=67 // pred_region
          %544 = dma.done %s537, 20480
        $region88: #{swav_forward.1} parent=67 // pred_fallthru
          _
        %s545 = sand.u32 %s27, 1
        %s546 = scalar_lea.sflag [#allocation6], %s545
        %s547 = sand.u32 %s166, 1
        %s548 = smul.addr %s547, 2
        %s549 = scalar_lea.vmem [#allocation14], %s548
        // Predicated region
        $region89: #{swav_forward.1} parent=67 // pred_check
          %p550 = pneg %p179
        $region90: #{swav_forward.1} parent=67 // pred_check_branch
          %552 = sbr.rel (%p550) target = $region92
        $region91: #{swav_forward.1} parent=67 // pred_region
          %553 = dma.done %s546, 32
        $region92: #{swav_forward.1} parent=67 // pred_fallthru
          _
        %s554 = sand.u32 %s27, 1
        %s555 = scalar_lea.sflag [#allocation6], %s554
        %s556 = sand.u32 %s192, 1
        %s557 = smul.addr %s556, 2
        %s558 = scalar_lea.vmem [#allocation15], %s557
        // Predicated region
        $region93: #{swav_forward.1} parent=67 // pred_check
          %p559 = pneg %p205
        $region94: #{swav_forward.1} parent=67 // pred_check_branch
          %561 = sbr.rel (%p559) target = $region96
        $region95: #{swav_forward.1} parent=67 // pred_region
          %562 = dma.done %s555, 32
        $region96: #{swav_forward.1} parent=67 // pred_fallthru
          _
        %s563 = sand.u32 %s27, 1
        %s564 = scalar_lea.sflag [#allocation6], %s563
        %s565 = sand.u32 %s218, 1
        %s566 = smul.addr %s565, 2
        %s567 = scalar_lea.vmem [#allocation16], %s566
        // Predicated region
        $region97: #{swav_forward.1} parent=67 // pred_check
          %p568 = pneg %p231
        $region98: #{swav_forward.1} parent=67 // pred_check_branch
          %570 = sbr.rel (%p568) target = $region100
        $region99: #{swav_forward.1} parent=67 // pred_region
          %571 = dma.done %s564, 32
        $region100: #{swav_forward.1} parent=67 // pred_fallthru
          _
        %s572 = sand.u32 %s27, 1
        %s573 = scalar_lea.sflag [#allocation6], %s572
        %s574 = sand.u32 %s244, 1
        %s575 = smul.addr %s574, 128
        %s576 = scalar_lea.vmem [#allocation17], %s575
        // Predicated region
        $region101: #{swav_forward.1} parent=67 // pred_check
          %p577 = pneg %p257
        $region102: #{swav_forward.1} parent=67 // pred_check_branch
          %579 = sbr.rel (%p577) target = $region104
        $region103: #{swav_forward.1} parent=67 // pred_region
          %580 = dma.done %s573, 2048
        $region104: #{swav_forward.1} parent=67 // pred_fallthru
          _
        // Predicated region
        $region105: #{swav_forward.1} parent=67 // pred_check
          %p581 = pneg %p278
        $region106: #{swav_forward.1} parent=67 // pred_check_branch
          %583 = sbr.rel (%p581) target = $region108
        $region107: #{swav_forward.1} parent=67 // pred_region
          %584 = dma.done [#allocation9], 16
        $region108: #{swav_forward.1} parent=67 // pred_fallthru
          _
        // Predicated region
        $region109: #{swav_forward.1} parent=67 // pred_check
          %p585 = pneg %p299
        $region110: #{swav_forward.1} parent=67 // pred_check_branch
          %587 = sbr.rel (%p585) target = $region112
        $region111: #{swav_forward.1} parent=67 // pred_region
          %588 = dma.done [#allocation12], 10240
        $region112: #{swav_forward.1} parent=67 // pred_fallthru
          _
        %p589 = pneg %p43
        %p590 = pneg %p40
        %p591 = pneg %p64
        %p592 = pneg %p61
        %p593 = pneg %p85
        %p594 = pneg %p82
        %p595 = pneg %p106
        %p596 = pneg %p103
        %p597 = pneg %p127
        %p598 = pneg %p124
        %s599 = sand.u32 %s27, 1
        %s600 = scalar_lea.sflag [#allocation6], %s599
        %s601 = sand.u32 %s140, 1
        %s602 = smul.addr %s601, 1280
        %s603 = scalar_lea.vmem [#allocation13], %s602
        %p604 = pneg %p153
        %p605 = pneg %p150
        %s606 = sand.u32 %s27, 1
        %s607 = scalar_lea.sflag [#allocation6], %s606
        %s608 = sand.u32 %s166, 1
        %s609 = smul.addr %s608, 2
        %s610 = scalar_lea.vmem [#allocation14], %s609
        %p611 = pneg %p179
        %p612 = pneg %p176
        %s613 = sand.u32 %s27, 1
        %s614 = scalar_lea.sflag [#allocation6], %s613
        %s615 = sand.u32 %s192, 1
        %s616 = smul.addr %s615, 2
        %s617 = scalar_lea.vmem [#allocation15], %s616
        %p618 = pneg %p205
        %p619 = pneg %p202
        %s620 = sand.u32 %s27, 1
        %s621 = scalar_lea.sflag [#allocation6], %s620
        %s622 = sand.u32 %s218, 1
        %s623 = smul.addr %s622, 2
        %s624 = scalar_lea.vmem [#allocation16], %s623
        %p625 = pneg %p231
        %p626 = pneg %p228
        %s627 = sand.u32 %s27, 1
        %s628 = scalar_lea.sflag [#allocation6], %s627
        %s629 = sand.u32 %s244, 1
        %s630 = smul.addr %s629, 128
        %s631 = scalar_lea.vmem [#allocation17], %s630
        %p632 = pneg %p257
        %p633 = pneg %p254
        %p634 = pneg %p278
        %p635 = pneg %p275
        %p636 = pneg %p299
        %p637 = pneg %p296
        %p638 = pneg %p320
        %p639 = pneg %p317
        %s640 = smul.u32 2, %s27
        %s641 = smul.u32 2, %s27
        %s642 = smul.u32 2, %s27
        %s643 = smul.u32 2, %s27
        %s644 = smul.u32 32, %s27
        %p646 = scmp.eq.s32.totalorder %s27, 0
        // Predicated region
        $region113: #{swav_forward.1} parent=67 // pred_check
          %p647 = pneg %p646
        $region114: #{swav_forward.1} parent=67 // pred_check_branch
          %649 = sbr.rel (%p647) target = $region116
        $region115: #{swav_forward.1} parent=67 // pred_region
          %v650 = vld [vmem:[%s0] sm:$0xf]
          %v651 = vld [vmem:[%s0 + $0x4] sm:$0xf]
          %v652 = vld [vmem:[%s0 + $0x8] sm:$0xf]
          %v653 = vld [vmem:[%s0 + $0xc] sm:$0xf]
          %v654 = vld [vmem:[%s0 + $0x10] sm:$0xf]
          %v655 = vld [vmem:[%s0 + $0x14] sm:$0xf]
          %v656 = vld [vmem:[%s0 + $0x18] sm:$0xf]
          %v657 = vld [vmem:[%s0 + $0x1c] sm:$0xf]
          %v658 = vld [vmem:[%s0 + $0x20] sm:$0xf]
          %v659 = vld [vmem:[%s0 + $0x24] sm:$0xf]
          %v660 = vld [vmem:[%s0 + $0x28] sm:$0xf]
          %v661 = vld [vmem:[%s0 + $0x2c] sm:$0xf]
          %v662 = vld [vmem:[%s0 + $0x30] sm:$0xf]
          %v663 = vld [vmem:[%s0 + $0x34] sm:$0xf]
          %v664 = vld [vmem:[%s0 + $0x38] sm:$0xf]
          %v665 = vld [vmem:[%s0 + $0x3c] sm:$0xf]
          %v666 = vld [vmem:[%s0 + $0x40] sm:$0xf]
          %v667 = vld [vmem:[%s0 + $0x44] sm:$0xf]
          %v668 = vld [vmem:[%s0 + $0x48] sm:$0xf]
          %v669 = vld [vmem:[%s0 + $0x4c] sm:$0xf]
          %v670 = vld [vmem:[%s0 + $0x50] sm:$0xf]
          %v671 = vld [vmem:[%s0 + $0x54] sm:$0xf]
          %v672 = vld [vmem:[%s0 + $0x58] sm:$0xf]
          %v673 = vld [vmem:[%s0 + $0x5c] sm:$0xf]
          %v674 = vld [vmem:[%s0 + $0x60] sm:$0xf]
          %v675 = vld [vmem:[%s0 + $0x64] sm:$0xf]
          %v676 = vld [vmem:[%s0 + $0x68] sm:$0xf]
          %v677 = vld [vmem:[%s0 + $0x6c] sm:$0xf]
          %v678 = vld [vmem:[%s0 + $0x70] sm:$0xf]
          %v679 = vld [vmem:[%s0 + $0x74] sm:$0xf]
          %v680 = vld [vmem:[%s0 + $0x78] sm:$0xf]
          %v681 = vld [vmem:[%s0 + $0x7c] sm:$0xf]
          %v682 = vld [vmem:[%s0 + $0x80] sm:$0xf]
          %v683 = vld [vmem:[%s0 + $0x84] sm:$0xf]
          %v684 = vld [vmem:[%s0 + $0x88] sm:$0xf]
          %v685 = vld [vmem:[%s0 + $0x8c] sm:$0xf]
          %v686 = vld [vmem:[%s0 + $0x90] sm:$0xf]
          %v687 = vld [vmem:[%s0 + $0x94] sm:$0xf]
          %v688 = vld [vmem:[%s0 + $0x98] sm:$0xf]
          %v689 = vld [vmem:[%s0 + $0x9c] sm:$0xf]
          %v690 = vld [vmem:[%s0 + $0xa0] sm:$0xf]
          %v691 = vld [vmem:[%s0 + $0xa4] sm:$0xf]
          %v692 = vld [vmem:[%s0 + $0xa8] sm:$0xf]
          %v693 = vld [vmem:[%s0 + $0xac] sm:$0xf]
          %v694 = vld [vmem:[%s0 + $0xb0] sm:$0xf]
          %v695 = vld [vmem:[%s0 + $0xb4] sm:$0xf]
          %v696 = vld [vmem:[%s0 + $0xb8] sm:$0xf]
          %v697 = vld [vmem:[%s0 + $0xbc] sm:$0xf]
          %v698 = vld [vmem:[%s0 + $0xc0] sm:$0xf]
          %v699 = vld [vmem:[%s0 + $0xc4] sm:$0xf]
          %v700 = vld [vmem:[%s0 + $0xc8] sm:$0xf]
          %v701 = vld [vmem:[%s0 + $0xcc] sm:$0xf]
          %v702 = vld [vmem:[%s0 + $0xd0] sm:$0xf]
          %v703 = vld [vmem:[%s0 + $0xd4] sm:$0xf]
          %v704 = vld [vmem:[%s0 + $0xd8] sm:$0xf]
          %v705 = vld [vmem:[%s0 + $0xdc] sm:$0xf]
          %v706 = vld [vmem:[%s0 + $0xe0] sm:$0xf]
          %v707 = vld [vmem:[%s0 + $0xe4] sm:$0xf]
          %v708 = vld [vmem:[%s0 + $0xe8] sm:$0xf]
          %v709 = vld [vmem:[%s0 + $0xec] sm:$0xf]
          %v710 = vld [vmem:[%s0 + $0xf0] sm:$0xf]
          %v711 = vld [vmem:[%s0 + $0xf4] sm:$0xf]
          %v712 = vld [vmem:[%s0 + $0xf8] sm:$0xf]
          %v713 = vld [vmem:[%s0 + $0xfc] sm:$0xf]
          %v714 = vld [vmem:[#allocation5] sm:$0xf]
          %v715 = vld [vmem:[#allocation5 + $0x4] sm:$0xf]
          %v716 = vld [vmem:[#allocation5 + $0x8] sm:$0xf]
          %v717 = vld [vmem:[#allocation5 + $0xc] sm:$0xf]
          %v718 = vld [vmem:[#allocation8] sm:$0x1]
          %v720 = vlaneseq
          %v721 = vshrl.u32 %v720, 7
          %v722 = vsub.s32 0, %v721
          %v723 = vrot.slane %v718, %v722
          %v789 = vunpack.c.l.b16 %v650
          %v790 = vunpack.c.l.b16 %v651
          %v791 = vunpack.c.l.b16 %v652
          %v792 = vunpack.c.l.b16 %v653
          %v793 = vunpack.c.l.b16 %v654
          %v794 = vunpack.c.l.b16 %v655
          %v795 = vunpack.c.l.b16 %v656
          %v796 = vunpack.c.l.b16 %v657
          %v797 = vunpack.c.l.b16 %v658
          %v798 = vunpack.c.l.b16 %v659
          %v799 = vunpack.c.l.b16 %v660
          %v800 = vunpack.c.l.b16 %v661
          %v801 = vunpack.c.l.b16 %v662
          %v802 = vunpack.c.l.b16 %v663
          %v803 = vunpack.c.l.b16 %v664
          %v804 = vunpack.c.l.b16 %v665
          %v805 = vunpack.c.l.b16 %v666
          %v806 = vunpack.c.l.b16 %v667
          %v807 = vunpack.c.l.b16 %v668
          %v808 = vunpack.c.l.b16 %v669
          %v809 = vunpack.c.l.b16 %v670
          %v810 = vunpack.c.l.b16 %v671
          %v811 = vunpack.c.l.b16 %v672
          %v812 = vunpack.c.l.b16 %v673
          %v813 = vunpack.c.l.b16 %v674
          %v814 = vunpack.c.l.b16 %v675
          %v815 = vunpack.c.l.b16 %v676
          %v816 = vunpack.c.l.b16 %v677
          %v817 = vunpack.c.l.b16 %v678
          %v818 = vunpack.c.l.b16 %v679
          %v819 = vunpack.c.l.b16 %v680
          %v820 = vunpack.c.l.b16 %v681
          %v821 = vunpack.c.l.b16 %v682
          %v822 = vunpack.c.l.b16 %v683
          %v823 = vunpack.c.l.b16 %v684
          %v824 = vunpack.c.l.b16 %v685
          %v825 = vunpack.c.l.b16 %v686
          %v826 = vunpack.c.l.b16 %v687
          %v827 = vunpack.c.l.b16 %v688
          %v828 = vunpack.c.l.b16 %v689
          %v829 = vunpack.c.l.b16 %v690
          %v830 = vunpack.c.l.b16 %v691
          %v831 = vunpack.c.l.b16 %v692
          %v832 = vunpack.c.l.b16 %v693
          %v833 = vunpack.c.l.b16 %v694
          %v834 = vunpack.c.l.b16 %v695
          %v835 = vunpack.c.l.b16 %v696
          %v836 = vunpack.c.l.b16 %v697
          %v837 = vunpack.c.l.b16 %v698
          %v838 = vunpack.c.l.b16 %v699
          %v839 = vunpack.c.l.b16 %v700
          %v840 = vunpack.c.l.b16 %v701
          %v841 = vunpack.c.l.b16 %v702
          %v842 = vunpack.c.l.b16 %v703
          %v843 = vunpack.c.l.b16 %v704
          %v844 = vunpack.c.l.b16 %v705
          %v845 = vunpack.c.l.b16 %v706
          %v846 = vunpack.c.l.b16 %v707
          %v847 = vunpack.c.l.b16 %v708
          %v848 = vunpack.c.l.b16 %v709
          %v849 = vunpack.c.l.b16 %v710
          %v850 = vunpack.c.l.b16 %v711
          %v851 = vunpack.c.l.b16 %v712
          %v852 = vunpack.c.l.b16 %v713
          %v853 = vpack.c.b16 %v790, %v789
          %v854 = vpack.c.b16 %v792, %v791
          %v855 = vpack.c.b16 %v794, %v793
          %v856 = vpack.c.b16 %v796, %v795
          %v857 = vpack.c.b16 %v798, %v797
          %v858 = vpack.c.b16 %v800, %v799
          %v859 = vpack.c.b16 %v802, %v801
          %v860 = vpack.c.b16 %v804, %v803
          %v861 = vpack.c.b16 %v806, %v805
          %v862 = vpack.c.b16 %v808, %v807
          %v863 = vpack.c.b16 %v810, %v809
          %v864 = vpack.c.b16 %v812, %v811
          %v865 = vpack.c.b16 %v814, %v813
          %v866 = vpack.c.b16 %v816, %v815
          %v867 = vpack.c.b16 %v818, %v817
          %v868 = vpack.c.b16 %v820, %v819
          %v869 = vpack.c.b16 %v822, %v821
          %v870 = vpack.c.b16 %v824, %v823
          %v871 = vpack.c.b16 %v826, %v825
          %v872 = vpack.c.b16 %v828, %v827
          %v873 = vpack.c.b16 %v830, %v829
          %v874 = vpack.c.b16 %v832, %v831
          %v875 = vpack.c.b16 %v834, %v833
          %v876 = vpack.c.b16 %v836, %v835
          %v877 = vpack.c.b16 %v838, %v837
          %v878 = vpack.c.b16 %v840, %v839
          %v879 = vpack.c.b16 %v842, %v841
          %v880 = vpack.c.b16 %v844, %v843
          %v881 = vpack.c.b16 %v846, %v845
          %v882 = vpack.c.b16 %v848, %v847
          %v883 = vpack.c.b16 %v850, %v849
          %v884 = vpack.c.b16 %v852, %v851
          %v889 = vunpack.c.l.b16 %v714
          %v890 = vunpack.c.l.b16 %v715
          %v891 = vunpack.c.l.b16 %v716
          %v892 = vunpack.c.l.b16 %v717
          %v893 = vpack.c.b16 %v890, %v889
          %v894 = vpack.c.b16 %v892, %v891
          %vm897 = vcmask 261120
          %v899 = vsel %vm897, %v853, 0
          %v902 = vsel %vm897, %v854, 0
          %v905 = vsel %vm897, %v855, 0
          %v908 = vsel %vm897, %v856, 0
          %v911 = vsel %vm897, %v857, 0
          %v914 = vsel %vm897, %v858, 0
          %v917 = vsel %vm897, %v859, 0
          %v920 = vsel %vm897, %v860, 0
          %v923 = vsel %vm897, %v861, 0
          %v926 = vsel %vm897, %v862, 0
          %v929 = vsel %vm897, %v863, 0
          %v932 = vsel %vm897, %v864, 0
          %v935 = vsel %vm897, %v865, 0
          %v938 = vsel %vm897, %v866, 0
          %v941 = vsel %vm897, %v867, 0
          %v944 = vsel %vm897, %v868, 0
          %v947 = vsel %vm897, %v869, 0
          %v950 = vsel %vm897, %v870, 0
          %v953 = vsel %vm897, %v871, 0
          %v956 = vsel %vm897, %v872, 0
          %v959 = vsel %vm897, %v873, 0
          %v962 = vsel %vm897, %v874, 0
          %v965 = vsel %vm897, %v875, 0
          %v968 = vsel %vm897, %v876, 0
          %v971 = vsel %vm897, %v877, 0
          %v974 = vsel %vm897, %v878, 0
          %v977 = vsel %vm897, %v879, 0
          %v980 = vsel %vm897, %v880, 0
          %v983 = vsel %vm897, %v881, 0
          %v986 = vsel %vm897, %v882, 0
          %v989 = vsel %vm897, %v883, 0
          %v992 = vsel %vm897, %v884, 0
          %994 = vmatprep.subr.bf16.mxu0 0
          %995 = vmatpush1.bf16.msra.mxu0 0
          %996 = vmatprep.subr.bf16.mxu0 0
          %997 = vmatpush1.bf16.msra.mxu0 0
          %998 = vmatprep.subr.bf16.mxu0 0
          %999 = vmatpush1.bf16.msra.mxu0 0
          %1000 = vmatprep.subr.bf16.mxu0 0
          %1001 = vmatpush1.bf16.msra.mxu0 0
          %1002 = vmatprep.subr.bf16.mxu0 0
          %1003 = vmatpush1.bf16.msra.mxu0 0
          %1004 = vmatprep.subr.bf16.mxu0 0
          %1005 = vmatpush1.bf16.msra.mxu0 0
          %1006 = vmatprep.subr.bf16.mxu0 0
          %1007 = vmatpush1.bf16.msra.mxu0 %v894
          %1008 = vmatprep.subr.bf16.mxu0 0
          %1009 = vmatpush1.bf16.msra.mxu0 %v893
          %1010 = vmatprep.subr.bf16.mxu0 0
          %1011 = vmatpush2.bf16.msra.mxu0 0
          %1012 = vmatprep.subr.bf16.mxu0 0
          %1013 = vmatpush2.bf16.msra.mxu0 0
          %1014 = vmatprep.subr.bf16.mxu0 0
          %1015 = vmatpush2.bf16.msra.mxu0 0
          %1016 = vmatprep.subr.bf16.mxu0 0
          %1017 = vmatpush2.bf16.msra.mxu0 0
          %1018 = vmatprep.subr.bf16.mxu0 0
          %1019 = vmatpush2.bf16.msra.mxu0 0
          %1020 = vmatprep.subr.bf16.mxu0 0
          %1021 = vmatpush2.bf16.msra.mxu0 0
          %1022 = vmatprep.subr.bf16.mxu0 0
          %1023 = vmatpush2.bf16.msra.mxu0 0
          %1024 = vmatprep.subr.bf16.mxu0 0
          %1025 = vmatpush2.bf16.msra.mxu0 0
          %1026 = vmatprep.mubr.bf16.mxu0 0
          %1027 = vmatmul.mubr.bf16.gmra.mxu0 %v899
          %v1028 = vpop.f32.mrf.mxu0
          %v1029 = vadd.f32 %v723, %v1028
          %v1030 = vpop.f32.mrf.mxu0
          %v1031 = vpop.f32.mrf.mxu0
          %v1032 = vadd.f32 %v723, %v1031
          %v1033 = vpop.f32.mrf.mxu0
          %1034 = vmatprep.mubr.bf16.mxu0 0
          %1035 = vmatmul.mubr.bf16.gmra.mxu0 %v902
          %v1036 = vpop.f32.mrf.mxu0
          %v1037 = vadd.f32 %v723, %v1036
          %v1038 = vpop.f32.mrf.mxu0
          %v1039 = vpop.f32.mrf.mxu0
          %v1040 = vadd.f32 %v723, %v1039
          %v1041 = vpop.f32.mrf.mxu0
          %1042 = vmatprep.mubr.bf16.mxu0 0
          %1043 = vmatmul.mubr.bf16.gmra.mxu0 %v905
          %v1044 = vpop.f32.mrf.mxu0
          %v1045 = vadd.f32 %v723, %v1044
          %v1046 = vpop.f32.mrf.mxu0
          %v1047 = vpop.f32.mrf.mxu0
          %v1048 = vadd.f32 %v723, %v1047
          %v1049 = vpop.f32.mrf.mxu0
          %1050 = vmatprep.mubr.bf16.mxu0 0
          %1051 = vmatmul.mubr.bf16.gmra.mxu0 %v908
          %v1052 = vpop.f32.mrf.mxu0
          %v1053 = vadd.f32 %v723, %v1052
          %v1054 = vpop.f32.mrf.mxu0
          %v1055 = vpop.f32.mrf.mxu0
          %v1056 = vadd.f32 %v723, %v1055
          %v1057 = vpop.f32.mrf.mxu0
          %1058 = vmatprep.mubr.bf16.mxu0 0
          %1059 = vmatmul.mubr.bf16.gmra.mxu0 %v911
          %v1060 = vpop.f32.mrf.mxu0
          %v1061 = vadd.f32 %v723, %v1060
          %v1062 = vpop.f32.mrf.mxu0
          %v1063 = vpop.f32.mrf.mxu0
          %v1064 = vadd.f32 %v723, %v1063
          %v1065 = vpop.f32.mrf.mxu0
          %1066 = vmatprep.mubr.bf16.mxu0 0
          %1067 = vmatmul.mubr.bf16.gmra.mxu0 %v914
          %v1068 = vpop.f32.mrf.mxu0
          %v1069 = vadd.f32 %v723, %v1068
          %v1070 = vpop.f32.mrf.mxu0
          %v1071 = vpop.f32.mrf.mxu0
          %v1072 = vadd.f32 %v723, %v1071
          %v1073 = vpop.f32.mrf.mxu0
          %1074 = vmatprep.mubr.bf16.mxu0 0
          %1075 = vmatmul.mubr.bf16.gmra.mxu0 %v917
          %v1076 = vpop.f32.mrf.mxu0
          %v1077 = vadd.f32 %v723, %v1076
          %v1078 = vpop.f32.mrf.mxu0
          %v1079 = vpop.f32.mrf.mxu0
          %v1080 = vadd.f32 %v723, %v1079
          %v1081 = vpop.f32.mrf.mxu0
          %1082 = vmatprep.mubr.bf16.mxu0 0
          %1083 = vmatmul.mubr.bf16.gmra.mxu0 %v920
          %v1084 = vpop.f32.mrf.mxu0
          %v1085 = vadd.f32 %v723, %v1084
          %v1086 = vpop.f32.mrf.mxu0
          %v1087 = vpop.f32.mrf.mxu0
          %v1088 = vadd.f32 %v723, %v1087
          %v1089 = vpop.f32.mrf.mxu0
          %1090 = vmatprep.mubr.bf16.mxu0 0
          %1091 = vmatmul.mubr.bf16.gmra.mxu0 %v923
          %v1092 = vpop.f32.mrf.mxu0
          %v1093 = vadd.f32 %v723, %v1092
          %v1094 = vpop.f32.mrf.mxu0
          %v1095 = vpop.f32.mrf.mxu0
          %v1096 = vadd.f32 %v723, %v1095
          %v1097 = vpop.f32.mrf.mxu0
          %1098 = vmatprep.mubr.bf16.mxu0 0
          %1099 = vmatmul.mubr.bf16.gmra.mxu0 %v926
          %v1100 = vpop.f32.mrf.mxu0
          %v1101 = vadd.f32 %v723, %v1100
          %v1102 = vpop.f32.mrf.mxu0
          %v1103 = vpop.f32.mrf.mxu0
          %v1104 = vadd.f32 %v723, %v1103
          %v1105 = vpop.f32.mrf.mxu0
          %1106 = vmatprep.mubr.bf16.mxu0 0
          %1107 = vmatmul.mubr.bf16.gmra.mxu0 %v929
          %v1108 = vpop.f32.mrf.mxu0
          %v1109 = vadd.f32 %v723, %v1108
          %v1110 = vpop.f32.mrf.mxu0
          %v1111 = vpop.f32.mrf.mxu0
          %v1112 = vadd.f32 %v723, %v1111
          %v1113 = vpop.f32.mrf.mxu0
          %1114 = vmatprep.mubr.bf16.mxu0 0
          %1115 = vmatmul.mubr.bf16.gmra.mxu0 %v932
          %v1116 = vpop.f32.mrf.mxu0
          %v1117 = vadd.f32 %v723, %v1116
          %v1118 = vpop.f32.mrf.mxu0
          %v1119 = vpop.f32.mrf.mxu0
          %v1120 = vadd.f32 %v723, %v1119
          %v1121 = vpop.f32.mrf.mxu0
          %1122 = vmatprep.mubr.bf16.mxu0 0
          %1123 = vmatmul.mubr.bf16.gmra.mxu0 %v935
          %v1124 = vpop.f32.mrf.mxu0
          %v1125 = vadd.f32 %v723, %v1124
          %v1126 = vpop.f32.mrf.mxu0
          %v1127 = vpop.f32.mrf.mxu0
          %v1128 = vadd.f32 %v723, %v1127
          %v1129 = vpop.f32.mrf.mxu0
          %1130 = vmatprep.mubr.bf16.mxu0 0
          %1131 = vmatmul.mubr.bf16.gmra.mxu0 %v938
          %v1132 = vpop.f32.mrf.mxu0
          %v1133 = vadd.f32 %v723, %v1132
          %v1134 = vpop.f32.mrf.mxu0
          %v1135 = vpop.f32.mrf.mxu0
          %v1136 = vadd.f32 %v723, %v1135
          %v1137 = vpop.f32.mrf.mxu0
          %1138 = vmatprep.mubr.bf16.mxu0 0
          %1139 = vmatmul.mubr.bf16.gmra.mxu0 %v941
          %v1140 = vpop.f32.mrf.mxu0
          %v1141 = vadd.f32 %v723, %v1140
          %v1142 = vpop.f32.mrf.mxu0
          %v1143 = vpop.f32.mrf.mxu0
          %v1144 = vadd.f32 %v723, %v1143
          %v1145 = vpop.f32.mrf.mxu0
          %1146 = vmatprep.mubr.bf16.mxu0 0
          %1147 = vmatmul.mubr.bf16.gmra.mxu0 %v944
          %v1148 = vpop.f32.mrf.mxu0
          %v1149 = vadd.f32 %v723, %v1148
          %v1150 = vpop.f32.mrf.mxu0
          %v1151 = vpop.f32.mrf.mxu0
          %v1152 = vadd.f32 %v723, %v1151
          %v1153 = vpop.f32.mrf.mxu0
          %1154 = vmatprep.mubr.bf16.mxu0 0
          %1155 = vmatmul.mubr.bf16.gmra.mxu0 %v947
          %v1156 = vpop.f32.mrf.mxu0
          %v1157 = vadd.f32 %v723, %v1156
          %v1158 = vpop.f32.mrf.mxu0
          %v1159 = vpop.f32.mrf.mxu0
          %v1160 = vadd.f32 %v723, %v1159
          %v1161 = vpop.f32.mrf.mxu0
          %1162 = vmatprep.mubr.bf16.mxu0 0
          %1163 = vmatmul.mubr.bf16.gmra.mxu0 %v950
          %v1164 = vpop.f32.mrf.mxu0
          %v1165 = vadd.f32 %v723, %v1164
          %v1166 = vpop.f32.mrf.mxu0
          %v1167 = vpop.f32.mrf.mxu0
          %v1168 = vadd.f32 %v723, %v1167
          %v1169 = vpop.f32.mrf.mxu0
          %1170 = vmatprep.mubr.bf16.mxu0 0
          %1171 = vmatmul.mubr.bf16.gmra.mxu0 %v953
          %v1172 = vpop.f32.mrf.mxu0
          %v1173 = vadd.f32 %v723, %v1172
          %v1174 = vpop.f32.mrf.mxu0
          %v1175 = vpop.f32.mrf.mxu0
          %v1176 = vadd.f32 %v723, %v1175
          %v1177 = vpop.f32.mrf.mxu0
          %1178 = vmatprep.mubr.bf16.mxu0 0
          %1179 = vmatmul.mubr.bf16.gmra.mxu0 %v956
          %v1180 = vpop.f32.mrf.mxu0
          %v1181 = vadd.f32 %v723, %v1180
          %v1182 = vpop.f32.mrf.mxu0
          %v1183 = vpop.f32.mrf.mxu0
          %v1184 = vadd.f32 %v723, %v1183
          %v1185 = vpop.f32.mrf.mxu0
          %1186 = vmatprep.mubr.bf16.mxu0 0
          %1187 = vmatmul.mubr.bf16.gmra.mxu0 %v959
          %v1188 = vpop.f32.mrf.mxu0
          %v1189 = vadd.f32 %v723, %v1188
          %v1190 = vpop.f32.mrf.mxu0
          %v1191 = vpop.f32.mrf.mxu0
          %v1192 = vadd.f32 %v723, %v1191
          %v1193 = vpop.f32.mrf.mxu0
          %1194 = vmatprep.mubr.bf16.mxu0 0
          %1195 = vmatmul.mubr.bf16.gmra.mxu0 %v962
          %v1196 = vpop.f32.mrf.mxu0
          %v1197 = vadd.f32 %v723, %v1196
          %v1198 = vpop.f32.mrf.mxu0
          %v1199 = vpop.f32.mrf.mxu0
          %v1200 = vadd.f32 %v723, %v1199
          %v1201 = vpop.f32.mrf.mxu0
          %1202 = vmatprep.mubr.bf16.mxu0 0
          %1203 = vmatmul.mubr.bf16.gmra.mxu0 %v965
          %v1204 = vpop.f32.mrf.mxu0
          %v1205 = vadd.f32 %v723, %v1204
          %v1206 = vpop.f32.mrf.mxu0
          %v1207 = vpop.f32.mrf.mxu0
          %v1208 = vadd.f32 %v723, %v1207
          %v1209 = vpop.f32.mrf.mxu0
          %1210 = vmatprep.mubr.bf16.mxu0 0
          %1211 = vmatmul.mubr.bf16.gmra.mxu0 %v968
          %v1212 = vpop.f32.mrf.mxu0
          %v1213 = vadd.f32 %v723, %v1212
          %v1214 = vpop.f32.mrf.mxu0
          %v1215 = vpop.f32.mrf.mxu0
          %v1216 = vadd.f32 %v723, %v1215
          %v1217 = vpop.f32.mrf.mxu0
          %1218 = vmatprep.mubr.bf16.mxu0 0
          %1219 = vmatmul.mubr.bf16.gmra.mxu0 %v971
          %v1220 = vpop.f32.mrf.mxu0
          %v1221 = vadd.f32 %v723, %v1220
          %v1222 = vpop.f32.mrf.mxu0
          %v1223 = vpop.f32.mrf.mxu0
          %v1224 = vadd.f32 %v723, %v1223
          %v1225 = vpop.f32.mrf.mxu0
          %1226 = vmatprep.mubr.bf16.mxu0 0
          %1227 = vmatmul.mubr.bf16.gmra.mxu0 %v974
          %v1228 = vpop.f32.mrf.mxu0
          %v1229 = vadd.f32 %v723, %v1228
          %v1230 = vpop.f32.mrf.mxu0
          %v1231 = vpop.f32.mrf.mxu0
          %v1232 = vadd.f32 %v723, %v1231
          %v1233 = vpop.f32.mrf.mxu0
          %1234 = vmatprep.mubr.bf16.mxu0 0
          %1235 = vmatmul.mubr.bf16.gmra.mxu0 %v977
          %v1236 = vpop.f32.mrf.mxu0
          %v1237 = vadd.f32 %v723, %v1236
          %v1238 = vpop.f32.mrf.mxu0
          %v1239 = vpop.f32.mrf.mxu0
          %v1240 = vadd.f32 %v723, %v1239
          %v1241 = vpop.f32.mrf.mxu0
          %1242 = vmatprep.mubr.bf16.mxu0 0
          %1243 = vmatmul.mubr.bf16.gmra.mxu0 %v980
          %v1244 = vpop.f32.mrf.mxu0
          %v1245 = vadd.f32 %v723, %v1244
          %v1246 = vpop.f32.mrf.mxu0
          %v1247 = vpop.f32.mrf.mxu0
          %v1248 = vadd.f32 %v723, %v1247
          %v1249 = vpop.f32.mrf.mxu0
          %1250 = vmatprep.mubr.bf16.mxu0 0
          %1251 = vmatmul.mubr.bf16.gmra.mxu0 %v983
          %v1252 = vpop.f32.mrf.mxu0
          %v1253 = vadd.f32 %v723, %v1252
          %v1254 = vpop.f32.mrf.mxu0
          %v1255 = vpop.f32.mrf.mxu0
          %v1256 = vadd.f32 %v723, %v1255
          %v1257 = vpop.f32.mrf.mxu0
          %1258 = vmatprep.mubr.bf16.mxu0 0
          %1259 = vmatmul.mubr.bf16.gmra.mxu0 %v986
          %v1260 = vpop.f32.mrf.mxu0
          %v1261 = vadd.f32 %v723, %v1260
          %v1262 = vpop.f32.mrf.mxu0
          %v1263 = vpop.f32.mrf.mxu0
          %v1264 = vadd.f32 %v723, %v1263
          %v1265 = vpop.f32.mrf.mxu0
          %1266 = vmatprep.mubr.bf16.mxu0 0
          %1267 = vmatmul.mubr.bf16.gmra.mxu0 %v989
          %v1268 = vpop.f32.mrf.mxu0
          %v1269 = vadd.f32 %v723, %v1268
          %v1270 = vpop.f32.mrf.mxu0
          %v1271 = vpop.f32.mrf.mxu0
          %v1272 = vadd.f32 %v723, %v1271
          %v1273 = vpop.f32.mrf.mxu0
          %1274 = vmatprep.mubr.bf16.mxu0 0
          %1275 = vmatmul.mubr.bf16.gmra.mxu0 %v992
          %v1276 = vpop.f32.mrf.mxu0
          %v1277 = vadd.f32 %v723, %v1276
          %v1278 = vpop.f32.mrf.mxu0
          %v1279 = vpop.f32.mrf.mxu0
          %v1280 = vadd.f32 %v723, %v1279
          %v1281 = vpop.f32.mrf.mxu0
          %1282 = vdwg.mxu0
          %v1283 = vxor.u32 %v1029, 2147483648
          %v1284 = vxor.u32 %v1032, 2147483648
          %v1285 = vxor.u32 %v1037, 2147483648
          %v1286 = vxor.u32 %v1040, 2147483648
          %v1287 = vxor.u32 %v1045, 2147483648
          %v1288 = vxor.u32 %v1048, 2147483648
          %v1289 = vxor.u32 %v1053, 2147483648
          %v1290 = vxor.u32 %v1056, 2147483648
          %v1291 = vxor.u32 %v1061, 2147483648
          %v1292 = vxor.u32 %v1064, 2147483648
          %v1293 = vxor.u32 %v1069, 2147483648
          %v1294 = vxor.u32 %v1072, 2147483648
          %v1295 = vxor.u32 %v1077, 2147483648
          %v1296 = vxor.u32 %v1080, 2147483648
          %v1297 = vxor.u32 %v1085, 2147483648
          %v1298 = vxor.u32 %v1088, 2147483648
          %v1299 = vxor.u32 %v1093, 2147483648
          %v1300 = vxor.u32 %v1096, 2147483648
          %v1301 = vxor.u32 %v1101, 2147483648
          %v1302 = vxor.u32 %v1104, 2147483648
          %v1303 = vxor.u32 %v1109, 2147483648
          %v1304 = vxor.u32 %v1112, 2147483648
          %v1305 = vxor.u32 %v1117, 2147483648
          %v1306 = vxor.u32 %v1120, 2147483648
          %v1307 = vxor.u32 %v1125, 2147483648
          %v1308 = vxor.u32 %v1128, 2147483648
          %v1309 = vxor.u32 %v1133, 2147483648
          %v1310 = vxor.u32 %v1136, 2147483648
          %v1311 = vxor.u32 %v1141, 2147483648
          %v1312 = vxor.u32 %v1144, 2147483648
          %v1313 = vxor.u32 %v1149, 2147483648
          %v1314 = vxor.u32 %v1152, 2147483648
          %v1315 = vxor.u32 %v1157, 2147483648
          %v1316 = vxor.u32 %v1160, 2147483648
          %v1317 = vxor.u32 %v1165, 2147483648
          %v1318 = vxor.u32 %v1168, 2147483648
          %v1319 = vxor.u32 %v1173, 2147483648
          %v1320 = vxor.u32 %v1176, 2147483648
          %v1321 = vxor.u32 %v1181, 2147483648
          %v1322 = vxor.u32 %v1184, 2147483648
          %v1323 = vxor.u32 %v1189, 2147483648
          %v1324 = vxor.u32 %v1192, 2147483648
          %v1325 = vxor.u32 %v1197, 2147483648
          %v1326 = vxor.u32 %v1200, 2147483648
          %v1327 = vxor.u32 %v1205, 2147483648
          %v1328 = vxor.u32 %v1208, 2147483648
          %v1329 = vxor.u32 %v1213, 2147483648
          %v1330 = vxor.u32 %v1216, 2147483648
          %v1331 = vxor.u32 %v1221, 2147483648
          %v1332 = vxor.u32 %v1224, 2147483648
          %v1333 = vxor.u32 %v1229, 2147483648
          %v1334 = vxor.u32 %v1232, 2147483648
          %v1335 = vxor.u32 %v1237, 2147483648
          %v1336 = vxor.u32 %v1240, 2147483648
          %v1337 = vxor.u32 %v1245, 2147483648
          %v1338 = vxor.u32 %v1248, 2147483648
          %v1339 = vxor.u32 %v1253, 2147483648
          %v1340 = vxor.u32 %v1256, 2147483648
          %v1341 = vxor.u32 %v1261, 2147483648
          %v1342 = vxor.u32 %v1264, 2147483648
          %v1343 = vxor.u32 %v1269, 2147483648
          %v1344 = vxor.u32 %v1272, 2147483648
          %v1345 = vxor.u32 %v1277, 2147483648
          %v1346 = vxor.u32 %v1280, 2147483648
          %v1347 = vmul.f32 %v1283, 1.442695
          %v1348 = vpow.pop %v1347
          %v1349 = vmul.f32 %v1284, 1.442695
          %v1350 = vpow.pop %v1349
          %v1351 = vmul.f32 %v1285, 1.442695
          %v1352 = vpow.pop %v1351
          %v1353 = vmul.f32 %v1286, 1.442695
          %v1354 = vpow.pop %v1353
          %v1355 = vmul.f32 %v1287, 1.442695
          %v1356 = vpow.pop %v1355
          %v1357 = vmul.f32 %v1288, 1.442695
          %v1358 = vpow.pop %v1357
          %v1359 = vmul.f32 %v1289, 1.442695
          %v1360 = vpow.pop %v1359
          %v1361 = vmul.f32 %v1290, 1.442695
          %v1362 = vpow.pop %v1361
          %v1363 = vmul.f32 %v1291, 1.442695
          %v1364 = vpow.pop %v1363
          %v1365 = vmul.f32 %v1292, 1.442695
          %v1366 = vpow.pop %v1365
          %v1367 = vmul.f32 %v1293, 1.442695
          %v1368 = vpow.pop %v1367
          %v1369 = vmul.f32 %v1294, 1.442695
          %v1370 = vpow.pop %v1369
          %v1371 = vmul.f32 %v1295, 1.442695
          %v1372 = vpow.pop %v1371
          %v1373 = vmul.f32 %v1296, 1.442695
          %v1374 = vpow.pop %v1373
          %v1375 = vmul.f32 %v1297, 1.442695
          %v1376 = vpow.pop %v1375
          %v1377 = vmul.f32 %v1298, 1.442695
          %v1378 = vpow.pop %v1377
          %v1379 = vmul.f32 %v1299, 1.442695
          %v1380 = vpow.pop %v1379
          %v1381 = vmul.f32 %v1300, 1.442695
          %v1382 = vpow.pop %v1381
          %v1383 = vmul.f32 %v1301, 1.442695
          %v1384 = vpow.pop %v1383
          %v1385 = vmul.f32 %v1302, 1.442695
          %v1386 = vpow.pop %v1385
          %v1387 = vmul.f32 %v1303, 1.442695
          %v1388 = vpow.pop %v1387
          %v1389 = vmul.f32 %v1304, 1.442695
          %v1390 = vpow.pop %v1389
          %v1391 = vmul.f32 %v1305, 1.442695
          %v1392 = vpow.pop %v1391
          %v1393 = vmul.f32 %v1306, 1.442695
          %v1394 = vpow.pop %v1393
          %v1395 = vmul.f32 %v1307, 1.442695
          %v1396 = vpow.pop %v1395
          %v1397 = vmul.f32 %v1308, 1.442695
          %v1398 = vpow.pop %v1397
          %v1399 = vmul.f32 %v1309, 1.442695
          %v1400 = vpow.pop %v1399
          %v1401 = vmul.f32 %v1310, 1.442695
          %v1402 = vpow.pop %v1401
          %v1403 = vmul.f32 %v1311, 1.442695
          %v1404 = vpow.pop %v1403
          %v1405 = vmul.f32 %v1312, 1.442695
          %v1406 = vpow.pop %v1405
          %v1407 = vmul.f32 %v1313, 1.442695
          %v1408 = vpow.pop %v1407
          %v1409 = vmul.f32 %v1314, 1.442695
          %v1410 = vpow.pop %v1409
          %v1411 = vmul.f32 %v1315, 1.442695
          %v1412 = vpow.pop %v1411
          %v1413 = vmul.f32 %v1316, 1.442695
          %v1414 = vpow.pop %v1413
          %v1415 = vmul.f32 %v1317, 1.442695
          %v1416 = vpow.pop %v1415
          %v1417 = vmul.f32 %v1318, 1.442695
          %v1418 = vpow.pop %v1417
          %v1419 = vmul.f32 %v1319, 1.442695
          %v1420 = vpow.pop %v1419
          %v1421 = vmul.f32 %v1320, 1.442695
          %v1422 = vpow.pop %v1421
          %v1423 = vmul.f32 %v1321, 1.442695
          %v1424 = vpow.pop %v1423
          %v1425 = vmul.f32 %v1322, 1.442695
          %v1426 = vpow.pop %v1425
          %v1427 = vmul.f32 %v1323, 1.442695
          %v1428 = vpow.pop %v1427
          %v1429 = vmul.f32 %v1324, 1.442695
          %v1430 = vpow.pop %v1429
          %v1431 = vmul.f32 %v1325, 1.442695
          %v1432 = vpow.pop %v1431
          %v1433 = vmul.f32 %v1326, 1.442695
          %v1434 = vpow.pop %v1433
          %v1435 = vmul.f32 %v1327, 1.442695
          %v1436 = vpow.pop %v1435
          %v1437 = vmul.f32 %v1328, 1.442695
          %v1438 = vpow.pop %v1437
          %v1439 = vmul.f32 %v1329, 1.442695
          %v1440 = vpow.pop %v1439
          %v1441 = vmul.f32 %v1330, 1.442695
          %v1442 = vpow.pop %v1441
          %v1443 = vmul.f32 %v1331, 1.442695
          %v1444 = vpow.pop %v1443
          %v1445 = vmul.f32 %v1332, 1.442695
          %v1446 = vpow.pop %v1445
          %v1447 = vmul.f32 %v1333, 1.442695
          %v1448 = vpow.pop %v1447
          %v1449 = vmul.f32 %v1334, 1.442695
          %v1450 = vpow.pop %v1449
          %v1451 = vmul.f32 %v1335, 1.442695
          %v1452 = vpow.pop %v1451
          %v1453 = vmul.f32 %v1336, 1.442695
          %v1454 = vpow.pop %v1453
          %v1455 = vmul.f32 %v1337, 1.442695
          %v1456 = vpow.pop %v1455
          %v1457 = vmul.f32 %v1338, 1.442695
          %v1458 = vpow.pop %v1457
          %v1459 = vmul.f32 %v1339, 1.442695
          %v1460 = vpow.pop %v1459
          %v1461 = vmul.f32 %v1340, 1.442695
          %v1462 = vpow.pop %v1461
          %v1463 = vmul.f32 %v1341, 1.442695
          %v1464 = vpow.pop %v1463
          %v1465 = vmul.f32 %v1342, 1.442695
          %v1466 = vpow.pop %v1465
          %v1467 = vmul.f32 %v1343, 1.442695
          %v1468 = vpow.pop %v1467
          %v1469 = vmul.f32 %v1344, 1.442695
          %v1470 = vpow.pop %v1469
          %v1471 = vmul.f32 %v1345, 1.442695
          %v1472 = vpow.pop %v1471
          %v1473 = vmul.f32 %v1346, 1.442695
          %v1474 = vpow.pop %v1473
          %v1475 = vadd.f32 %v1348, 1.0
          %v1476 = vadd.f32 %v1350, 1.0
          %v1477 = vadd.f32 %v1352, 1.0
          %v1478 = vadd.f32 %v1354, 1.0
          %v1479 = vadd.f32 %v1356, 1.0
          %v1480 = vadd.f32 %v1358, 1.0
          %v1481 = vadd.f32 %v1360, 1.0
          %v1482 = vadd.f32 %v1362, 1.0
          %v1483 = vadd.f32 %v1364, 1.0
          %v1484 = vadd.f32 %v1366, 1.0
          %v1485 = vadd.f32 %v1368, 1.0
          %v1486 = vadd.f32 %v1370, 1.0
          %v1487 = vadd.f32 %v1372, 1.0
          %v1488 = vadd.f32 %v1374, 1.0
          %v1489 = vadd.f32 %v1376, 1.0
          %v1490 = vadd.f32 %v1378, 1.0
          %v1491 = vadd.f32 %v1380, 1.0
          %v1492 = vadd.f32 %v1382, 1.0
          %v1493 = vadd.f32 %v1384, 1.0
          %v1494 = vadd.f32 %v1386, 1.0
          %v1495 = vadd.f32 %v1388, 1.0
          %v1496 = vadd.f32 %v1390, 1.0
          %v1497 = vadd.f32 %v1392, 1.0
          %v1498 = vadd.f32 %v1394, 1.0
          %v1499 = vadd.f32 %v1396, 1.0
          %v1500 = vadd.f32 %v1398, 1.0
          %v1501 = vadd.f32 %v1400, 1.0
          %v1502 = vadd.f32 %v1402, 1.0
          %v1503 = vadd.f32 %v1404, 1.0
          %v1504 = vadd.f32 %v1406, 1.0
          %v1505 = vadd.f32 %v1408, 1.0
          %v1506 = vadd.f32 %v1410, 1.0
          %v1507 = vadd.f32 %v1412, 1.0
          %v1508 = vadd.f32 %v1414, 1.0
          %v1509 = vadd.f32 %v1416, 1.0
          %v1510 = vadd.f32 %v1418, 1.0
          %v1511 = vadd.f32 %v1420, 1.0
          %v1512 = vadd.f32 %v1422, 1.0
          %v1513 = vadd.f32 %v1424, 1.0
          %v1514 = vadd.f32 %v1426, 1.0
          %v1515 = vadd.f32 %v1428, 1.0
          %v1516 = vadd.f32 %v1430, 1.0
          %v1517 = vadd.f32 %v1432, 1.0
          %v1518 = vadd.f32 %v1434, 1.0
          %v1519 = vadd.f32 %v1436, 1.0
          %v1520 = vadd.f32 %v1438, 1.0
          %v1521 = vadd.f32 %v1440, 1.0
          %v1522 = vadd.f32 %v1442, 1.0
          %v1523 = vadd.f32 %v1444, 1.0
          %v1524 = vadd.f32 %v1446, 1.0
          %v1525 = vadd.f32 %v1448, 1.0
          %v1526 = vadd.f32 %v1450, 1.0
          %v1527 = vadd.f32 %v1452, 1.0
          %v1528 = vadd.f32 %v1454, 1.0
          %v1529 = vadd.f32 %v1456, 1.0
          %v1530 = vadd.f32 %v1458, 1.0
          %v1531 = vadd.f32 %v1460, 1.0
          %v1532 = vadd.f32 %v1462, 1.0
          %v1533 = vadd.f32 %v1464, 1.0
          %v1534 = vadd.f32 %v1466, 1.0
          %v1535 = vadd.f32 %v1468, 1.0
          %v1536 = vadd.f32 %v1470, 1.0
          %v1537 = vadd.f32 %v1472, 1.0
          %v1538 = vadd.f32 %v1474, 1.0
          %v1539 = vrcp.pop %v1475
          %v1540 = vmul.f32 1.0, %v1539
          %v1541 = vrcp.pop %v1476
          %v1542 = vmul.f32 1.0, %v1541
          %v1543 = vrcp.pop %v1477
          %v1544 = vmul.f32 1.0, %v1543
          %v1545 = vrcp.pop %v1478
          %v1546 = vmul.f32 1.0, %v1545
          %v1547 = vrcp.pop %v1479
          %v1548 = vmul.f32 1.0, %v1547
          %v1549 = vrcp.pop %v1480
          %v1550 = vmul.f32 1.0, %v1549
          %v1551 = vrcp.pop %v1481
          %v1552 = vmul.f32 1.0, %v1551
          %v1553 = vrcp.pop %v1482
          %v1554 = vmul.f32 1.0, %v1553
          %v1555 = vrcp.pop %v1483
          %v1556 = vmul.f32 1.0, %v1555
          %v1557 = vrcp.pop %v1484
          %v1558 = vmul.f32 1.0, %v1557
          %v1559 = vrcp.pop %v1485
          %v1560 = vmul.f32 1.0, %v1559
          %v1561 = vrcp.pop %v1486
          %v1562 = vmul.f32 1.0, %v1561
          %v1563 = vrcp.pop %v1487
          %v1564 = vmul.f32 1.0, %v1563
          %v1565 = vrcp.pop %v1488
          %v1566 = vmul.f32 1.0, %v1565
          %v1567 = vrcp.pop %v1489
          %v1568 = vmul.f32 1.0, %v1567
          %v1569 = vrcp.pop %v1490
          %v1570 = vmul.f32 1.0, %v1569
          %v1571 = vrcp.pop %v1491
          %v1572 = vmul.f32 1.0, %v1571
          %v1573 = vrcp.pop %v1492
          %v1574 = vmul.f32 1.0, %v1573
          %v1575 = vrcp.pop %v1493
          %v1576 = vmul.f32 1.0, %v1575
          %v1577 = vrcp.pop %v1494
          %v1578 = vmul.f32 1.0, %v1577
          %v1579 = vrcp.pop %v1495
          %v1580 = vmul.f32 1.0, %v1579
          %v1581 = vrcp.pop %v1496
          %v1582 = vmul.f32 1.0, %v1581
          %v1583 = vrcp.pop %v1497
          %v1584 = vmul.f32 1.0, %v1583
          %v1585 = vrcp.pop %v1498
          %v1586 = vmul.f32 1.0, %v1585
          %v1587 = vrcp.pop %v1499
          %v1588 = vmul.f32 1.0, %v1587
          %v1589 = vrcp.pop %v1500
          %v1590 = vmul.f32 1.0, %v1589
          %v1591 = vrcp.pop %v1501
          %v1592 = vmul.f32 1.0, %v1591
          %v1593 = vrcp.pop %v1502
          %v1594 = vmul.f32 1.0, %v1593
          %v1595 = vrcp.pop %v1503
          %v1596 = vmul.f32 1.0, %v1595
          %v1597 = vrcp.pop %v1504
          %v1598 = vmul.f32 1.0, %v1597
          %v1599 = vrcp.pop %v1505
          %v1600 = vmul.f32 1.0, %v1599
          %v1601 = vrcp.pop %v1506
          %v1602 = vmul.f32 1.0, %v1601
          %v1603 = vrcp.pop %v1507
          %v1604 = vmul.f32 1.0, %v1603
          %v1605 = vrcp.pop %v1508
          %v1606 = vmul.f32 1.0, %v1605
          %v1607 = vrcp.pop %v1509
          %v1608 = vmul.f32 1.0, %v1607
          %v1609 = vrcp.pop %v1510
          %v1610 = vmul.f32 1.0, %v1609
          %v1611 = vrcp.pop %v1511
          %v1612 = vmul.f32 1.0, %v1611
          %v1613 = vrcp.pop %v1512
          %v1614 = vmul.f32 1.0, %v1613
          %v1615 = vrcp.pop %v1513
          %v1616 = vmul.f32 1.0, %v1615
          %v1617 = vrcp.pop %v1514
          %v1618 = vmul.f32 1.0, %v1617
          %v1619 = vrcp.pop %v1515
          %v1620 = vmul.f32 1.0, %v1619
          %v1621 = vrcp.pop %v1516
          %v1622 = vmul.f32 1.0, %v1621
          %v1623 = vrcp.pop %v1517
          %v1624 = vmul.f32 1.0, %v1623
          %v1625 = vrcp.pop %v1518
          %v1626 = vmul.f32 1.0, %v1625
          %v1627 = vrcp.pop %v1519
          %v1628 = vmul.f32 1.0, %v1627
          %v1629 = vrcp.pop %v1520
          %v1630 = vmul.f32 1.0, %v1629
          %v1631 = vrcp.pop %v1521
          %v1632 = vmul.f32 1.0, %v1631
          %v1633 = vrcp.pop %v1522
          %v1634 = vmul.f32 1.0, %v1633
          %v1635 = vrcp.pop %v1523
          %v1636 = vmul.f32 1.0, %v1635
          %v1637 = vrcp.pop %v1524
          %v1638 = vmul.f32 1.0, %v1637
          %v1639 = vrcp.pop %v1525
          %v1640 = vmul.f32 1.0, %v1639
          %v1641 = vrcp.pop %v1526
          %v1642 = vmul.f32 1.0, %v1641
          %v1643 = vrcp.pop %v1527
          %v1644 = vmul.f32 1.0, %v1643
          %v1645 = vrcp.pop %v1528
          %v1646 = vmul.f32 1.0, %v1645
          %v1647 = vrcp.pop %v1529
          %v1648 = vmul.f32 1.0, %v1647
          %v1649 = vrcp.pop %v1530
          %v1650 = vmul.f32 1.0, %v1649
          %v1651 = vrcp.pop %v1531
          %v1652 = vmul.f32 1.0, %v1651
          %v1653 = vrcp.pop %v1532
          %v1654 = vmul.f32 1.0, %v1653
          %v1655 = vrcp.pop %v1533
          %v1656 = vmul.f32 1.0, %v1655
          %v1657 = vrcp.pop %v1534
          %v1658 = vmul.f32 1.0, %v1657
          %v1659 = vrcp.pop %v1535
          %v1660 = vmul.f32 1.0, %v1659
          %v1661 = vrcp.pop %v1536
          %v1662 = vmul.f32 1.0, %v1661
          %v1663 = vrcp.pop %v1537
          %v1664 = vmul.f32 1.0, %v1663
          %v1665 = vrcp.pop %v1538
          %v1666 = vmul.f32 1.0, %v1665
          %v1667 = vmul.f32 %v1029, %v1540
          %v1668 = vmul.f32 %v1032, %v1542
          %v1669 = vmul.f32 %v1037, %v1544
          %v1670 = vmul.f32 %v1040, %v1546
          %v1671 = vmul.f32 %v1045, %v1548
          %v1672 = vmul.f32 %v1048, %v1550
          %v1673 = vmul.f32 %v1053, %v1552
          %v1674 = vmul.f32 %v1056, %v1554
          %v1675 = vmul.f32 %v1061, %v1556
          %v1676 = vmul.f32 %v1064, %v1558
          %v1677 = vmul.f32 %v1069, %v1560
          %v1678 = vmul.f32 %v1072, %v1562
          %v1679 = vmul.f32 %v1077, %v1564
          %v1680 = vmul.f32 %v1080, %v1566
          %v1681 = vmul.f32 %v1085, %v1568
          %v1682 = vmul.f32 %v1088, %v1570
          %v1683 = vmul.f32 %v1093, %v1572
          %v1684 = vmul.f32 %v1096, %v1574
          %v1685 = vmul.f32 %v1101, %v1576
          %v1686 = vmul.f32 %v1104, %v1578
          %v1687 = vmul.f32 %v1109, %v1580
          %v1688 = vmul.f32 %v1112, %v1582
          %v1689 = vmul.f32 %v1117, %v1584
          %v1690 = vmul.f32 %v1120, %v1586
          %v1691 = vmul.f32 %v1125, %v1588
          %v1692 = vmul.f32 %v1128, %v1590
          %v1693 = vmul.f32 %v1133, %v1592
          %v1694 = vmul.f32 %v1136, %v1594
          %v1695 = vmul.f32 %v1141, %v1596
          %v1696 = vmul.f32 %v1144, %v1598
          %v1697 = vmul.f32 %v1149, %v1600
          %v1698 = vmul.f32 %v1152, %v1602
          %v1699 = vmul.f32 %v1157, %v1604
          %v1700 = vmul.f32 %v1160, %v1606
          %v1701 = vmul.f32 %v1165, %v1608
          %v1702 = vmul.f32 %v1168, %v1610
          %v1703 = vmul.f32 %v1173, %v1612
          %v1704 = vmul.f32 %v1176, %v1614
          %v1705 = vmul.f32 %v1181, %v1616
          %v1706 = vmul.f32 %v1184, %v1618
          %v1707 = vmul.f32 %v1189, %v1620
          %v1708 = vmul.f32 %v1192, %v1622
          %v1709 = vmul.f32 %v1197, %v1624
          %v1710 = vmul.f32 %v1200, %v1626
          %v1711 = vmul.f32 %v1205, %v1628
          %v1712 = vmul.f32 %v1208, %v1630
          %v1713 = vmul.f32 %v1213, %v1632
          %v1714 = vmul.f32 %v1216, %v1634
          %v1715 = vmul.f32 %v1221, %v1636
          %v1716 = vmul.f32 %v1224, %v1638
          %v1717 = vmul.f32 %v1229, %v1640
          %v1718 = vmul.f32 %v1232, %v1642
          %v1719 = vmul.f32 %v1237, %v1644
          %v1720 = vmul.f32 %v1240, %v1646
          %v1721 = vmul.f32 %v1245, %v1648
          %v1722 = vmul.f32 %v1248, %v1650
          %v1723 = vmul.f32 %v1253, %v1652
          %v1724 = vmul.f32 %v1256, %v1654
          %v1725 = vmul.f32 %v1261, %v1656
          %v1726 = vmul.f32 %v1264, %v1658
          %v1727 = vmul.f32 %v1269, %v1660
          %v1728 = vmul.f32 %v1272, %v1662
          %v1729 = vmul.f32 %v1277, %v1664
          %v1730 = vmul.f32 %v1280, %v1666
          %v1731 = vsel %vm897, %v1667, 0.0
          %v1732 = vsel %vm897, %v1668, 0.0
          %v1733 = vadd.f32 %v1731, %v1732
          %v1734 = vsel %vm897, %v1669, 0.0
          %v1735 = vadd.f32 %v1733, %v1734
          %v1736 = vsel %vm897, %v1670, 0.0
          %v1737 = vadd.f32 %v1735, %v1736
          %v1738 = vsel %vm897, %v1671, 0.0
          %v1739 = vadd.f32 %v1737, %v1738
          %v1740 = vsel %vm897, %v1672, 0.0
          %v1741 = vadd.f32 %v1739, %v1740
          %v1742 = vsel %vm897, %v1673, 0.0
          %v1743 = vadd.f32 %v1741, %v1742
          %v1744 = vsel %vm897, %v1674, 0.0
          %v1745 = vadd.f32 %v1743, %v1744
          %v1746 = vsel %vm897, %v1675, 0.0
          %v1747 = vadd.f32 %v1745, %v1746
          %v1748 = vsel %vm897, %v1676, 0.0
          %v1749 = vadd.f32 %v1747, %v1748
          %v1750 = vsel %vm897, %v1677, 0.0
          %v1751 = vadd.f32 %v1749, %v1750
          %v1752 = vsel %vm897, %v1678, 0.0
          %v1753 = vadd.f32 %v1751, %v1752
          %v1754 = vsel %vm897, %v1679, 0.0
          %v1755 = vadd.f32 %v1753, %v1754
          %v1756 = vsel %vm897, %v1680, 0.0
          %v1757 = vadd.f32 %v1755, %v1756
          %v1758 = vsel %vm897, %v1681, 0.0
          %v1759 = vadd.f32 %v1757, %v1758
          %v1760 = vsel %vm897, %v1682, 0.0
          %v1761 = vadd.f32 %v1759, %v1760
          %v1762 = vsel %vm897, %v1683, 0.0
          %v1763 = vadd.f32 %v1761, %v1762
          %v1764 = vsel %vm897, %v1684, 0.0
          %v1765 = vadd.f32 %v1763, %v1764
          %v1766 = vsel %vm897, %v1685, 0.0
          %v1767 = vadd.f32 %v1765, %v1766
          %v1768 = vsel %vm897, %v1686, 0.0
          %v1769 = vadd.f32 %v1767, %v1768
          %v1770 = vsel %vm897, %v1687, 0.0
          %v1771 = vadd.f32 %v1769, %v1770
          %v1772 = vsel %vm897, %v1688, 0.0
          %v1773 = vadd.f32 %v1771, %v1772
          %v1774 = vsel %vm897, %v1689, 0.0
          %v1775 = vadd.f32 %v1773, %v1774
          %v1776 = vsel %vm897, %v1690, 0.0
          %v1777 = vadd.f32 %v1775, %v1776
          %v1778 = vsel %vm897, %v1691, 0.0
          %v1779 = vadd.f32 %v1777, %v1778
          %v1780 = vsel %vm897, %v1692, 0.0
          %v1781 = vadd.f32 %v1779, %v1780
          %v1782 = vsel %vm897, %v1693, 0.0
          %v1783 = vadd.f32 %v1781, %v1782
          %v1784 = vsel %vm897, %v1694, 0.0
          %v1785 = vadd.f32 %v1783, %v1784
          %v1786 = vsel %vm897, %v1695, 0.0
          %v1787 = vadd.f32 %v1785, %v1786
          %v1788 = vsel %vm897, %v1696, 0.0
          %v1789 = vadd.f32 %v1787, %v1788
          %v1790 = vsel %vm897, %v1697, 0.0
          %v1791 = vadd.f32 %v1789, %v1790
          %v1792 = vsel %vm897, %v1698, 0.0
          %v1793 = vadd.f32 %v1791, %v1792
          %v1794 = vrot.slane %v1793, 4
          %v1795 = vadd.f32 %v1793, %v1794
          %v1796 = vrot.slane %v1795, 2
          %v1797 = vadd.f32 %v1795, %v1796
          %v1798 = vrot.slane %v1797, 1
          %v1799 = vadd.f32 %v1797, %v1798
          %v1800 = vrcp.pop 256.0
          %v1801 = vmul.f32 %v1799, %v1800
          %vm1802 = vcmask 253952
          %1803 = vst.msk [vmem:[#allocation2] sm:$0x1] %vm1802, %v1801
          %v1804 = vsel %vm897, %v1699, 0.0
          %v1805 = vsel %vm897, %v1700, 0.0
          %v1806 = vadd.f32 %v1804, %v1805
          %v1807 = vsel %vm897, %v1701, 0.0
          %v1808 = vadd.f32 %v1806, %v1807
          %v1809 = vsel %vm897, %v1702, 0.0
          %v1810 = vadd.f32 %v1808, %v1809
          %v1811 = vsel %vm897, %v1703, 0.0
          %v1812 = vadd.f32 %v1810, %v1811
          %v1813 = vsel %vm897, %v1704, 0.0
          %v1814 = vadd.f32 %v1812, %v1813
          %v1815 = vsel %vm897, %v1705, 0.0
          %v1816 = vadd.f32 %v1814, %v1815
          %v1817 = vsel %vm897, %v1706, 0.0
          %v1818 = vadd.f32 %v1816, %v1817
          %v1819 = vsel %vm897, %v1707, 0.0
          %v1820 = vadd.f32 %v1818, %v1819
          %v1821 = vsel %vm897, %v1708, 0.0
          %v1822 = vadd.f32 %v1820, %v1821
          %v1823 = vsel %vm897, %v1709, 0.0
          %v1824 = vadd.f32 %v1822, %v1823
          %v1825 = vsel %vm897, %v1710, 0.0
          %v1826 = vadd.f32 %v1824, %v1825
          %v1827 = vsel %vm897, %v1711, 0.0
          %v1828 = vadd.f32 %v1826, %v1827
          %v1829 = vsel %vm897, %v1712, 0.0
          %v1830 = vadd.f32 %v1828, %v1829
          %v1831 = vsel %vm897, %v1713, 0.0
          %v1832 = vadd.f32 %v1830, %v1831
          %v1833 = vsel %vm897, %v1714, 0.0
          %v1834 = vadd.f32 %v1832, %v1833
          %v1835 = vsel %vm897, %v1715, 0.0
          %v1836 = vadd.f32 %v1834, %v1835
          %v1837 = vsel %vm897, %v1716, 0.0
          %v1838 = vadd.f32 %v1836, %v1837
          %v1839 = vsel %vm897, %v1717, 0.0
          %v1840 = vadd.f32 %v1838, %v1839
          %v1841 = vsel %vm897, %v1718, 0.0
          %v1842 = vadd.f32 %v1840, %v1841
          %v1843 = vsel %vm897, %v1719, 0.0
          %v1844 = vadd.f32 %v1842, %v1843
          %v1845 = vsel %vm897, %v1720, 0.0
          %v1846 = vadd.f32 %v1844, %v1845
          %v1847 = vsel %vm897, %v1721, 0.0
          %v1848 = vadd.f32 %v1846, %v1847
          %v1849 = vsel %vm897, %v1722, 0.0
          %v1850 = vadd.f32 %v1848, %v1849
          %v1851 = vsel %vm897, %v1723, 0.0
          %v1852 = vadd.f32 %v1850, %v1851
          %v1853 = vsel %vm897, %v1724, 0.0
          %v1854 = vadd.f32 %v1852, %v1853
          %v1855 = vsel %vm897, %v1725, 0.0
          %v1856 = vadd.f32 %v1854, %v1855
          %v1857 = vsel %vm897, %v1726, 0.0
          %v1858 = vadd.f32 %v1856, %v1857
          %v1859 = vsel %vm897, %v1727, 0.0
          %v1860 = vadd.f32 %v1858, %v1859
          %v1861 = vsel %vm897, %v1728, 0.0
          %v1862 = vadd.f32 %v1860, %v1861
          %v1863 = vsel %vm897, %v1729, 0.0
          %v1864 = vadd.f32 %v1862, %v1863
          %v1865 = vsel %vm897, %v1730, 0.0
          %v1866 = vadd.f32 %v1864, %v1865
          %v1867 = vrot.slane %v1866, 4
          %v1868 = vadd.f32 %v1866, %v1867
          %v1869 = vrot.slane %v1868, 2
          %v1870 = vadd.f32 %v1868, %v1869
          %v1871 = vrot.slane %v1870, 1
          %v1872 = vadd.f32 %v1870, %v1871
          %v1873 = vmul.f32 %v1872, %v1800
          %1874 = vst.msk [vmem:[#allocation2 + $0x1] sm:$0x1] %vm1802, %v1873
          %v1875 = vld [vmem:[#allocation2] sm:$0x3]
          %v1876 = vpack.c.bf16 %v1875, %v1875
          %v1877 = vld [vmem:[#allocation10] sm:$0xff]
          %v1878 = vld [vmem:[#allocation10 + $0x8] sm:$0xff]
          %v1879 = vld [vmem:[#allocation10 + $0x10] sm:$0xff]
          %v1880 = vld [vmem:[#allocation10 + $0x18] sm:$0xff]
          %v1881 = vld [vmem:[#allocation10 + $0x20] sm:$0xff]
          %v1882 = vld [vmem:[#allocation10 + $0x28] sm:$0xff]
          %v1883 = vld [vmem:[#allocation10 + $0x30] sm:$0xff]
          %v1884 = vld [vmem:[#allocation10 + $0x38] sm:$0xff]
          %v1885 = vld [vmem:[#allocation10 + $0x40] sm:$0xff]
          %v1886 = vld [vmem:[#allocation10 + $0x48] sm:$0xff]
          %v1887 = vld [vmem:[#allocation10 + $0x50] sm:$0xff]
          %v1888 = vld [vmem:[#allocation10 + $0x58] sm:$0xff]
          %v1889 = vld [vmem:[#allocation10 + $0x60] sm:$0xff]
          %v1890 = vld [vmem:[#allocation10 + $0x68] sm:$0xff]
          %v1891 = vld [vmem:[#allocation10 + $0x70] sm:$0xff]
          %v1892 = vld [vmem:[#allocation10 + $0x78] sm:$0xff]
          %v1893 = vld [vmem:[#allocation10 + $0x80] sm:$0xff]
          %v1894 = vld [vmem:[#allocation10 + $0x88] sm:$0xff]
          %v1895 = vld [vmem:[#allocation10 + $0x90] sm:$0xff]
          %v1896 = vld [vmem:[#allocation10 + $0x98] sm:$0xff]
          %v1897 = vld [vmem:[#allocation11] sm:$0xff]
          %v1898 = vld [vmem:[#allocation11 + $0x8] sm:$0x3]
          %v1901 = vlaneseq
          %v1902 = vshrl.u32 %v1901, 7
          %v1903 = vsub.s32 0, %v1902
          %v1904 = vrot.slane %v1897, %v1903
          %v1905 = vlaneseq
          %v1906 = vshrl.u32 %v1905, 7
          %v1907 = vsub.s32 1, %v1906
          %v1908 = vrot.slane %v1897, %v1907
          %v1909 = vlaneseq
          %v1910 = vshrl.u32 %v1909, 7
          %v1911 = vsub.s32 2, %v1910
          %v1912 = vrot.slane %v1897, %v1911
          %v1913 = vlaneseq
          %v1914 = vshrl.u32 %v1913, 7
          %v1915 = vsub.s32 3, %v1914
          %v1916 = vrot.slane %v1897, %v1915
          %v1917 = vlaneseq
          %v1918 = vshrl.u32 %v1917, 7
          %v1919 = vsub.s32 4, %v1918
          %v1920 = vrot.slane %v1897, %v1919
          %v1921 = vlaneseq
          %v1922 = vshrl.u32 %v1921, 7
          %v1923 = vsub.s32 5, %v1922
          %v1924 = vrot.slane %v1897, %v1923
          %v1925 = vlaneseq
          %v1926 = vshrl.u32 %v1925, 7
          %v1927 = vsub.s32 6, %v1926
          %v1928 = vrot.slane %v1897, %v1927
          %v1929 = vlaneseq
          %v1930 = vshrl.u32 %v1929, 7
          %v1931 = vsub.s32 7, %v1930
          %v1932 = vrot.slane %v1897, %v1931
          %v1933 = vlaneseq
          %v1934 = vshrl.u32 %v1933, 7
          %v1935 = vsub.s32 0, %v1934
          %v1936 = vrot.slane %v1898, %v1935
          %v1937 = vlaneseq
          %v1938 = vshrl.u32 %v1937, 7
          %v1939 = vsub.s32 1, %v1938
          %v1940 = vrot.slane %v1898, %v1939
          %v1971 = vunpack.c.l.b16 %v1877
          %v1972 = vunpack.c.h.b16 %v1877
          %v1973 = vunpack.c.l.b16 %v1878
          %v1974 = vunpack.c.h.b16 %v1878
          %v1975 = vunpack.c.l.b16 %v1879
          %v1976 = vunpack.c.h.b16 %v1879
          %v1977 = vunpack.c.l.b16 %v1880
          %v1978 = vunpack.c.h.b16 %v1880
          %v1979 = vunpack.c.l.b16 %v1881
          %v1980 = vunpack.c.h.b16 %v1881
          %v1981 = vunpack.c.l.b16 %v1882
          %v1982 = vunpack.c.h.b16 %v1882
          %v1983 = vunpack.c.l.b16 %v1883
          %v1984 = vunpack.c.h.b16 %v1883
          %v1985 = vunpack.c.l.b16 %v1884
          %v1986 = vunpack.c.h.b16 %v1884
          %v1987 = vunpack.c.l.b16 %v1885
          %v1988 = vunpack.c.h.b16 %v1885
          %v1989 = vunpack.c.l.b16 %v1886
          %v1990 = vunpack.c.h.b16 %v1886
          %v1991 = vunpack.c.l.b16 %v1887
          %v1992 = vunpack.c.h.b16 %v1887
          %v1993 = vunpack.c.l.b16 %v1888
          %v1994 = vunpack.c.h.b16 %v1888
          %v1995 = vunpack.c.l.b16 %v1889
          %v1996 = vunpack.c.h.b16 %v1889
          %v1997 = vunpack.c.l.b16 %v1890
          %v1998 = vunpack.c.h.b16 %v1890
          %v1999 = vunpack.c.l.b16 %v1891
          %v2000 = vunpack.c.h.b16 %v1891
          %v2001 = vunpack.c.l.b16 %v1892
          %v2002 = vunpack.c.h.b16 %v1892
          %v2003 = vunpack.c.l.b16 %v1893
          %v2004 = vunpack.c.h.b16 %v1893
          %v2005 = vunpack.c.l.b16 %v1894
          %v2006 = vunpack.c.h.b16 %v1894
          %v2007 = vunpack.c.l.b16 %v1895
          %v2008 = vunpack.c.h.b16 %v1895
          %v2009 = vunpack.c.l.b16 %v1896
          %v2010 = vunpack.c.h.b16 %v1896
          %v2011 = vpack.c.b16 %v1981, %v1971
          %v2012 = vpack.c.b16 %v1982, %v1972
          %v2013 = vpack.c.b16 %v1983, %v1973
          %v2014 = vpack.c.b16 %v1984, %v1974
          %v2015 = vpack.c.b16 %v1985, %v1975
          %v2016 = vpack.c.b16 %v1986, %v1976
          %v2017 = vpack.c.b16 %v1987, %v1977
          %v2018 = vpack.c.b16 %v1988, %v1978
          %v2019 = vpack.c.b16 %v1989, %v1979
          %v2020 = vpack.c.b16 %v1990, %v1980
          %v2021 = vpack.c.b16 %v2001, %v1991
          %v2022 = vpack.c.b16 %v2002, %v1992
          %v2023 = vpack.c.b16 %v2003, %v1993
          %v2024 = vpack.c.b16 %v2004, %v1994
          %v2025 = vpack.c.b16 %v2005, %v1995
          %v2026 = vpack.c.b16 %v2006, %v1996
          %v2027 = vpack.c.b16 %v2007, %v1997
          %v2028 = vpack.c.b16 %v2008, %v1998
          %v2029 = vpack.c.b16 %v2009, %v1999
          %v2030 = vpack.c.b16 %v2010, %v2000
          %v2052 = vsel %vm897, %v1876, 0
          %2054 = vmatprep.subr.bf16.mxu0 0
          %2055 = vmatpush1.bf16.msra.mxu0 0
          %2056 = vmatprep.subr.bf16.mxu0 0
          %2057 = vmatpush1.bf16.msra.mxu0 0
          %2058 = vmatprep.subr.bf16.mxu0 0
          %2059 = vmatpush1.bf16.msra.mxu0 0
          %2060 = vmatprep.subr.bf16.mxu0 0
          %2061 = vmatpush1.bf16.msra.mxu0 0
          %2062 = vmatprep.subr.bf16.mxu0 0
          %2063 = vmatpush1.bf16.msra.mxu0 0
          %2064 = vmatprep.subr.bf16.mxu0 0
          %2065 = vmatpush1.bf16.msra.mxu0 0
          %2066 = vmatprep.subr.bf16.mxu0 %v2022
          %2067 = vmatpush1.bf16.msra.mxu0 %v2021
          %2068 = vmatprep.subr.bf16.mxu0 %v2012
          %2069 = vmatpush1.bf16.msra.mxu0 %v2011
          %2070 = vmatprep.subr.bf16.mxu0 0
          %2071 = vmatpush2.bf16.msra.mxu0 0
          %2072 = vmatprep.subr.bf16.mxu0 0
          %2073 = vmatpush2.bf16.msra.mxu0 0
          %2074 = vmatprep.subr.bf16.mxu0 0
          %2075 = vmatpush2.bf16.msra.mxu0 0
          %2076 = vmatprep.subr.bf16.mxu0 0
          %2077 = vmatpush2.bf16.msra.mxu0 0
          %2078 = vmatprep.subr.bf16.mxu0 0
          %2079 = vmatpush2.bf16.msra.mxu0 0
          %2080 = vmatprep.subr.bf16.mxu0 0
          %2081 = vmatpush2.bf16.msra.mxu0 0
          %2082 = vmatprep.subr.bf16.mxu0 0
          %2083 = vmatpush2.bf16.msra.mxu0 0
          %2084 = vmatprep.subr.bf16.mxu0 0
          %2085 = vmatpush2.bf16.msra.mxu0 0
          %2086 = vmatprep.mubr.bf16.mxu0 0
          %2087 = vmatmul.mubr.bf16.gmra.mxu0 %v2052
          %v2088 = vpop.f32.mrf.mxu0
          %v2089 = vadd.f32 %v1904, %v2088
          %v2090 = vpop.f32.mrf.mxu0
          %v2091 = vadd.f32 %v1908, %v2090
          %v2092 = vpop.f32.mrf.mxu0
          %v2093 = vpop.f32.mrf.mxu0
          %2094 = vdwg.mxu0
          %2095 = vmatprep.subr.bf16.mxu0 0
          %2096 = vmatpush1.bf16.msra.mxu0 0
          %2097 = vmatprep.subr.bf16.mxu0 0
          %2098 = vmatpush1.bf16.msra.mxu0 0
          %2099 = vmatprep.subr.bf16.mxu0 0
          %2100 = vmatpush1.bf16.msra.mxu0 0
          %2101 = vmatprep.subr.bf16.mxu0 0
          %2102 = vmatpush1.bf16.msra.mxu0 0
          %2103 = vmatprep.subr.bf16.mxu0 0
          %2104 = vmatpush1.bf16.msra.mxu0 0
          %2105 = vmatprep.subr.bf16.mxu0 0
          %2106 = vmatpush1.bf16.msra.mxu0 0
          %2107 = vmatprep.subr.bf16.mxu0 %v2024
          %2108 = vmatpush1.bf16.msra.mxu0 %v2023
          %2109 = vmatprep.subr.bf16.mxu0 %v2014
          %2110 = vmatpush1.bf16.msra.mxu0 %v2013
          %2111 = vmatprep.subr.bf16.mxu0 0
          %2112 = vmatpush2.bf16.msra.mxu0 0
          %2113 = vmatprep.subr.bf16.mxu0 0
          %2114 = vmatpush2.bf16.msra.mxu0 0
          %2115 = vmatprep.subr.bf16.mxu0 0
          %2116 = vmatpush2.bf16.msra.mxu0 0
          %2117 = vmatprep.subr.bf16.mxu0 0
          %2118 = vmatpush2.bf16.msra.mxu0 0
          %2119 = vmatprep.subr.bf16.mxu0 0
          %2120 = vmatpush2.bf16.msra.mxu0 0
          %2121 = vmatprep.subr.bf16.mxu0 0
          %2122 = vmatpush2.bf16.msra.mxu0 0
          %2123 = vmatprep.subr.bf16.mxu0 0
          %2124 = vmatpush2.bf16.msra.mxu0 0
          %2125 = vmatprep.subr.bf16.mxu0 0
          %2126 = vmatpush2.bf16.msra.mxu0 0
          %2127 = vmatprep.mubr.bf16.mxu0 0
          %2128 = vmatmul.mubr.bf16.gmra.mxu0 %v2052
          %v2129 = vpop.f32.mrf.mxu0
          %v2130 = vadd.f32 %v1912, %v2129
          %v2131 = vpop.f32.mrf.mxu0
          %v2132 = vadd.f32 %v1916, %v2131
          %v2133 = vpop.f32.mrf.mxu0
          %v2134 = vpop.f32.mrf.mxu0
          %2135 = vdwg.mxu0
          %2136 = vmatprep.subr.bf16.mxu0 0
          %2137 = vmatpush1.bf16.msra.mxu0 0
          %2138 = vmatprep.subr.bf16.mxu0 0
          %2139 = vmatpush1.bf16.msra.mxu0 0
          %2140 = vmatprep.subr.bf16.mxu0 0
          %2141 = vmatpush1.bf16.msra.mxu0 0
          %2142 = vmatprep.subr.bf16.mxu0 0
          %2143 = vmatpush1.bf16.msra.mxu0 0
          %2144 = vmatprep.subr.bf16.mxu0 0
          %2145 = vmatpush1.bf16.msra.mxu0 0
          %2146 = vmatprep.subr.bf16.mxu0 0
          %2147 = vmatpush1.bf16.msra.mxu0 0
          %2148 = vmatprep.subr.bf16.mxu0 %v2026
          %2149 = vmatpush1.bf16.msra.mxu0 %v2025
          %2150 = vmatprep.subr.bf16.mxu0 %v2016
          %2151 = vmatpush1.bf16.msra.mxu0 %v2015
          %2152 = vmatprep.subr.bf16.mxu0 0
          %2153 = vmatpush2.bf16.msra.mxu0 0
          %2154 = vmatprep.subr.bf16.mxu0 0
          %2155 = vmatpush2.bf16.msra.mxu0 0
          %2156 = vmatprep.subr.bf16.mxu0 0
          %2157 = vmatpush2.bf16.msra.mxu0 0
          %2158 = vmatprep.subr.bf16.mxu0 0
          %2159 = vmatpush2.bf16.msra.mxu0 0
          %2160 = vmatprep.subr.bf16.mxu0 0
          %2161 = vmatpush2.bf16.msra.mxu0 0
          %2162 = vmatprep.subr.bf16.mxu0 0
          %2163 = vmatpush2.bf16.msra.mxu0 0
          %2164 = vmatprep.subr.bf16.mxu0 0
          %2165 = vmatpush2.bf16.msra.mxu0 0
          %2166 = vmatprep.subr.bf16.mxu0 0
          %2167 = vmatpush2.bf16.msra.mxu0 0
          %2168 = vmatprep.mubr.bf16.mxu0 0
          %2169 = vmatmul.mubr.bf16.gmra.mxu0 %v2052
          %v2170 = vpop.f32.mrf.mxu0
          %v2171 = vadd.f32 %v1920, %v2170
          %v2172 = vpop.f32.mrf.mxu0
          %v2173 = vadd.f32 %v1924, %v2172
          %v2174 = vpop.f32.mrf.mxu0
          %v2175 = vpop.f32.mrf.mxu0
          %2176 = vdwg.mxu0
          %2177 = vmatprep.subr.bf16.mxu0 0
          %2178 = vmatpush1.bf16.msra.mxu0 0
          %2179 = vmatprep.subr.bf16.mxu0 0
          %2180 = vmatpush1.bf16.msra.mxu0 0
          %2181 = vmatprep.subr.bf16.mxu0 0
          %2182 = vmatpush1.bf16.msra.mxu0 0
          %2183 = vmatprep.subr.bf16.mxu0 0
          %2184 = vmatpush1.bf16.msra.mxu0 0
          %2185 = vmatprep.subr.bf16.mxu0 0
          %2186 = vmatpush1.bf16.msra.mxu0 0
          %2187 = vmatprep.subr.bf16.mxu0 0
          %2188 = vmatpush1.bf16.msra.mxu0 0
          %2189 = vmatprep.subr.bf16.mxu0 %v2028
          %2190 = vmatpush1.bf16.msra.mxu0 %v2027
          %2191 = vmatprep.subr.bf16.mxu0 %v2018
          %2192 = vmatpush1.bf16.msra.mxu0 %v2017
          %2193 = vmatprep.subr.bf16.mxu0 0
          %2194 = vmatpush2.bf16.msra.mxu0 0
          %2195 = vmatprep.subr.bf16.mxu0 0
          %2196 = vmatpush2.bf16.msra.mxu0 0
          %2197 = vmatprep.subr.bf16.mxu0 0
          %2198 = vmatpush2.bf16.msra.mxu0 0
          %2199 = vmatprep.subr.bf16.mxu0 0
          %2200 = vmatpush2.bf16.msra.mxu0 0
          %2201 = vmatprep.subr.bf16.mxu0 0
          %2202 = vmatpush2.bf16.msra.mxu0 0
          %2203 = vmatprep.subr.bf16.mxu0 0
          %2204 = vmatpush2.bf16.msra.mxu0 0
          %2205 = vmatprep.subr.bf16.mxu0 0
          %2206 = vmatpush2.bf16.msra.mxu0 0
          %2207 = vmatprep.subr.bf16.mxu0 0
          %2208 = vmatpush2.bf16.msra.mxu0 0
          %2209 = vmatprep.mubr.bf16.mxu0 0
          %2210 = vmatmul.mubr.bf16.gmra.mxu0 %v2052
          %v2211 = vpop.f32.mrf.mxu0
          %v2212 = vadd.f32 %v1928, %v2211
          %v2213 = vpop.f32.mrf.mxu0
          %v2214 = vadd.f32 %v1932, %v2213
          %v2215 = vpop.f32.mrf.mxu0
          %v2216 = vpop.f32.mrf.mxu0
          %2217 = vdwg.mxu0
          %2218 = vmatprep.subr.bf16.mxu0 0
          %2219 = vmatpush1.bf16.msra.mxu0 0
          %2220 = vmatprep.subr.bf16.mxu0 0
          %2221 = vmatpush1.bf16.msra.mxu0 0
          %2222 = vmatprep.subr.bf16.mxu0 0
          %2223 = vmatpush1.bf16.msra.mxu0 0
          %2224 = vmatprep.subr.bf16.mxu0 0
          %2225 = vmatpush1.bf16.msra.mxu0 0
          %2226 = vmatprep.subr.bf16.mxu0 0
          %2227 = vmatpush1.bf16.msra.mxu0 0
          %2228 = vmatprep.subr.bf16.mxu0 0
          %2229 = vmatpush1.bf16.msra.mxu0 0
          %2230 = vmatprep.subr.bf16.mxu0 %v2030
          %2231 = vmatpush1.bf16.msra.mxu0 %v2029
          %2232 = vmatprep.subr.bf16.mxu0 %v2020
          %2233 = vmatpush1.bf16.msra.mxu0 %v2019
          %2234 = vmatprep.subr.bf16.mxu0 0
          %2235 = vmatpush2.bf16.msra.mxu0 0
          %2236 = vmatprep.subr.bf16.mxu0 0
          %2237 = vmatpush2.bf16.msra.mxu0 0
          %2238 = vmatprep.subr.bf16.mxu0 0
          %2239 = vmatpush2.bf16.msra.mxu0 0
          %2240 = vmatprep.subr.bf16.mxu0 0
          %2241 = vmatpush2.bf16.msra.mxu0 0
          %2242 = vmatprep.subr.bf16.mxu0 0
          %2243 = vmatpush2.bf16.msra.mxu0 0
          %2244 = vmatprep.subr.bf16.mxu0 0
          %2245 = vmatpush2.bf16.msra.mxu0 0
          %2246 = vmatprep.subr.bf16.mxu0 0
          %2247 = vmatpush2.bf16.msra.mxu0 0
          %2248 = vmatprep.subr.bf16.mxu0 0
          %2249 = vmatpush2.bf16.msra.mxu0 0
          %2250 = vmatprep.mubr.bf16.mxu0 0
          %2251 = vmatmul.mubr.bf16.gmra.mxu0 %v2052
          %v2252 = vpop.f32.mrf.mxu0
          %v2253 = vadd.f32 %v1936, %v2252
          %v2254 = vpop.f32.mrf.mxu0
          %v2255 = vadd.f32 %v1940, %v2254
          %v2256 = vpop.f32.mrf.mxu0
          %v2257 = vpop.f32.mrf.mxu0
          %2258 = vdwg.mxu0
          %v2259 = vxor.u32 %v2089, 2147483648
          %v2260 = vxor.u32 %v2091, 2147483648
          %v2261 = vxor.u32 %v2130, 2147483648
          %v2262 = vxor.u32 %v2132, 2147483648
          %v2263 = vxor.u32 %v2171, 2147483648
          %v2264 = vxor.u32 %v2173, 2147483648
          %v2265 = vxor.u32 %v2212, 2147483648
          %v2266 = vxor.u32 %v2214, 2147483648
          %v2267 = vxor.u32 %v2253, 2147483648
          %v2268 = vxor.u32 %v2255, 2147483648
          %v2269 = vmul.f32 %v2259, 1.442695
          %v2270 = vpow.pop %v2269
          %v2271 = vmul.f32 %v2260, 1.442695
          %v2272 = vpow.pop %v2271
          %v2273 = vmul.f32 %v2261, 1.442695
          %v2274 = vpow.pop %v2273
          %v2275 = vmul.f32 %v2262, 1.442695
          %v2276 = vpow.pop %v2275
          %v2277 = vmul.f32 %v2263, 1.442695
          %v2278 = vpow.pop %v2277
          %v2279 = vmul.f32 %v2264, 1.442695
          %v2280 = vpow.pop %v2279
          %v2281 = vmul.f32 %v2265, 1.442695
          %v2282 = vpow.pop %v2281
          %v2283 = vmul.f32 %v2266, 1.442695
          %v2284 = vpow.pop %v2283
          %v2285 = vmul.f32 %v2267, 1.442695
          %v2286 = vpow.pop %v2285
          %v2287 = vmul.f32 %v2268, 1.442695
          %v2288 = vpow.pop %v2287
          %v2289 = vadd.f32 %v2270, 1.0
          %v2290 = vadd.f32 %v2272, 1.0
          %v2291 = vadd.f32 %v2274, 1.0
          %v2292 = vadd.f32 %v2276, 1.0
          %v2293 = vadd.f32 %v2278, 1.0
          %v2294 = vadd.f32 %v2280, 1.0
          %v2295 = vadd.f32 %v2282, 1.0
          %v2296 = vadd.f32 %v2284, 1.0
          %v2297 = vadd.f32 %v2286, 1.0
          %v2298 = vadd.f32 %v2288, 1.0
          %v2299 = vrcp.pop %v2289
          %v2300 = vmul.f32 1.0, %v2299
          %v2301 = vrcp.pop %v2290
          %v2302 = vmul.f32 1.0, %v2301
          %v2303 = vrcp.pop %v2291
          %v2304 = vmul.f32 1.0, %v2303
          %v2305 = vrcp.pop %v2292
          %v2306 = vmul.f32 1.0, %v2305
          %v2307 = vrcp.pop %v2293
          %v2308 = vmul.f32 1.0, %v2307
          %v2309 = vrcp.pop %v2294
          %v2310 = vmul.f32 1.0, %v2309
          %v2311 = vrcp.pop %v2295
          %v2312 = vmul.f32 1.0, %v2311
          %v2313 = vrcp.pop %v2296
          %v2314 = vmul.f32 1.0, %v2313
          %v2315 = vrcp.pop %v2297
          %v2316 = vmul.f32 1.0, %v2315
          %v2317 = vrcp.pop %v2298
          %v2318 = vmul.f32 1.0, %v2317
          %v2319 = vmul.f32 %v2089, %v2300
          %v2320 = vmul.f32 %v2091, %v2302
          %v2321 = vmul.f32 %v2130, %v2304
          %v2322 = vmul.f32 %v2132, %v2306
          %v2323 = vmul.f32 %v2171, %v2308
          %v2324 = vmul.f32 %v2173, %v2310
          %v2325 = vmul.f32 %v2212, %v2312
          %v2326 = vmul.f32 %v2214, %v2314
          %v2327 = vmul.f32 %v2253, %v2316
          %v2328 = vmul.f32 %v2255, %v2318
          %v2329 = vpack.c.bf16 %v2319, %v2319
          %v2330 = vpack.c.bf16 %v2320, %v2320
          %v2331 = vpack.c.bf16 %v2321, %v2321
          %v2332 = vpack.c.bf16 %v2322, %v2322
          %v2333 = vpack.c.bf16 %v2323, %v2323
          %v2334 = vpack.c.bf16 %v2324, %v2324
          %v2335 = vpack.c.bf16 %v2325, %v2325
          %v2336 = vpack.c.bf16 %v2326, %v2326
          %v2337 = vpack.c.bf16 %v2327, %v2327
          %v2338 = vpack.c.bf16 %v2328, %v2328
          %v2349 = vcombine.low %v2329, %v2330
          %v2350 = vcombine.low %v2331, %v2332
          %v2351 = vcombine.low %v2333, %v2334
          %v2352 = vcombine.low %v2335, %v2336
          %v2354 = vunpack.c.l.s4 1966171168
          %v2355 = vunpack.c.0.s8 %v2354
          %v2356 = vlaneseq
          %v2357 = vshrl.u32 %v2356, 7
          %v2358 = vsub.s32 %v2355, %v2357
          %v2359 = vrot.slane %v2349, %v2358
          %v2361 = vunpack.c.l.s4 1966171168
          %v2362 = vunpack.c.0.s8 %v2361
          %v2363 = vlaneseq
          %v2364 = vshrl.u32 %v2363, 7
          %v2365 = vsub.s32 %v2362, %v2364
          %v2366 = vrot.slane %v2350, %v2365
          %v2368 = vunpack.c.l.s4 1966171168
          %v2369 = vunpack.c.0.s8 %v2368
          %v2370 = vlaneseq
          %v2371 = vshrl.u32 %v2370, 7
          %v2372 = vsub.s32 %v2369, %v2371
          %v2373 = vrot.slane %v2351, %v2372
          %v2375 = vunpack.c.l.s4 1966171168
          %v2376 = vunpack.c.0.s8 %v2375
          %v2377 = vlaneseq
          %v2378 = vshrl.u32 %v2377, 7
          %v2379 = vsub.s32 %v2376, %v2378
          %v2380 = vrot.slane %v2352, %v2379
          %v2381 = vcombine.low %v2359, %v2366
          %v2382 = vcombine.low %v2373, %v2380
          %v2384 = vunpack.c.l.s4 1966171168
          %v2385 = vunpack.c.0.s8 %v2384
          %v2386 = vlaneseq
          %v2387 = vshrl.u32 %v2386, 7
          %v2388 = vsub.s32 %v2385, %v2387
          %v2389 = vrot.slane %v2381, %v2388
          %v2391 = vunpack.c.l.s4 1966171168
          %v2392 = vunpack.c.0.s8 %v2391
          %v2393 = vlaneseq
          %v2394 = vshrl.u32 %v2393, 7
          %v2395 = vsub.s32 %v2392, %v2394
          %v2396 = vrot.slane %v2382, %v2395
          %v2397 = vcombine.low %v2389, %v2396
          %v2398 = vcombine.low %v2337, %v2338
          %v2400 = vunpack.c.l.s4 1966171168
          %v2401 = vunpack.c.0.s8 %v2400
          %v2402 = vlaneseq
          %v2403 = vshrl.u32 %v2402, 7
          %v2404 = vsub.s32 %v2401, %v2403
          %v2405 = vrot.slane %v2398, %v2404
          %v2407 = vunpack.c.l.s4 1966171168
          %v2408 = vunpack.c.0.s8 %v2407
          %v2409 = vlaneseq
          %v2410 = vshrl.u32 %v2409, 7
          %v2411 = vsub.s32 %v2408, %v2410
          %v2412 = vrot.slane %v2405, %v2411
          %2415 = vst [vmem:[#allocation3] sm:$0xff] %v2397
          %2416 = vst [vmem:[#allocation3 + $0x8] sm:$0x3] %v2412
          %2417 = vst [vmem:[#allocation4] sm:$0x3] 0.0
        $region116: #{swav_forward.1} parent=67 // pred_fallthru
          _
        %v2418 = vld [vmem:[#allocation3] sm:$0xff]
        %v2419 = vld [vmem:[#allocation3 + $0x8] sm:$0x3]
        %v2420 = vld [vmem:[%s540] sm:$0xff]
        %v2421 = vld [vmem:[%s540 + $0x8] sm:$0xff]
        %v2422 = vld [vmem:[%s540 + $0x10] sm:$0xff]
        %v2423 = vld [vmem:[%s540 + $0x18] sm:$0xff]
        %v2424 = vld [vmem:[%s540 + $0x20] sm:$0xff]
        %v2425 = vld [vmem:[%s540 + $0x28] sm:$0xff]
        %v2426 = vld [vmem:[%s540 + $0x30] sm:$0xff]
        %v2427 = vld [vmem:[%s540 + $0x38] sm:$0xff]
        %v2428 = vld [vmem:[%s540 + $0x40] sm:$0xff]
        %v2429 = vld [vmem:[%s540 + $0x48] sm:$0xff]
        %v2430 = vld [vmem:[%s540 + $0x50] sm:$0xff]
        %v2431 = vld [vmem:[%s540 + $0x58] sm:$0xff]
        %v2432 = vld [vmem:[%s540 + $0x60] sm:$0xff]
        %v2433 = vld [vmem:[%s540 + $0x68] sm:$0xff]
        %v2434 = vld [vmem:[%s540 + $0x70] sm:$0xff]
        %v2435 = vld [vmem:[%s540 + $0x78] sm:$0xff]
        %v2436 = vld [vmem:[%s540 + $0x80] sm:$0xff]
        %v2437 = vld [vmem:[%s540 + $0x88] sm:$0xff]
        %v2438 = vld [vmem:[%s540 + $0x90] sm:$0xff]
        %v2439 = vld [vmem:[%s540 + $0x98] sm:$0xff]
        %v2440 = vld [vmem:[%s540 + $0xa0] sm:$0xff]
        %v2441 = vld [vmem:[%s540 + $0xa8] sm:$0xff]
        %v2442 = vld [vmem:[%s540 + $0xb0] sm:$0xff]
        %v2443 = vld [vmem:[%s540 + $0xb8] sm:$0xff]
        %v2444 = vld [vmem:[%s540 + $0xc0] sm:$0xff]
        %v2445 = vld [vmem:[%s540 + $0xc8] sm:$0xff]
        %v2446 = vld [vmem:[%s540 + $0xd0] sm:$0xff]
        %v2447 = vld [vmem:[%s540 + $0xd8] sm:$0xff]
        %v2448 = vld [vmem:[%s540 + $0xe0] sm:$0xff]
        %v2449 = vld [vmem:[%s540 + $0xe8] sm:$0xff]
        %v2450 = vld [vmem:[%s540 + $0xf0] sm:$0xff]
        %v2451 = vld [vmem:[%s540 + $0xf8] sm:$0xff]
        %v2452 = vld [vmem:[%s540 + $0x100] sm:$0xff]
        %v2453 = vld [vmem:[%s540 + $0x108] sm:$0xff]
        %v2454 = vld [vmem:[%s540 + $0x110] sm:$0xff]
        %v2455 = vld [vmem:[%s540 + $0x118] sm:$0xff]
        %v2456 = vld [vmem:[%s540 + $0x120] sm:$0xff]
        %v2457 = vld [vmem:[%s540 + $0x128] sm:$0xff]
        %v2458 = vld [vmem:[%s540 + $0x130] sm:$0xff]
        %v2459 = vld [vmem:[%s540 + $0x138] sm:$0xff]
        %v2460 = vld [vmem:[%s540 + $0x140] sm:$0xff]
        %v2461 = vld [vmem:[%s540 + $0x148] sm:$0xff]
        %v2462 = vld [vmem:[%s540 + $0x150] sm:$0xff]
        %v2463 = vld [vmem:[%s540 + $0x158] sm:$0xff]
        %v2464 = vld [vmem:[%s540 + $0x160] sm:$0xff]
        %v2465 = vld [vmem:[%s540 + $0x168] sm:$0xff]
        %v2466 = vld [vmem:[%s540 + $0x170] sm:$0xff]
        %v2467 = vld [vmem:[%s540 + $0x178] sm:$0xff]
        %v2468 = vld [vmem:[%s540 + $0x180] sm:$0xff]
        %v2469 = vld [vmem:[%s540 + $0x188] sm:$0xff]
        %v2470 = vld [vmem:[%s540 + $0x190] sm:$0xff]
        %v2471 = vld [vmem:[%s540 + $0x198] sm:$0xff]
        %v2472 = vld [vmem:[%s540 + $0x1a0] sm:$0xff]
        %v2473 = vld [vmem:[%s540 + $0x1a8] sm:$0xff]
        %v2474 = vld [vmem:[%s540 + $0x1b0] sm:$0xff]
        %v2475 = vld [vmem:[%s540 + $0x1b8] sm:$0xff]
        %v2476 = vld [vmem:[%s540 + $0x1c0] sm:$0xff]
        %v2477 = vld [vmem:[%s540 + $0x1c8] sm:$0xff]
        %v2478 = vld [vmem:[%s540 + $0x1d0] sm:$0xff]
        %v2479 = vld [vmem:[%s540 + $0x1d8] sm:$0xff]
        %v2480 = vld [vmem:[%s540 + $0x1e0] sm:$0xff]
        %v2481 = vld [vmem:[%s540 + $0x1e8] sm:$0xff]
        %v2482 = vld [vmem:[%s540 + $0x1f0] sm:$0xff]
        %v2483 = vld [vmem:[%s540 + $0x1f8] sm:$0xff]
        %v2484 = vld [vmem:[%s540 + $0x200] sm:$0xff]
        %v2485 = vld [vmem:[%s540 + $0x208] sm:$0xff]
        %v2486 = vld [vmem:[%s540 + $0x210] sm:$0xff]
        %v2487 = vld [vmem:[%s540 + $0x218] sm:$0xff]
        %v2488 = vld [vmem:[%s540 + $0x220] sm:$0xff]
        %v2489 = vld [vmem:[%s540 + $0x228] sm:$0xff]
        %v2490 = vld [vmem:[%s540 + $0x230] sm:$0xff]
        %v2491 = vld [vmem:[%s540 + $0x238] sm:$0xff]
        %v2492 = vld [vmem:[%s540 + $0x240] sm:$0xff]
        %v2493 = vld [vmem:[%s540 + $0x248] sm:$0xff]
        %v2494 = vld [vmem:[%s540 + $0x250] sm:$0xff]
        %v2495 = vld [vmem:[%s540 + $0x258] sm:$0xff]
        %v2496 = vld [vmem:[%s540 + $0x260] sm:$0xff]
        %v2497 = vld [vmem:[%s540 + $0x268] sm:$0xff]
        %v2498 = vld [vmem:[%s540 + $0x270] sm:$0xff]
        %v2499 = vld [vmem:[%s540 + $0x278] sm:$0xff]
        %v2500 = vld [vmem:[%s540 + $0x280] sm:$0xff]
        %v2501 = vld [vmem:[%s540 + $0x288] sm:$0xff]
        %v2502 = vld [vmem:[%s540 + $0x290] sm:$0xff]
        %v2503 = vld [vmem:[%s540 + $0x298] sm:$0xff]
        %v2504 = vld [vmem:[%s540 + $0x2a0] sm:$0xff]
        %v2505 = vld [vmem:[%s540 + $0x2a8] sm:$0xff]
        %v2506 = vld [vmem:[%s540 + $0x2b0] sm:$0xff]
        %v2507 = vld [vmem:[%s540 + $0x2b8] sm:$0xff]
        %v2508 = vld [vmem:[%s540 + $0x2c0] sm:$0xff]
        %v2509 = vld [vmem:[%s540 + $0x2c8] sm:$0xff]
        %v2510 = vld [vmem:[%s540 + $0x2d0] sm:$0xff]
        %v2511 = vld [vmem:[%s540 + $0x2d8] sm:$0xff]
        %v2512 = vld [vmem:[%s540 + $0x2e0] sm:$0xff]
        %v2513 = vld [vmem:[%s540 + $0x2e8] sm:$0xff]
        %v2514 = vld [vmem:[%s540 + $0x2f0] sm:$0xff]
        %v2515 = vld [vmem:[%s540 + $0x2f8] sm:$0xff]
        %v2516 = vld [vmem:[%s540 + $0x300] sm:$0xff]
        %v2517 = vld [vmem:[%s540 + $0x308] sm:$0xff]
        %v2518 = vld [vmem:[%s540 + $0x310] sm:$0xff]
        %v2519 = vld [vmem:[%s540 + $0x318] sm:$0xff]
        %v2520 = vld [vmem:[%s540 + $0x320] sm:$0xff]
        %v2521 = vld [vmem:[%s540 + $0x328] sm:$0xff]
        %v2522 = vld [vmem:[%s540 + $0x330] sm:$0xff]
        %v2523 = vld [vmem:[%s540 + $0x338] sm:$0xff]
        %v2524 = vld [vmem:[%s540 + $0x340] sm:$0xff]
        %v2525 = vld [vmem:[%s540 + $0x348] sm:$0xff]
        %v2526 = vld [vmem:[%s540 + $0x350] sm:$0xff]
        %v2527 = vld [vmem:[%s540 + $0x358] sm:$0xff]
        %v2528 = vld [vmem:[%s540 + $0x360] sm:$0xff]
        %v2529 = vld [vmem:[%s540 + $0x368] sm:$0xff]
        %v2530 = vld [vmem:[%s540 + $0x370] sm:$0xff]
        %v2531 = vld [vmem:[%s540 + $0x378] sm:$0xff]
        %v2532 = vld [vmem:[%s540 + $0x380] sm:$0xff]
        %v2533 = vld [vmem:[%s540 + $0x388] sm:$0xff]
        %v2534 = vld [vmem:[%s540 + $0x390] sm:$0xff]
        %v2535 = vld [vmem:[%s540 + $0x398] sm:$0xff]
        %v2536 = vld [vmem:[%s540 + $0x3a0] sm:$0xff]
        %v2537 = vld [vmem:[%s540 + $0x3a8] sm:$0xff]
        %v2538 = vld [vmem:[%s540 + $0x3b0] sm:$0xff]
        %v2539 = vld [vmem:[%s540 + $0x3b8] sm:$0xff]
        %v2540 = vld [vmem:[%s540 + $0x3c0] sm:$0xff]
        %v2541 = vld [vmem:[%s540 + $0x3c8] sm:$0xff]
        %v2542 = vld [vmem:[%s540 + $0x3d0] sm:$0xff]
        %v2543 = vld [vmem:[%s540 + $0x3d8] sm:$0xff]
        %v2544 = vld [vmem:[%s540 + $0x3e0] sm:$0xff]
        %v2545 = vld [vmem:[%s540 + $0x3e8] sm:$0xff]
        %v2546 = vld [vmem:[%s540 + $0x3f0] sm:$0xff]
        %v2547 = vld [vmem:[%s540 + $0x3f8] sm:$0xff]
        %v2548 = vld [vmem:[%s540 + $0x400] sm:$0xff]
        %v2549 = vld [vmem:[%s540 + $0x408] sm:$0xff]
        %v2550 = vld [vmem:[%s540 + $0x410] sm:$0xff]
        %v2551 = vld [vmem:[%s540 + $0x418] sm:$0xff]
        %v2552 = vld [vmem:[%s540 + $0x420] sm:$0xff]
        %v2553 = vld [vmem:[%s540 + $0x428] sm:$0xff]
        %v2554 = vld [vmem:[%s540 + $0x430] sm:$0xff]
        %v2555 = vld [vmem:[%s540 + $0x438] sm:$0xff]
        %v2556 = vld [vmem:[%s540 + $0x440] sm:$0xff]
        %v2557 = vld [vmem:[%s540 + $0x448] sm:$0xff]
        %v2558 = vld [vmem:[%s540 + $0x450] sm:$0xff]
        %v2559 = vld [vmem:[%s540 + $0x458] sm:$0xff]
        %v2560 = vld [vmem:[%s540 + $0x460] sm:$0xff]
        %v2561 = vld [vmem:[%s540 + $0x468] sm:$0xff]
        %v2562 = vld [vmem:[%s540 + $0x470] sm:$0xff]
        %v2563 = vld [vmem:[%s540 + $0x478] sm:$0xff]
        %v2564 = vld [vmem:[%s540 + $0x480] sm:$0xff]
        %v2565 = vld [vmem:[%s540 + $0x488] sm:$0xff]
        %v2566 = vld [vmem:[%s540 + $0x490] sm:$0xff]
        %v2567 = vld [vmem:[%s540 + $0x498] sm:$0xff]
        %v2568 = vld [vmem:[%s540 + $0x4a0] sm:$0xff]
        %v2569 = vld [vmem:[%s540 + $0x4a8] sm:$0xff]
        %v2570 = vld [vmem:[%s540 + $0x4b0] sm:$0xff]
        %v2571 = vld [vmem:[%s540 + $0x4b8] sm:$0xff]
        %v2572 = vld [vmem:[%s540 + $0x4c0] sm:$0xff]
        %v2573 = vld [vmem:[%s540 + $0x4c8] sm:$0xff]
        %v2574 = vld [vmem:[%s540 + $0x4d0] sm:$0xff]
        %v2575 = vld [vmem:[%s540 + $0x4d8] sm:$0xff]
        %v2576 = vld [vmem:[%s540 + $0x4e0] sm:$0xff]
        %v2577 = vld [vmem:[%s540 + $0x4e8] sm:$0xff]
        %v2578 = vld [vmem:[%s540 + $0x4f0] sm:$0xff]
        %v2579 = vld [vmem:[%s540 + $0x4f8] sm:$0xff]
        %v2580 = vld [vmem:[%s549] sm:$0x3]
        %v2582 = vlaneseq
        %v2583 = vshrl.u32 %v2582, 7
        %v2584 = vsub.s32 0, %v2583
        %v2585 = vrot.slane %v2580, %v2584
        %v2586 = vlaneseq
        %v2587 = vshrl.u32 %v2586, 7
        %v2588 = vsub.s32 1, %v2587
        %v2589 = vrot.slane %v2580, %v2588
        %v2594 = vcombine.high %v2418, %v2418
        %v2596 = vunpack.c.l.s4 1966171168
        %v2597 = vunpack.c.0.s8 %v2596
        %v2598 = vlaneseq
        %v2599 = vshrl.u32 %v2598, 7
        %v2600 = vsub.s32 %v2597, %v2599
        %v2601 = vrot.slane %v2418, %v2600
        %v2603 = vunpack.c.l.s4 1966171168
        %v2604 = vunpack.c.0.s8 %v2603
        %v2605 = vlaneseq
        %v2606 = vshrl.u32 %v2605, 7
        %v2607 = vsub.s32 %v2604, %v2606
        %v2608 = vrot.slane %v2594, %v2607
        %v2609 = vcombine.high %v2601, %v2601
        %v2610 = vcombine.high %v2608, %v2608
        %v2612 = vunpack.c.l.s4 1966171168
        %v2613 = vunpack.c.0.s8 %v2612
        %v2614 = vlaneseq
        %v2615 = vshrl.u32 %v2614, 7
        %v2616 = vsub.s32 %v2613, %v2615
        %v2617 = vrot.slane %v2601, %v2616
        %v2619 = vunpack.c.l.s4 1966171168
        %v2620 = vunpack.c.0.s8 %v2619
        %v2621 = vlaneseq
        %v2622 = vshrl.u32 %v2621, 7
        %v2623 = vsub.s32 %v2620, %v2622
        %v2624 = vrot.slane %v2608, %v2623
        %v2626 = vunpack.c.l.s4 1966171168
        %v2627 = vunpack.c.0.s8 %v2626
        %v2628 = vlaneseq
        %v2629 = vshrl.u32 %v2628, 7
        %v2630 = vsub.s32 %v2627, %v2629
        %v2631 = vrot.slane %v2609, %v2630
        %v2633 = vunpack.c.l.s4 1966171168
        %v2634 = vunpack.c.0.s8 %v2633
        %v2635 = vlaneseq
        %v2636 = vshrl.u32 %v2635, 7
        %v2637 = vsub.s32 %v2634, %v2636
        %v2638 = vrot.slane %v2610, %v2637
        %v2639 = vcombine.high %v2617, %v2617
        %v2640 = vcombine.high %v2624, %v2624
        %v2641 = vcombine.high %v2631, %v2631
        %v2642 = vcombine.high %v2638, %v2638
        %v2644 = vunpack.c.l.s4 1966171168
        %v2645 = vunpack.c.0.s8 %v2644
        %v2646 = vlaneseq
        %v2647 = vshrl.u32 %v2646, 7
        %v2648 = vsub.s32 %v2645, %v2647
        %v2649 = vrot.slane %v2419, %v2648
        %v2650 = vcombine.high %v2649, %v2649
        %v2652 = vunpack.c.l.s4 1966171168
        %v2653 = vunpack.c.0.s8 %v2652
        %v2654 = vlaneseq
        %v2655 = vshrl.u32 %v2654, 7
        %v2656 = vsub.s32 %v2653, %v2655
        %v2657 = vrot.slane %v2649, %v2656
        %v2659 = vunpack.c.l.s4 1966171168
        %v2660 = vunpack.c.0.s8 %v2659
        %v2661 = vlaneseq
        %v2662 = vshrl.u32 %v2661, 7
        %v2663 = vsub.s32 %v2660, %v2662
        %v2664 = vrot.slane %v2650, %v2663
        %v2835 = vunpack.c.l.b16 %v2420
        %v2836 = vunpack.c.h.b16 %v2420
        %v2837 = vunpack.c.l.b16 %v2421
        %v2838 = vunpack.c.h.b16 %v2421
        %v2839 = vunpack.c.l.b16 %v2422
        %v2840 = vunpack.c.h.b16 %v2422
        %v2841 = vunpack.c.l.b16 %v2423
        %v2842 = vunpack.c.h.b16 %v2423
        %v2843 = vunpack.c.l.b16 %v2424
        %v2844 = vunpack.c.h.b16 %v2424
        %v2845 = vunpack.c.l.b16 %v2425
        %v2846 = vunpack.c.h.b16 %v2425
        %v2847 = vunpack.c.l.b16 %v2426
        %v2848 = vunpack.c.h.b16 %v2426
        %v2849 = vunpack.c.l.b16 %v2427
        %v2850 = vunpack.c.h.b16 %v2427
        %v2851 = vunpack.c.l.b16 %v2428
        %v2852 = vunpack.c.h.b16 %v2428
        %v2853 = vunpack.c.l.b16 %v2429
        %v2854 = vunpack.c.h.b16 %v2429
        %v2855 = vunpack.c.l.b16 %v2430
        %v2856 = vunpack.c.h.b16 %v2430
        %v2857 = vunpack.c.l.b16 %v2431
        %v2858 = vunpack.c.h.b16 %v2431
        %v2859 = vunpack.c.l.b16 %v2432
        %v2860 = vunpack.c.h.b16 %v2432
        %v2861 = vunpack.c.l.b16 %v2433
        %v2862 = vunpack.c.h.b16 %v2433
        %v2863 = vunpack.c.l.b16 %v2434
        %v2864 = vunpack.c.h.b16 %v2434
        %v2865 = vunpack.c.l.b16 %v2435
        %v2866 = vunpack.c.h.b16 %v2435
        %v2867 = vunpack.c.l.b16 %v2436
        %v2868 = vunpack.c.h.b16 %v2436
        %v2869 = vunpack.c.l.b16 %v2437
        %v2870 = vunpack.c.h.b16 %v2437
        %v2871 = vunpack.c.l.b16 %v2438
        %v2872 = vunpack.c.h.b16 %v2438
        %v2873 = vunpack.c.l.b16 %v2439
        %v2874 = vunpack.c.h.b16 %v2439
        %v2875 = vunpack.c.l.b16 %v2440
        %v2876 = vunpack.c.h.b16 %v2440
        %v2877 = vunpack.c.l.b16 %v2441
        %v2878 = vunpack.c.h.b16 %v2441
        %v2879 = vunpack.c.l.b16 %v2442
        %v2880 = vunpack.c.h.b16 %v2442
        %v2881 = vunpack.c.l.b16 %v2443
        %v2882 = vunpack.c.h.b16 %v2443
        %v2883 = vunpack.c.l.b16 %v2444
        %v2884 = vunpack.c.h.b16 %v2444
        %v2885 = vunpack.c.l.b16 %v2445
        %v2886 = vunpack.c.h.b16 %v2445
        %v2887 = vunpack.c.l.b16 %v2446
        %v2888 = vunpack.c.h.b16 %v2446
        %v2889 = vunpack.c.l.b16 %v2447
        %v2890 = vunpack.c.h.b16 %v2447
        %v2891 = vunpack.c.l.b16 %v2448
        %v2892 = vunpack.c.h.b16 %v2448
        %v2893 = vunpack.c.l.b16 %v2449
        %v2894 = vunpack.c.h.b16 %v2449
        %v2895 = vunpack.c.l.b16 %v2450
        %v2896 = vunpack.c.h.b16 %v2450
        %v2897 = vunpack.c.l.b16 %v2451
        %v2898 = vunpack.c.h.b16 %v2451
        %v2899 = vunpack.c.l.b16 %v2452
        %v2900 = vunpack.c.h.b16 %v2452
        %v2901 = vunpack.c.l.b16 %v2453
        %v2902 = vunpack.c.h.b16 %v2453
        %v2903 = vunpack.c.l.b16 %v2454
        %v2904 = vunpack.c.h.b16 %v2454
        %v2905 = vunpack.c.l.b16 %v2455
        %v2906 = vunpack.c.h.b16 %v2455
        %v2907 = vunpack.c.l.b16 %v2456
        %v2908 = vunpack.c.h.b16 %v2456
        %v2909 = vunpack.c.l.b16 %v2457
        %v2910 = vunpack.c.h.b16 %v2457
        %v2911 = vunpack.c.l.b16 %v2458
        %v2912 = vunpack.c.h.b16 %v2458
        %v2913 = vunpack.c.l.b16 %v2459
        %v2914 = vunpack.c.h.b16 %v2459
        %v2915 = vunpack.c.l.b16 %v2460
        %v2916 = vunpack.c.h.b16 %v2460
        %v2917 = vunpack.c.l.b16 %v2461
        %v2918 = vunpack.c.h.b16 %v2461
        %v2919 = vunpack.c.l.b16 %v2462
        %v2920 = vunpack.c.h.b16 %v2462
        %v2921 = vunpack.c.l.b16 %v2463
        %v2922 = vunpack.c.h.b16 %v2463
        %v2923 = vunpack.c.l.b16 %v2464
        %v2924 = vunpack.c.h.b16 %v2464
        %v2925 = vunpack.c.l.b16 %v2465
        %v2926 = vunpack.c.h.b16 %v2465
        %v2927 = vunpack.c.l.b16 %v2466
        %v2928 = vunpack.c.h.b16 %v2466
        %v2929 = vunpack.c.l.b16 %v2467
        %v2930 = vunpack.c.h.b16 %v2467
        %v2931 = vunpack.c.l.b16 %v2468
        %v2932 = vunpack.c.h.b16 %v2468
        %v2933 = vunpack.c.l.b16 %v2469
        %v2934 = vunpack.c.h.b16 %v2469
        %v2935 = vunpack.c.l.b16 %v2470
        %v2936 = vunpack.c.h.b16 %v2470
        %v2937 = vunpack.c.l.b16 %v2471
        %v2938 = vunpack.c.h.b16 %v2471
        %v2939 = vunpack.c.l.b16 %v2472
        %v2940 = vunpack.c.h.b16 %v2472
        %v2941 = vunpack.c.l.b16 %v2473
        %v2942 = vunpack.c.h.b16 %v2473
        %v2943 = vunpack.c.l.b16 %v2474
        %v2944 = vunpack.c.h.b16 %v2474
        %v2945 = vunpack.c.l.b16 %v2475
        %v2946 = vunpack.c.h.b16 %v2475
        %v2947 = vunpack.c.l.b16 %v2476
        %v2948 = vunpack.c.h.b16 %v2476
        %v2949 = vunpack.c.l.b16 %v2477
        %v2950 = vunpack.c.h.b16 %v2477
        %v2951 = vunpack.c.l.b16 %v2478
        %v2952 = vunpack.c.h.b16 %v2478
        %v2953 = vunpack.c.l.b16 %v2479
        %v2954 = vunpack.c.h.b16 %v2479
        %v2955 = vunpack.c.l.b16 %v2480
        %v2956 = vunpack.c.h.b16 %v2480
        %v2957 = vunpack.c.l.b16 %v2481
        %v2958 = vunpack.c.h.b16 %v2481
        %v2959 = vunpack.c.l.b16 %v2482
        %v2960 = vunpack.c.h.b16 %v2482
        %v2961 = vunpack.c.l.b16 %v2483
        %v2962 = vunpack.c.h.b16 %v2483
        %v2963 = vunpack.c.l.b16 %v2484
        %v2964 = vunpack.c.h.b16 %v2484
        %v2965 = vunpack.c.l.b16 %v2485
        %v2966 = vunpack.c.h.b16 %v2485
        %v2967 = vunpack.c.l.b16 %v2486
        %v2968 = vunpack.c.h.b16 %v2486
        %v2969 = vunpack.c.l.b16 %v2487
        %v2970 = vunpack.c.h.b16 %v2487
        %v2971 = vunpack.c.l.b16 %v2488
        %v2972 = vunpack.c.h.b16 %v2488
        %v2973 = vunpack.c.l.b16 %v2489
        %v2974 = vunpack.c.h.b16 %v2489
        %v2975 = vunpack.c.l.b16 %v2490
        %v2976 = vunpack.c.h.b16 %v2490
        %v2977 = vunpack.c.l.b16 %v2491
        %v2978 = vunpack.c.h.b16 %v2491
        %v2979 = vunpack.c.l.b16 %v2492
        %v2980 = vunpack.c.h.b16 %v2492
        %v2981 = vunpack.c.l.b16 %v2493
        %v2982 = vunpack.c.h.b16 %v2493
        %v2983 = vunpack.c.l.b16 %v2494
        %v2984 = vunpack.c.h.b16 %v2494
        %v2985 = vunpack.c.l.b16 %v2495
        %v2986 = vunpack.c.h.b16 %v2495
        %v2987 = vunpack.c.l.b16 %v2496
        %v2988 = vunpack.c.h.b16 %v2496
        %v2989 = vunpack.c.l.b16 %v2497
        %v2990 = vunpack.c.h.b16 %v2497
        %v2991 = vunpack.c.l.b16 %v2498
        %v2992 = vunpack.c.h.b16 %v2498
        %v2993 = vunpack.c.l.b16 %v2499
        %v2994 = vunpack.c.h.b16 %v2499
        %v2995 = vunpack.c.l.b16 %v2500
        %v2996 = vunpack.c.h.b16 %v2500
        %v2997 = vunpack.c.l.b16 %v2501
        %v2998 = vunpack.c.h.b16 %v2501
        %v2999 = vunpack.c.l.b16 %v2502
        %v3000 = vunpack.c.h.b16 %v2502
        %v3001 = vunpack.c.l.b16 %v2503
        %v3002 = vunpack.c.h.b16 %v2503
        %v3003 = vunpack.c.l.b16 %v2504
        %v3004 = vunpack.c.h.b16 %v2504
        %v3005 = vunpack.c.l.b16 %v2505
        %v3006 = vunpack.c.h.b16 %v2505
        %v3007 = vunpack.c.l.b16 %v2506
        %v3008 = vunpack.c.h.b16 %v2506
        %v3009 = vunpack.c.l.b16 %v2507
        %v3010 = vunpack.c.h.b16 %v2507
        %v3011 = vunpack.c.l.b16 %v2508
        %v3012 = vunpack.c.h.b16 %v2508
        %v3013 = vunpack.c.l.b16 %v2509
        %v3014 = vunpack.c.h.b16 %v2509
        %v3015 = vunpack.c.l.b16 %v2510
        %v3016 = vunpack.c.h.b16 %v2510
        %v3017 = vunpack.c.l.b16 %v2511
        %v3018 = vunpack.c.h.b16 %v2511
        %v3019 = vunpack.c.l.b16 %v2512
        %v3020 = vunpack.c.h.b16 %v2512
        %v3021 = vunpack.c.l.b16 %v2513
        %v3022 = vunpack.c.h.b16 %v2513
        %v3023 = vunpack.c.l.b16 %v2514
        %v3024 = vunpack.c.h.b16 %v2514
        %v3025 = vunpack.c.l.b16 %v2515
        %v3026 = vunpack.c.h.b16 %v2515
        %v3027 = vunpack.c.l.b16 %v2516
        %v3028 = vunpack.c.h.b16 %v2516
        %v3029 = vunpack.c.l.b16 %v2517
        %v3030 = vunpack.c.h.b16 %v2517
        %v3031 = vunpack.c.l.b16 %v2518
        %v3032 = vunpack.c.h.b16 %v2518
        %v3033 = vunpack.c.l.b16 %v2519
        %v3034 = vunpack.c.h.b16 %v2519
        %v3035 = vunpack.c.l.b16 %v2520
        %v3036 = vunpack.c.h.b16 %v2520
        %v3037 = vunpack.c.l.b16 %v2521
        %v3038 = vunpack.c.h.b16 %v2521
        %v3039 = vunpack.c.l.b16 %v2522
        %v3040 = vunpack.c.h.b16 %v2522
        %v3041 = vunpack.c.l.b16 %v2523
        %v3042 = vunpack.c.h.b16 %v2523
        %v3043 = vunpack.c.l.b16 %v2524
        %v3044 = vunpack.c.h.b16 %v2524
        %v3045 = vunpack.c.l.b16 %v2525
        %v3046 = vunpack.c.h.b16 %v2525
        %v3047 = vunpack.c.l.b16 %v2526
        %v3048 = vunpack.c.h.b16 %v2526
        %v3049 = vunpack.c.l.b16 %v2527
        %v3050 = vunpack.c.h.b16 %v2527
        %v3051 = vunpack.c.l.b16 %v2528
        %v3052 = vunpack.c.h.b16 %v2528
        %v3053 = vunpack.c.l.b16 %v2529
        %v3054 = vunpack.c.h.b16 %v2529
        %v3055 = vunpack.c.l.b16 %v2530
        %v3056 = vunpack.c.h.b16 %v2530
        %v3057 = vunpack.c.l.b16 %v2531
        %v3058 = vunpack.c.h.b16 %v2531
        %v3059 = vunpack.c.l.b16 %v2532
        %v3060 = vunpack.c.h.b16 %v2532
        %v3061 = vunpack.c.l.b16 %v2533
        %v3062 = vunpack.c.h.b16 %v2533
        %v3063 = vunpack.c.l.b16 %v2534
        %v3064 = vunpack.c.h.b16 %v2534
        %v3065 = vunpack.c.l.b16 %v2535
        %v3066 = vunpack.c.h.b16 %v2535
        %v3067 = vunpack.c.l.b16 %v2536
        %v3068 = vunpack.c.h.b16 %v2536
        %v3069 = vunpack.c.l.b16 %v2537
        %v3070 = vunpack.c.h.b16 %v2537
        %v3071 = vunpack.c.l.b16 %v2538
        %v3072 = vunpack.c.h.b16 %v2538
        %v3073 = vunpack.c.l.b16 %v2539
        %v3074 = vunpack.c.h.b16 %v2539
        %v3075 = vunpack.c.l.b16 %v2540
        %v3076 = vunpack.c.h.b16 %v2540
        %v3077 = vunpack.c.l.b16 %v2541
        %v3078 = vunpack.c.h.b16 %v2541
        %v3079 = vunpack.c.l.b16 %v2542
        %v3080 = vunpack.c.h.b16 %v2542
        %v3081 = vunpack.c.l.b16 %v2543
        %v3082 = vunpack.c.h.b16 %v2543
        %v3083 = vunpack.c.l.b16 %v2544
        %v3084 = vunpack.c.h.b16 %v2544
        %v3085 = vunpack.c.l.b16 %v2545
        %v3086 = vunpack.c.h.b16 %v2545
        %v3087 = vunpack.c.l.b16 %v2546
        %v3088 = vunpack.c.h.b16 %v2546
        %v3089 = vunpack.c.l.b16 %v2547
        %v3090 = vunpack.c.h.b16 %v2547
        %v3091 = vunpack.c.l.b16 %v2548
        %v3092 = vunpack.c.h.b16 %v2548
        %v3093 = vunpack.c.l.b16 %v2549
        %v3094 = vunpack.c.h.b16 %v2549
        %v3095 = vunpack.c.l.b16 %v2550
        %v3096 = vunpack.c.h.b16 %v2550
        %v3097 = vunpack.c.l.b16 %v2551
        %v3098 = vunpack.c.h.b16 %v2551
        %v3099 = vunpack.c.l.b16 %v2552
        %v3100 = vunpack.c.h.b16 %v2552
        %v3101 = vunpack.c.l.b16 %v2553
        %v3102 = vunpack.c.h.b16 %v2553
        %v3103 = vunpack.c.l.b16 %v2554
        %v3104 = vunpack.c.h.b16 %v2554
        %v3105 = vunpack.c.l.b16 %v2555
        %v3106 = vunpack.c.h.b16 %v2555
        %v3107 = vunpack.c.l.b16 %v2556
        %v3108 = vunpack.c.h.b16 %v2556
        %v3109 = vunpack.c.l.b16 %v2557
        %v3110 = vunpack.c.h.b16 %v2557
        %v3111 = vunpack.c.l.b16 %v2558
        %v3112 = vunpack.c.h.b16 %v2558
        %v3113 = vunpack.c.l.b16 %v2559
        %v3114 = vunpack.c.h.b16 %v2559
        %v3115 = vunpack.c.l.b16 %v2560
        %v3116 = vunpack.c.h.b16 %v2560
        %v3117 = vunpack.c.l.b16 %v2561
        %v3118 = vunpack.c.h.b16 %v2561
        %v3119 = vunpack.c.l.b16 %v2562
        %v3120 = vunpack.c.h.b16 %v2562
        %v3121 = vunpack.c.l.b16 %v2563
        %v3122 = vunpack.c.h.b16 %v2563
        %v3123 = vunpack.c.l.b16 %v2564
        %v3124 = vunpack.c.h.b16 %v2564
        %v3125 = vunpack.c.l.b16 %v2565
        %v3126 = vunpack.c.h.b16 %v2565
        %v3127 = vunpack.c.l.b16 %v2566
        %v3128 = vunpack.c.h.b16 %v2566
        %v3129 = vunpack.c.l.b16 %v2567
        %v3130 = vunpack.c.h.b16 %v2567
        %v3131 = vunpack.c.l.b16 %v2568
        %v3132 = vunpack.c.h.b16 %v2568
        %v3133 = vunpack.c.l.b16 %v2569
        %v3134 = vunpack.c.h.b16 %v2569
        %v3135 = vunpack.c.l.b16 %v2570
        %v3136 = vunpack.c.h.b16 %v2570
        %v3137 = vunpack.c.l.b16 %v2571
        %v3138 = vunpack.c.h.b16 %v2571
        %v3139 = vunpack.c.l.b16 %v2572
        %v3140 = vunpack.c.h.b16 %v2572
        %v3141 = vunpack.c.l.b16 %v2573
        %v3142 = vunpack.c.h.b16 %v2573
        %v3143 = vunpack.c.l.b16 %v2574
        %v3144 = vunpack.c.h.b16 %v2574
        %v3145 = vunpack.c.l.b16 %v2575
        %v3146 = vunpack.c.h.b16 %v2575
        %v3147 = vunpack.c.l.b16 %v2576
        %v3148 = vunpack.c.h.b16 %v2576
        %v3149 = vunpack.c.l.b16 %v2577
        %v3150 = vunpack.c.h.b16 %v2577
        %v3151 = vunpack.c.l.b16 %v2578
        %v3152 = vunpack.c.h.b16 %v2578
        %v3153 = vunpack.c.l.b16 %v2579
        %v3154 = vunpack.c.h.b16 %v2579
        %v3155 = vpack.c.b16 %v2837, %v2835
        %v3156 = vpack.c.b16 %v2838, %v2836
        %v3157 = vpack.c.b16 %v2841, %v2839
        %v3158 = vpack.c.b16 %v2842, %v2840
        %v3159 = vpack.c.b16 %v2845, %v2843
        %v3160 = vpack.c.b16 %v2846, %v2844
        %v3161 = vpack.c.b16 %v2849, %v2847
        %v3162 = vpack.c.b16 %v2850, %v2848
        %v3163 = vpack.c.b16 %v2853, %v2851
        %v3164 = vpack.c.b16 %v2854, %v2852
        %v3165 = vpack.c.b16 %v2857, %v2855
        %v3166 = vpack.c.b16 %v2858, %v2856
        %v3167 = vpack.c.b16 %v2861, %v2859
        %v3168 = vpack.c.b16 %v2862, %v2860
        %v3169 = vpack.c.b16 %v2865, %v2863
        %v3170 = vpack.c.b16 %v2866, %v2864
        %v3171 = vpack.c.b16 %v2869, %v2867
        %v3172 = vpack.c.b16 %v2870, %v2868
        %v3173 = vpack.c.b16 %v2873, %v2871
        %v3174 = vpack.c.b16 %v2874, %v2872
        %v3175 = vpack.c.b16 %v2877, %v2875
        %v3176 = vpack.c.b16 %v2878, %v2876
        %v3177 = vpack.c.b16 %v2881, %v2879
        %v3178 = vpack.c.b16 %v2882, %v2880
        %v3179 = vpack.c.b16 %v2885, %v2883
        %v3180 = vpack.c.b16 %v2886, %v2884
        %v3181 = vpack.c.b16 %v2889, %v2887
        %v3182 = vpack.c.b16 %v2890, %v2888
        %v3183 = vpack.c.b16 %v2893, %v2891
        %v3184 = vpack.c.b16 %v2894, %v2892
        %v3185 = vpack.c.b16 %v2897, %v2895
        %v3186 = vpack.c.b16 %v2898, %v2896
        %v3187 = vpack.c.b16 %v2901, %v2899
        %v3188 = vpack.c.b16 %v2902, %v2900
        %v3189 = vpack.c.b16 %v2905, %v2903
        %v3190 = vpack.c.b16 %v2906, %v2904
        %v3191 = vpack.c.b16 %v2909, %v2907
        %v3192 = vpack.c.b16 %v2910, %v2908
        %v3193 = vpack.c.b16 %v2913, %v2911
        %v3194 = vpack.c.b16 %v2914, %v2912
        %v3195 = vpack.c.b16 %v2917, %v2915
        %v3196 = vpack.c.b16 %v2918, %v2916
        %v3197 = vpack.c.b16 %v2921, %v2919
        %v3198 = vpack.c.b16 %v2922, %v2920
        %v3199 = vpack.c.b16 %v2925, %v2923
        %v3200 = vpack.c.b16 %v2926, %v2924
        %v3201 = vpack.c.b16 %v2929, %v2927
        %v3202 = vpack.c.b16 %v2930, %v2928
        %v3203 = vpack.c.b16 %v2933, %v2931
        %v3204 = vpack.c.b16 %v2934, %v2932
        %v3205 = vpack.c.b16 %v2937, %v2935
        %v3206 = vpack.c.b16 %v2938, %v2936
        %v3207 = vpack.c.b16 %v2941, %v2939
        %v3208 = vpack.c.b16 %v2942, %v2940
        %v3209 = vpack.c.b16 %v2945, %v2943
        %v3210 = vpack.c.b16 %v2946, %v2944
        %v3211 = vpack.c.b16 %v2949, %v2947
        %v3212 = vpack.c.b16 %v2950, %v2948
        %v3213 = vpack.c.b16 %v2953, %v2951
        %v3214 = vpack.c.b16 %v2954, %v2952
        %v3215 = vpack.c.b16 %v2957, %v2955
        %v3216 = vpack.c.b16 %v2958, %v2956
        %v3217 = vpack.c.b16 %v2961, %v2959
        %v3218 = vpack.c.b16 %v2962, %v2960
        %v3219 = vpack.c.b16 %v2965, %v2963
        %v3220 = vpack.c.b16 %v2966, %v2964
        %v3221 = vpack.c.b16 %v2969, %v2967
        %v3222 = vpack.c.b16 %v2970, %v2968
        %v3223 = vpack.c.b16 %v2973, %v2971
        %v3224 = vpack.c.b16 %v2974, %v2972
        %v3225 = vpack.c.b16 %v2977, %v2975
        %v3226 = vpack.c.b16 %v2978, %v2976
        %v3227 = vpack.c.b16 %v2981, %v2979
        %v3228 = vpack.c.b16 %v2982, %v2980
        %v3229 = vpack.c.b16 %v2985, %v2983
        %v3230 = vpack.c.b16 %v2986, %v2984
        %v3231 = vpack.c.b16 %v2989, %v2987
        %v3232 = vpack.c.b16 %v2990, %v2988
        %v3233 = vpack.c.b16 %v2993, %v2991
        %v3234 = vpack.c.b16 %v2994, %v2992
        %v3235 = vpack.c.b16 %v2997, %v2995
        %v3236 = vpack.c.b16 %v2998, %v2996
        %v3237 = vpack.c.b16 %v3001, %v2999
        %v3238 = vpack.c.b16 %v3002, %v3000
        %v3239 = vpack.c.b16 %v3005, %v3003
        %v3240 = vpack.c.b16 %v3006, %v3004
        %v3241 = vpack.c.b16 %v3009, %v3007
        %v3242 = vpack.c.b16 %v3010, %v3008
        %v3243 = vpack.c.b16 %v3013, %v3011
        %v3244 = vpack.c.b16 %v3014, %v3012
        %v3245 = vpack.c.b16 %v3017, %v3015
        %v3246 = vpack.c.b16 %v3018, %v3016
        %v3247 = vpack.c.b16 %v3021, %v3019
        %v3248 = vpack.c.b16 %v3022, %v3020
        %v3249 = vpack.c.b16 %v3025, %v3023
        %v3250 = vpack.c.b16 %v3026, %v3024
        %v3251 = vpack.c.b16 %v3029, %v3027
        %v3252 = vpack.c.b16 %v3030, %v3028
        %v3253 = vpack.c.b16 %v3033, %v3031
        %v3254 = vpack.c.b16 %v3034, %v3032
        %v3255 = vpack.c.b16 %v3037, %v3035
        %v3256 = vpack.c.b16 %v3038, %v3036
        %v3257 = vpack.c.b16 %v3041, %v3039
        %v3258 = vpack.c.b16 %v3042, %v3040
        %v3259 = vpack.c.b16 %v3045, %v3043
        %v3260 = vpack.c.b16 %v3046, %v3044
        %v3261 = vpack.c.b16 %v3049, %v3047
        %v3262 = vpack.c.b16 %v3050, %v3048
        %v3263 = vpack.c.b16 %v3053, %v3051
        %v3264 = vpack.c.b16 %v3054, %v3052
        %v3265 = vpack.c.b16 %v3057, %v3055
        %v3266 = vpack.c.b16 %v3058, %v3056
        %v3267 = vpack.c.b16 %v3061, %v3059
        %v3268 = vpack.c.b16 %v3062, %v3060
        %v3269 = vpack.c.b16 %v3065, %v3063
        %v3270 = vpack.c.b16 %v3066, %v3064
        %v3271 = vpack.c.b16 %v3069, %v3067
        %v3272 = vpack.c.b16 %v3070, %v3068
        %v3273 = vpack.c.b16 %v3073, %v3071
        %v3274 = vpack.c.b16 %v3074, %v3072
        %v3275 = vpack.c.b16 %v3077, %v3075
        %v3276 = vpack.c.b16 %v3078, %v3076
        %v3277 = vpack.c.b16 %v3081, %v3079
        %v3278 = vpack.c.b16 %v3082, %v3080
        %v3279 = vpack.c.b16 %v3085, %v3083
        %v3280 = vpack.c.b16 %v3086, %v3084
        %v3281 = vpack.c.b16 %v3089, %v3087
        %v3282 = vpack.c.b16 %v3090, %v3088
        %v3283 = vpack.c.b16 %v3093, %v3091
        %v3284 = vpack.c.b16 %v3094, %v3092
        %v3285 = vpack.c.b16 %v3097, %v3095
        %v3286 = vpack.c.b16 %v3098, %v3096
        %v3287 = vpack.c.b16 %v3101, %v3099
        %v3288 = vpack.c.b16 %v3102, %v3100
        %v3289 = vpack.c.b16 %v3105, %v3103
        %v3290 = vpack.c.b16 %v3106, %v3104
        %v3291 = vpack.c.b16 %v3109, %v3107
        %v3292 = vpack.c.b16 %v3110, %v3108
        %v3293 = vpack.c.b16 %v3113, %v3111
        %v3294 = vpack.c.b16 %v3114, %v3112
        %v3295 = vpack.c.b16 %v3117, %v3115
        %v3296 = vpack.c.b16 %v3118, %v3116
        %v3297 = vpack.c.b16 %v3121, %v3119
        %v3298 = vpack.c.b16 %v3122, %v3120
        %v3299 = vpack.c.b16 %v3125, %v3123
        %v3300 = vpack.c.b16 %v3126, %v3124
        %v3301 = vpack.c.b16 %v3129, %v3127
        %v3302 = vpack.c.b16 %v3130, %v3128
        %v3303 = vpack.c.b16 %v3133, %v3131
        %v3304 = vpack.c.b16 %v3134, %v3132
        %v3305 = vpack.c.b16 %v3137, %v3135
        %v3306 = vpack.c.b16 %v3138, %v3136
        %v3307 = vpack.c.b16 %v3141, %v3139
        %v3308 = vpack.c.b16 %v3142, %v3140
        %v3309 = vpack.c.b16 %v3145, %v3143
        %v3310 = vpack.c.b16 %v3146, %v3144
        %v3311 = vpack.c.b16 %v3149, %v3147
        %v3312 = vpack.c.b16 %v3150, %v3148
        %v3313 = vpack.c.b16 %v3153, %v3151
        %v3314 = vpack.c.b16 %v3154, %v3152
        %3475 = vmatprep.subr.bf16.mxu0 %v3170
        %3476 = vmatpush1.bf16.msra.mxu0 %v3169
        %3477 = vmatprep.subr.bf16.mxu0 %v3168
        %3478 = vmatpush1.bf16.msra.mxu0 %v3167
        %3479 = vmatprep.subr.bf16.mxu0 %v3166
        %3480 = vmatpush1.bf16.msra.mxu0 %v3165
        %3481 = vmatprep.subr.bf16.mxu0 %v3164
        %3482 = vmatpush1.bf16.msra.mxu0 %v3163
        %3483 = vmatprep.subr.bf16.mxu0 %v3162
        %3484 = vmatpush1.bf16.msra.mxu0 %v3161
        %3485 = vmatprep.subr.bf16.mxu0 %v3160
        %3486 = vmatpush1.bf16.msra.mxu0 %v3159
        %3487 = vmatprep.subr.bf16.mxu0 %v3158
        %3488 = vmatpush1.bf16.msra.mxu0 %v3157
        %3489 = vmatprep.subr.bf16.mxu0 %v3156
        %3490 = vmatpush1.bf16.msra.mxu0 %v3155
        %3491 = vmatprep.subr.bf16.mxu0 %v3186
        %3492 = vmatpush2.bf16.msra.mxu0 %v3185
        %3493 = vmatprep.subr.bf16.mxu0 %v3184
        %3494 = vmatpush2.bf16.msra.mxu0 %v3183
        %3495 = vmatprep.subr.bf16.mxu0 %v3182
        %3496 = vmatpush2.bf16.msra.mxu0 %v3181
        %3497 = vmatprep.subr.bf16.mxu0 %v3180
        %3498 = vmatpush2.bf16.msra.mxu0 %v3179
        %3499 = vmatprep.subr.bf16.mxu0 %v3178
        %3500 = vmatpush2.bf16.msra.mxu0 %v3177
        %3501 = vmatprep.subr.bf16.mxu0 %v3176
        %3502 = vmatpush2.bf16.msra.mxu0 %v3175
        %3503 = vmatprep.subr.bf16.mxu0 %v3174
        %3504 = vmatpush2.bf16.msra.mxu0 %v3173
        %3505 = vmatprep.subr.bf16.mxu0 %v3172
        %3506 = vmatpush2.bf16.msra.mxu0 %v3171
        %3507 = vmatprep.mubr.bf16.mxu0 %v2631
        %3508 = vmatmul.mubr.bf16.gmra.mxu0 %v2617
        %v3509 = vpop.f32.mrf.mxu0
        %v3510 = vadd.f32 %v2585, %v3509
        %v3511 = vpop.f32.mrf.mxu0
        %v3512 = vadd.f32 %v2589, %v3511
        %v3513 = vpop.f32.mrf.mxu0
        %v3514 = vpop.f32.mrf.mxu0
        %3515 = vdwg.mxu0
        %3516 = vmatprep.subr.bf16.mxu0 %v3202
        %3517 = vmatpush1.bf16.msra.mxu0 %v3201
        %3518 = vmatprep.subr.bf16.mxu0 %v3200
        %3519 = vmatpush1.bf16.msra.mxu0 %v3199
        %3520 = vmatprep.subr.bf16.mxu0 %v3198
        %3521 = vmatpush1.bf16.msra.mxu0 %v3197
        %3522 = vmatprep.subr.bf16.mxu0 %v3196
        %3523 = vmatpush1.bf16.msra.mxu0 %v3195
        %3524 = vmatprep.subr.bf16.mxu0 %v3194
        %3525 = vmatpush1.bf16.msra.mxu0 %v3193
        %3526 = vmatprep.subr.bf16.mxu0 %v3192
        %3527 = vmatpush1.bf16.msra.mxu0 %v3191
        %3528 = vmatprep.subr.bf16.mxu0 %v3190
        %3529 = vmatpush1.bf16.msra.mxu0 %v3189
        %3530 = vmatprep.subr.bf16.mxu0 %v3188
        %3531 = vmatpush1.bf16.msra.mxu0 %v3187
        %3532 = vmatprep.subr.bf16.mxu0 %v3218
        %3533 = vmatpush2.bf16.msra.mxu0 %v3217
        %3534 = vmatprep.subr.bf16.mxu0 %v3216
        %3535 = vmatpush2.bf16.msra.mxu0 %v3215
        %3536 = vmatprep.subr.bf16.mxu0 %v3214
        %3537 = vmatpush2.bf16.msra.mxu0 %v3213
        %3538 = vmatprep.subr.bf16.mxu0 %v3212
        %3539 = vmatpush2.bf16.msra.mxu0 %v3211
        %3540 = vmatprep.subr.bf16.mxu0 %v3210
        %3541 = vmatpush2.bf16.msra.mxu0 %v3209
        %3542 = vmatprep.subr.bf16.mxu0 %v3208
        %3543 = vmatpush2.bf16.msra.mxu0 %v3207
        %3544 = vmatprep.subr.bf16.mxu0 %v3206
        %3545 = vmatpush2.bf16.msra.mxu0 %v3205
        %3546 = vmatprep.subr.bf16.mxu0 %v3204
        %3547 = vmatpush2.bf16.msra.mxu0 %v3203
        %3548 = vmatprep.mubr.bf16.mxu0 %v2641
        %3549 = vmatmul.mubr.bf16.gmra.mxu0 %v2639
        %v3550 = vpop.f32.mrf.mxu0
        %v3551 = vadd.f32 %v3510, %v3550
        %v3552 = vpop.f32.mrf.mxu0
        %v3553 = vadd.f32 %v3512, %v3552
        %v3554 = vpop.f32.mrf.mxu0
        %v3555 = vpop.f32.mrf.mxu0
        %3556 = vdwg.mxu0
        %3557 = vmatprep.subr.bf16.mxu0 %v3234
        %3558 = vmatpush1.bf16.msra.mxu0 %v3233
        %3559 = vmatprep.subr.bf16.mxu0 %v3232
        %3560 = vmatpush1.bf16.msra.mxu0 %v3231
        %3561 = vmatprep.subr.bf16.mxu0 %v3230
        %3562 = vmatpush1.bf16.msra.mxu0 %v3229
        %3563 = vmatprep.subr.bf16.mxu0 %v3228
        %3564 = vmatpush1.bf16.msra.mxu0 %v3227
        %3565 = vmatprep.subr.bf16.mxu0 %v3226
        %3566 = vmatpush1.bf16.msra.mxu0 %v3225
        %3567 = vmatprep.subr.bf16.mxu0 %v3224
        %3568 = vmatpush1.bf16.msra.mxu0 %v3223
        %3569 = vmatprep.subr.bf16.mxu0 %v3222
        %3570 = vmatpush1.bf16.msra.mxu0 %v3221
        %3571 = vmatprep.subr.bf16.mxu0 %v3220
        %3572 = vmatpush1.bf16.msra.mxu0 %v3219
        %3573 = vmatprep.subr.bf16.mxu0 %v3250
        %3574 = vmatpush2.bf16.msra.mxu0 %v3249
        %3575 = vmatprep.subr.bf16.mxu0 %v3248
        %3576 = vmatpush2.bf16.msra.mxu0 %v3247
        %3577 = vmatprep.subr.bf16.mxu0 %v3246
        %3578 = vmatpush2.bf16.msra.mxu0 %v3245
        %3579 = vmatprep.subr.bf16.mxu0 %v3244
        %3580 = vmatpush2.bf16.msra.mxu0 %v3243
        %3581 = vmatprep.subr.bf16.mxu0 %v3242
        %3582 = vmatpush2.bf16.msra.mxu0 %v3241
        %3583 = vmatprep.subr.bf16.mxu0 %v3240
        %3584 = vmatpush2.bf16.msra.mxu0 %v3239
        %3585 = vmatprep.subr.bf16.mxu0 %v3238
        %3586 = vmatpush2.bf16.msra.mxu0 %v3237
        %3587 = vmatprep.subr.bf16.mxu0 %v3236
        %3588 = vmatpush2.bf16.msra.mxu0 %v3235
        %3589 = vmatprep.mubr.bf16.mxu0 %v2638
        %3590 = vmatmul.mubr.bf16.gmra.mxu0 %v2624
        %v3591 = vpop.f32.mrf.mxu0
        %v3592 = vadd.f32 %v3551, %v3591
        %v3593 = vpop.f32.mrf.mxu0
        %v3594 = vadd.f32 %v3553, %v3593
        %v3595 = vpop.f32.mrf.mxu0
        %v3596 = vpop.f32.mrf.mxu0
        %3597 = vdwg.mxu0
        %3598 = vmatprep.subr.bf16.mxu0 %v3266
        %3599 = vmatpush1.bf16.msra.mxu0 %v3265
        %3600 = vmatprep.subr.bf16.mxu0 %v3264
        %3601 = vmatpush1.bf16.msra.mxu0 %v3263
        %3602 = vmatprep.subr.bf16.mxu0 %v3262
        %3603 = vmatpush1.bf16.msra.mxu0 %v3261
        %3604 = vmatprep.subr.bf16.mxu0 %v3260
        %3605 = vmatpush1.bf16.msra.mxu0 %v3259
        %3606 = vmatprep.subr.bf16.mxu0 %v3258
        %3607 = vmatpush1.bf16.msra.mxu0 %v3257
        %3608 = vmatprep.subr.bf16.mxu0 %v3256
        %3609 = vmatpush1.bf16.msra.mxu0 %v3255
        %3610 = vmatprep.subr.bf16.mxu0 %v3254
        %3611 = vmatpush1.bf16.msra.mxu0 %v3253
        %3612 = vmatprep.subr.bf16.mxu0 %v3252
        %3613 = vmatpush1.bf16.msra.mxu0 %v3251
        %3614 = vmatprep.subr.bf16.mxu0 %v3282
        %3615 = vmatpush2.bf16.msra.mxu0 %v3281
        %3616 = vmatprep.subr.bf16.mxu0 %v3280
        %3617 = vmatpush2.bf16.msra.mxu0 %v3279
        %3618 = vmatprep.subr.bf16.mxu0 %v3278
        %3619 = vmatpush2.bf16.msra.mxu0 %v3277
        %3620 = vmatprep.subr.bf16.mxu0 %v3276
        %3621 = vmatpush2.bf16.msra.mxu0 %v3275
        %3622 = vmatprep.subr.bf16.mxu0 %v3274
        %3623 = vmatpush2.bf16.msra.mxu0 %v3273
        %3624 = vmatprep.subr.bf16.mxu0 %v3272
        %3625 = vmatpush2.bf16.msra.mxu0 %v3271
        %3626 = vmatprep.subr.bf16.mxu0 %v3270
        %3627 = vmatpush2.bf16.msra.mxu0 %v3269
        %3628 = vmatprep.subr.bf16.mxu0 %v3268
        %3629 = vmatpush2.bf16.msra.mxu0 %v3267
        %3630 = vmatprep.mubr.bf16.mxu0 %v2642
        %3631 = vmatmul.mubr.bf16.gmra.mxu0 %v2640
        %v3632 = vpop.f32.mrf.mxu0
        %v3633 = vadd.f32 %v3592, %v3632
        %v3634 = vpop.f32.mrf.mxu0
        %v3635 = vadd.f32 %v3594, %v3634
        %v3636 = vpop.f32.mrf.mxu0
        %v3637 = vpop.f32.mrf.mxu0
        %3638 = vdwg.mxu0
        %3639 = vmatprep.subr.bf16.mxu0 %v3298
        %3640 = vmatpush1.bf16.msra.mxu0 %v3297
        %3641 = vmatprep.subr.bf16.mxu0 %v3296
        %3642 = vmatpush1.bf16.msra.mxu0 %v3295
        %3643 = vmatprep.subr.bf16.mxu0 %v3294
        %3644 = vmatpush1.bf16.msra.mxu0 %v3293
        %3645 = vmatprep.subr.bf16.mxu0 %v3292
        %3646 = vmatpush1.bf16.msra.mxu0 %v3291
        %3647 = vmatprep.subr.bf16.mxu0 %v3290
        %3648 = vmatpush1.bf16.msra.mxu0 %v3289
        %3649 = vmatprep.subr.bf16.mxu0 %v3288
        %3650 = vmatpush1.bf16.msra.mxu0 %v3287
        %3651 = vmatprep.subr.bf16.mxu0 %v3286
        %3652 = vmatpush1.bf16.msra.mxu0 %v3285
        %3653 = vmatprep.subr.bf16.mxu0 %v3284
        %3654 = vmatpush1.bf16.msra.mxu0 %v3283
        %3655 = vmatprep.subr.bf16.mxu0 %v3314
        %3656 = vmatpush2.bf16.msra.mxu0 %v3313
        %3657 = vmatprep.subr.bf16.mxu0 %v3312
        %3658 = vmatpush2.bf16.msra.mxu0 %v3311
        %3659 = vmatprep.subr.bf16.mxu0 %v3310
        %3660 = vmatpush2.bf16.msra.mxu0 %v3309
        %3661 = vmatprep.subr.bf16.mxu0 %v3308
        %3662 = vmatpush2.bf16.msra.mxu0 %v3307
        %3663 = vmatprep.subr.bf16.mxu0 %v3306
        %3664 = vmatpush2.bf16.msra.mxu0 %v3305
        %3665 = vmatprep.subr.bf16.mxu0 %v3304
        %3666 = vmatpush2.bf16.msra.mxu0 %v3303
        %3667 = vmatprep.subr.bf16.mxu0 %v3302
        %3668 = vmatpush2.bf16.msra.mxu0 %v3301
        %3669 = vmatprep.subr.bf16.mxu0 %v3300
        %3670 = vmatpush2.bf16.msra.mxu0 %v3299
        %3671 = vmatprep.mubr.bf16.mxu0 %v2664
        %3672 = vmatmul.mubr.bf16.gmra.mxu0 %v2657
        %v3673 = vpop.f32.mrf.mxu0
        %v3674 = vadd.f32 %v3633, %v3673
        %v3675 = vpop.f32.mrf.mxu0
        %v3676 = vadd.f32 %v3635, %v3675
        %v3677 = vpop.f32.mrf.mxu0
        %v3678 = vpop.f32.mrf.mxu0
        %3679 = vdwg.mxu0
        %v3680 = vld [vmem:[%s558] sm:$0x3]
        %v3682 = vlaneseq
        %v3683 = vshrl.u32 %v3682, 7
        %v3684 = vsub.s32 0, %v3683
        %v3685 = vrot.slane %v3680, %v3684
        %v3686 = vlaneseq
        %v3687 = vshrl.u32 %v3686, 7
        %v3688 = vsub.s32 1, %v3687
        %v3689 = vrot.slane %v3680, %v3688
        %v3692 = vmul.f32 %v3674, %v3685
        %v3693 = vmul.f32 %v3676, %v3689
        %v3694 = vld [vmem:[%s567] sm:$0x3]
        %v3696 = vlaneseq
        %v3697 = vshrl.u32 %v3696, 7
        %v3698 = vsub.s32 0, %v3697
        %v3699 = vrot.slane %v3694, %v3698
        %v3700 = vlaneseq
        %v3701 = vshrl.u32 %v3700, 7
        %v3702 = vsub.s32 1, %v3701
        %v3703 = vrot.slane %v3694, %v3702
        %v3706 = vadd.f32 %v3692, %v3699
        %v3707 = vadd.f32 %v3693, %v3703
        %v3708 = vmax.f32 %v3706, 0.0
        %v3709 = vmax.f32 %v3707, 0.0
        %v3710 = vld [vmem:[#allocation4] sm:$0x3]
        %v3711 = vpack.c.bf16 %v3708, %v3708
        %v3712 = vpack.c.bf16 %v3709, %v3709
        %v3713 = vld [vmem:[%s576] sm:$0xf]
        %v3714 = vld [vmem:[%s576 + $0x4] sm:$0xf]
        %v3715 = vld [vmem:[%s576 + $0x8] sm:$0xf]
        %v3716 = vld [vmem:[%s576 + $0xc] sm:$0xf]
        %v3717 = vld [vmem:[%s576 + $0x10] sm:$0xf]
        %v3718 = vld [vmem:[%s576 + $0x14] sm:$0xf]
        %v3719 = vld [vmem:[%s576 + $0x18] sm:$0xf]
        %v3720 = vld [vmem:[%s576 + $0x1c] sm:$0xf]
        %v3721 = vld [vmem:[%s576 + $0x20] sm:$0xf]
        %v3722 = vld [vmem:[%s576 + $0x24] sm:$0xf]
        %v3723 = vld [vmem:[%s576 + $0x28] sm:$0xf]
        %v3724 = vld [vmem:[%s576 + $0x2c] sm:$0xf]
        %v3725 = vld [vmem:[%s576 + $0x30] sm:$0xf]
        %v3726 = vld [vmem:[%s576 + $0x34] sm:$0xf]
        %v3727 = vld [vmem:[%s576 + $0x38] sm:$0xf]
        %v3728 = vld [vmem:[%s576 + $0x3c] sm:$0xf]
        %v3729 = vld [vmem:[%s576 + $0x40] sm:$0xf]
        %v3730 = vld [vmem:[%s576 + $0x44] sm:$0xf]
        %v3731 = vld [vmem:[%s576 + $0x48] sm:$0xf]
        %v3732 = vld [vmem:[%s576 + $0x4c] sm:$0xf]
        %v3733 = vld [vmem:[%s576 + $0x50] sm:$0xf]
        %v3734 = vld [vmem:[%s576 + $0x54] sm:$0xf]
        %v3735 = vld [vmem:[%s576 + $0x58] sm:$0xf]
        %v3736 = vld [vmem:[%s576 + $0x5c] sm:$0xf]
        %v3737 = vld [vmem:[%s576 + $0x60] sm:$0xf]
        %v3738 = vld [vmem:[%s576 + $0x64] sm:$0xf]
        %v3739 = vld [vmem:[%s576 + $0x68] sm:$0xf]
        %v3740 = vld [vmem:[%s576 + $0x6c] sm:$0xf]
        %v3741 = vld [vmem:[%s576 + $0x70] sm:$0xf]
        %v3742 = vld [vmem:[%s576 + $0x74] sm:$0xf]
        %v3743 = vld [vmem:[%s576 + $0x78] sm:$0xf]
        %v3744 = vld [vmem:[%s576 + $0x7c] sm:$0xf]
        %v3777 = vunpack.c.l.b16 %v3713
        %v3778 = vunpack.c.l.b16 %v3714
        %v3779 = vunpack.c.l.b16 %v3715
        %v3780 = vunpack.c.l.b16 %v3716
        %v3781 = vunpack.c.l.b16 %v3717
        %v3782 = vunpack.c.l.b16 %v3718
        %v3783 = vunpack.c.l.b16 %v3719
        %v3784 = vunpack.c.l.b16 %v3720
        %v3785 = vunpack.c.l.b16 %v3721
        %v3786 = vunpack.c.l.b16 %v3722
        %v3787 = vunpack.c.l.b16 %v3723
        %v3788 = vunpack.c.l.b16 %v3724
        %v3789 = vunpack.c.l.b16 %v3725
        %v3790 = vunpack.c.l.b16 %v3726
        %v3791 = vunpack.c.l.b16 %v3727
        %v3792 = vunpack.c.l.b16 %v3728
        %v3793 = vunpack.c.l.b16 %v3729
        %v3794 = vunpack.c.l.b16 %v3730
        %v3795 = vunpack.c.l.b16 %v3731
        %v3796 = vunpack.c.l.b16 %v3732
        %v3797 = vunpack.c.l.b16 %v3733
        %v3798 = vunpack.c.l.b16 %v3734
        %v3799 = vunpack.c.l.b16 %v3735
        %v3800 = vunpack.c.l.b16 %v3736
        %v3801 = vunpack.c.l.b16 %v3737
        %v3802 = vunpack.c.l.b16 %v3738
        %v3803 = vunpack.c.l.b16 %v3739
        %v3804 = vunpack.c.l.b16 %v3740
        %v3805 = vunpack.c.l.b16 %v3741
        %v3806 = vunpack.c.l.b16 %v3742
        %v3807 = vunpack.c.l.b16 %v3743
        %v3808 = vunpack.c.l.b16 %v3744
        %v3809 = vpack.c.b16 %v3778, %v3777
        %v3810 = vpack.c.b16 %v3780, %v3779
        %v3811 = vpack.c.b16 %v3782, %v3781
        %v3812 = vpack.c.b16 %v3784, %v3783
        %v3813 = vpack.c.b16 %v3786, %v3785
        %v3814 = vpack.c.b16 %v3788, %v3787
        %v3815 = vpack.c.b16 %v3790, %v3789
        %v3816 = vpack.c.b16 %v3792, %v3791
        %v3817 = vpack.c.b16 %v3794, %v3793
        %v3818 = vpack.c.b16 %v3796, %v3795
        %v3819 = vpack.c.b16 %v3798, %v3797
        %v3820 = vpack.c.b16 %v3800, %v3799
        %v3821 = vpack.c.b16 %v3802, %v3801
        %v3822 = vpack.c.b16 %v3804, %v3803
        %v3823 = vpack.c.b16 %v3806, %v3805
        %v3824 = vpack.c.b16 %v3808, %v3807
        %3841 = vmatprep.subr.bf16.mxu0 0
        %3842 = vmatpush1.bf16.msra.mxu0 %v3816
        %3843 = vmatprep.subr.bf16.mxu0 0
        %3844 = vmatpush1.bf16.msra.mxu0 %v3815
        %3845 = vmatprep.subr.bf16.mxu0 0
        %3846 = vmatpush1.bf16.msra.mxu0 %v3814
        %3847 = vmatprep.subr.bf16.mxu0 0
        %3848 = vmatpush1.bf16.msra.mxu0 %v3813
        %3849 = vmatprep.subr.bf16.mxu0 0
        %3850 = vmatpush1.bf16.msra.mxu0 %v3812
        %3851 = vmatprep.subr.bf16.mxu0 0
        %3852 = vmatpush1.bf16.msra.mxu0 %v3811
        %3853 = vmatprep.subr.bf16.mxu0 0
        %3854 = vmatpush1.bf16.msra.mxu0 %v3810
        %3855 = vmatprep.subr.bf16.mxu0 0
        %3856 = vmatpush1.bf16.msra.mxu0 %v3809
        %3857 = vmatprep.subr.bf16.mxu0 0
        %3858 = vmatpush2.bf16.msra.mxu0 %v3824
        %3859 = vmatprep.subr.bf16.mxu0 0
        %3860 = vmatpush2.bf16.msra.mxu0 %v3823
        %3861 = vmatprep.subr.bf16.mxu0 0
        %3862 = vmatpush2.bf16.msra.mxu0 %v3822
        %3863 = vmatprep.subr.bf16.mxu0 0
        %3864 = vmatpush2.bf16.msra.mxu0 %v3821
        %3865 = vmatprep.subr.bf16.mxu0 0
        %3866 = vmatpush2.bf16.msra.mxu0 %v3820
        %3867 = vmatprep.subr.bf16.mxu0 0
        %3868 = vmatpush2.bf16.msra.mxu0 %v3819
        %3869 = vmatprep.subr.bf16.mxu0 0
        %3870 = vmatpush2.bf16.msra.mxu0 %v3818
        %3871 = vmatprep.subr.bf16.mxu0 0
        %3872 = vmatpush2.bf16.msra.mxu0 %v3817
        %3873 = vmatprep.mubr.bf16.mxu0 %v3712
        %3874 = vmatmul.mubr.bf16.gmra.mxu0 %v3711
        %v3875 = vpop.f32.mrf.mxu0
        %v3876 = vadd.f32 0.0, %v3875
        %v3877 = vpop.f32.mrf.mxu0
        %v3878 = vpop.f32.mrf.mxu0
        %v3879 = vpop.f32.mrf.mxu0
        %3880 = vdwg.mxu0
        %v3881 = vadd.f32 %v3710, %v3876
        %3882 = vst [vmem:[#allocation4] sm:$0x3] %v3881
        %p3883 = scmp.eq.s32.totalorder %s27, 4
        // Predicated region
        $region117: #{swav_forward.1} parent=67 // pred_check
          %p3884 = pneg %p3883
        $region118: #{swav_forward.1} parent=67 // pred_check_branch
          %3886 = sbr.rel (%p3884) target = $region120
        $region119: #{swav_forward.1} parent=67 // pred_region
          %v3887 = vld [vmem:[#allocation4] sm:$0x3]
          %v3888 = vld [vmem:[#allocation18] sm:$0x1]
          %v3890 = vlaneseq
          %v3891 = vshrl.u32 %v3890, 7
          %v3892 = vsub.s32 0, %v3891
          %v3893 = vrot.slane %v3888, %v3892
          %v3895 = vadd.f32 %v3887, %v3893
          %v3896 = vmul.f32 %v3895, %v3895
          %vm3897 = vcmask 1041408
          %v3898 = vsel %vm3897, %v3896, 0.0
          %3899 = vadd.xlane.f32.xlu0 %v3898
          %v3900 = vpop.xlane.xlu0 %3899
          %v3901 = vmax.f32 %v3900, 1e-24
          %v3902 = vrsqrt.pop %v3901
          %v3903 = vmul.f32 %v3895, %v3902
          %v3904 = vpack.c.bf16 %v3903, %v3903
          %v3905 = vld [vmem:[#allocation19] sm:$0xff]
          %v3906 = vld [vmem:[#allocation19 + $0x8] sm:$0xff]
          %v3907 = vld [vmem:[#allocation19 + $0x10] sm:$0xff]
          %v3908 = vld [vmem:[#allocation19 + $0x18] sm:$0xff]
          %v3909 = vld [vmem:[#allocation19 + $0x20] sm:$0xff]
          %v3910 = vld [vmem:[#allocation19 + $0x28] sm:$0xff]
          %v3911 = vld [vmem:[#allocation19 + $0x30] sm:$0xff]
          %v3912 = vld [vmem:[#allocation19 + $0x38] sm:$0xff]
          %v3913 = vld [vmem:[#allocation19 + $0x40] sm:$0xff]
          %v3914 = vld [vmem:[#allocation19 + $0x48] sm:$0xff]
          %v3915 = vld [vmem:[#allocation19 + $0x50] sm:$0xff]
          %v3916 = vld [vmem:[#allocation19 + $0x58] sm:$0xff]
          %v3917 = vld [vmem:[#allocation19 + $0x60] sm:$0xff]
          %v3918 = vld [vmem:[#allocation19 + $0x68] sm:$0xff]
          %v3919 = vld [vmem:[#allocation19 + $0x70] sm:$0xff]
          %v3920 = vld [vmem:[#allocation19 + $0x78] sm:$0xff]
          %v3921 = vld [vmem:[#allocation19 + $0x80] sm:$0xff]
          %v3922 = vld [vmem:[#allocation19 + $0x88] sm:$0xff]
          %v3923 = vld [vmem:[#allocation19 + $0x90] sm:$0xff]
          %v3924 = vld [vmem:[#allocation19 + $0x98] sm:$0xff]
          %v3925 = vld [vmem:[#allocation19 + $0xa0] sm:$0xff]
          %v3926 = vld [vmem:[#allocation19 + $0xa8] sm:$0xff]
          %v3927 = vld [vmem:[#allocation19 + $0xb0] sm:$0xff]
          %v3928 = vld [vmem:[#allocation19 + $0xb8] sm:$0xff]
          %v3929 = vld [vmem:[#allocation19 + $0xc0] sm:$0xff]
          %v3930 = vld [vmem:[#allocation19 + $0xc8] sm:$0xff]
          %v3931 = vld [vmem:[#allocation19 + $0xd0] sm:$0xff]
          %v3932 = vld [vmem:[#allocation19 + $0xd8] sm:$0xff]
          %v3933 = vld [vmem:[#allocation19 + $0xe0] sm:$0xff]
          %v3934 = vld [vmem:[#allocation19 + $0xe8] sm:$0xff]
          %v3935 = vld [vmem:[#allocation19 + $0xf0] sm:$0xff]
          %v3936 = vld [vmem:[#allocation19 + $0xf8] sm:$0xff]
          %v3937 = vld [vmem:[#allocation19 + $0x100] sm:$0xff]
          %v3938 = vld [vmem:[#allocation19 + $0x108] sm:$0xff]
          %v3939 = vld [vmem:[#allocation19 + $0x110] sm:$0xff]
          %v3940 = vld [vmem:[#allocation19 + $0x118] sm:$0xff]
          %v3941 = vld [vmem:[#allocation19 + $0x120] sm:$0xff]
          %v3942 = vld [vmem:[#allocation19 + $0x128] sm:$0xff]
          %v3943 = vld [vmem:[#allocation19 + $0x130] sm:$0xff]
          %v3944 = vld [vmem:[#allocation19 + $0x138] sm:$0xff]
          %v3945 = vld [vmem:[#allocation19 + $0x140] sm:$0xff]
          %v3946 = vld [vmem:[#allocation19 + $0x148] sm:$0xff]
          %v3947 = vld [vmem:[#allocation19 + $0x150] sm:$0xff]
          %v3948 = vld [vmem:[#allocation19 + $0x158] sm:$0xff]
          %v3949 = vld [vmem:[#allocation19 + $0x160] sm:$0xff]
          %v3950 = vld [vmem:[#allocation19 + $0x168] sm:$0xff]
          %v3951 = vld [vmem:[#allocation19 + $0x170] sm:$0xff]
          %v3952 = vld [vmem:[#allocation19 + $0x178] sm:$0xff]
          %v3953 = vld [vmem:[#allocation19 + $0x180] sm:$0xff]
          %v3954 = vld [vmem:[#allocation19 + $0x188] sm:$0xff]
          %v3955 = vld [vmem:[#allocation19 + $0x190] sm:$0xff]
          %v3956 = vld [vmem:[#allocation19 + $0x198] sm:$0xff]
          %v3957 = vld [vmem:[#allocation19 + $0x1a0] sm:$0xff]
          %v3958 = vld [vmem:[#allocation19 + $0x1a8] sm:$0xff]
          %v3959 = vld [vmem:[#allocation19 + $0x1b0] sm:$0xff]
          %v3960 = vld [vmem:[#allocation19 + $0x1b8] sm:$0xff]
          %v3961 = vld [vmem:[#allocation19 + $0x1c0] sm:$0xff]
          %v3962 = vld [vmem:[#allocation19 + $0x1c8] sm:$0xff]
          %v3963 = vld [vmem:[#allocation19 + $0x1d0] sm:$0xff]
          %v3964 = vld [vmem:[#allocation19 + $0x1d8] sm:$0xff]
          %v3965 = vld [vmem:[#allocation19 + $0x1e0] sm:$0xff]
          %v3966 = vld [vmem:[#allocation19 + $0x1e8] sm:$0xff]
          %v3967 = vld [vmem:[#allocation19 + $0x1f0] sm:$0xff]
          %v3968 = vld [vmem:[#allocation19 + $0x1f8] sm:$0xff]
          %v3969 = vld [vmem:[#allocation19 + $0x200] sm:$0xff]
          %v3970 = vld [vmem:[#allocation19 + $0x208] sm:$0xff]
          %v3971 = vld [vmem:[#allocation19 + $0x210] sm:$0xff]
          %v3972 = vld [vmem:[#allocation19 + $0x218] sm:$0xff]
          %v3973 = vld [vmem:[#allocation19 + $0x220] sm:$0xff]
          %v3974 = vld [vmem:[#allocation19 + $0x228] sm:$0xff]
          %v3975 = vld [vmem:[#allocation19 + $0x230] sm:$0xff]
          %v3976 = vld [vmem:[#allocation19 + $0x238] sm:$0xff]
          %v3977 = vld [vmem:[#allocation19 + $0x240] sm:$0xff]
          %v3978 = vld [vmem:[#allocation19 + $0x248] sm:$0xff]
          %v3979 = vld [vmem:[#allocation19 + $0x250] sm:$0xff]
          %v3980 = vld [vmem:[#allocation19 + $0x258] sm:$0xff]
          %v3981 = vld [vmem:[#allocation19 + $0x260] sm:$0xff]
          %v3982 = vld [vmem:[#allocation19 + $0x268] sm:$0xff]
          %v3983 = vld [vmem:[#allocation19 + $0x270] sm:$0xff]
          %v3984 = vld [vmem:[#allocation19 + $0x278] sm:$0xff]
          %v4065 = vunpack.c.l.b16 %v3905
          %v4066 = vunpack.c.h.b16 %v3905
          %v4067 = vunpack.c.l.b16 %v3906
          %v4068 = vunpack.c.h.b16 %v3906
          %v4069 = vunpack.c.l.b16 %v3907
          %v4070 = vunpack.c.h.b16 %v3907
          %v4071 = vunpack.c.l.b16 %v3908
          %v4072 = vunpack.c.h.b16 %v3908
          %v4073 = vunpack.c.l.b16 %v3909
          %v4074 = vunpack.c.h.b16 %v3909
          %v4075 = vunpack.c.l.b16 %v3910
          %v4076 = vunpack.c.h.b16 %v3910
          %v4077 = vunpack.c.l.b16 %v3911
          %v4078 = vunpack.c.h.b16 %v3911
          %v4079 = vunpack.c.l.b16 %v3912
          %v4080 = vunpack.c.h.b16 %v3912
          %v4081 = vunpack.c.l.b16 %v3913
          %v4082 = vunpack.c.h.b16 %v3913
          %v4083 = vunpack.c.l.b16 %v3914
          %v4084 = vunpack.c.h.b16 %v3914
          %v4085 = vunpack.c.l.b16 %v3915
          %v4086 = vunpack.c.h.b16 %v3915
          %v4087 = vunpack.c.l.b16 %v3916
          %v4088 = vunpack.c.h.b16 %v3916
          %v4089 = vunpack.c.l.b16 %v3917
          %v4090 = vunpack.c.h.b16 %v3917
          %v4091 = vunpack.c.l.b16 %v3918
          %v4092 = vunpack.c.h.b16 %v3918
          %v4093 = vunpack.c.l.b16 %v3919
          %v4094 = vunpack.c.h.b16 %v3919
          %v4095 = vunpack.c.l.b16 %v3920
          %v4096 = vunpack.c.h.b16 %v3920
          %v4097 = vunpack.c.l.b16 %v3921
          %v4098 = vunpack.c.h.b16 %v3921
          %v4099 = vunpack.c.l.b16 %v3922
          %v4100 = vunpack.c.h.b16 %v3922
          %v4101 = vunpack.c.l.b16 %v3923
          %v4102 = vunpack.c.h.b16 %v3923
          %v4103 = vunpack.c.l.b16 %v3924
          %v4104 = vunpack.c.h.b16 %v3924
          %v4105 = vunpack.c.l.b16 %v3925
          %v4106 = vunpack.c.h.b16 %v3925
          %v4107 = vunpack.c.l.b16 %v3926
          %v4108 = vunpack.c.h.b16 %v3926
          %v4109 = vunpack.c.l.b16 %v3927
          %v4110 = vunpack.c.h.b16 %v3927
          %v4111 = vunpack.c.l.b16 %v3928
          %v4112 = vunpack.c.h.b16 %v3928
          %v4113 = vunpack.c.l.b16 %v3929
          %v4114 = vunpack.c.h.b16 %v3929
          %v4115 = vunpack.c.l.b16 %v3930
          %v4116 = vunpack.c.h.b16 %v3930
          %v4117 = vunpack.c.l.b16 %v3931
          %v4118 = vunpack.c.h.b16 %v3931
          %v4119 = vunpack.c.l.b16 %v3932
          %v4120 = vunpack.c.h.b16 %v3932
          %v4121 = vunpack.c.l.b16 %v3933
          %v4122 = vunpack.c.h.b16 %v3933
          %v4123 = vunpack.c.l.b16 %v3934
          %v4124 = vunpack.c.h.b16 %v3934
          %v4125 = vunpack.c.l.b16 %v3935
          %v4126 = vunpack.c.h.b16 %v3935
          %v4127 = vunpack.c.l.b16 %v3936
          %v4128 = vunpack.c.h.b16 %v3936
          %v4129 = vunpack.c.l.b16 %v3937
          %v4130 = vunpack.c.h.b16 %v3937
          %v4131 = vunpack.c.l.b16 %v3938
          %v4132 = vunpack.c.h.b16 %v3938
          %v4133 = vunpack.c.l.b16 %v3939
          %v4134 = vunpack.c.h.b16 %v3939
          %v4135 = vunpack.c.l.b16 %v3940
          %v4136 = vunpack.c.h.b16 %v3940
          %v4137 = vunpack.c.l.b16 %v3941
          %v4138 = vunpack.c.h.b16 %v3941
          %v4139 = vunpack.c.l.b16 %v3942
          %v4140 = vunpack.c.h.b16 %v3942
          %v4141 = vunpack.c.l.b16 %v3943
          %v4142 = vunpack.c.h.b16 %v3943
          %v4143 = vunpack.c.l.b16 %v3944
          %v4144 = vunpack.c.h.b16 %v3944
          %v4145 = vunpack.c.l.b16 %v3945
          %v4146 = vunpack.c.h.b16 %v3945
          %v4147 = vunpack.c.l.b16 %v3946
          %v4148 = vunpack.c.h.b16 %v3946
          %v4149 = vunpack.c.l.b16 %v3947
          %v4150 = vunpack.c.h.b16 %v3947
          %v4151 = vunpack.c.l.b16 %v3948
          %v4152 = vunpack.c.h.b16 %v3948
          %v4153 = vunpack.c.l.b16 %v3949
          %v4154 = vunpack.c.h.b16 %v3949
          %v4155 = vunpack.c.l.b16 %v3950
          %v4156 = vunpack.c.h.b16 %v3950
          %v4157 = vunpack.c.l.b16 %v3951
          %v4158 = vunpack.c.h.b16 %v3951
          %v4159 = vunpack.c.l.b16 %v3952
          %v4160 = vunpack.c.h.b16 %v3952
          %v4161 = vunpack.c.l.b16 %v3953
          %v4162 = vunpack.c.h.b16 %v3953
          %v4163 = vunpack.c.l.b16 %v3954
          %v4164 = vunpack.c.h.b16 %v3954
          %v4165 = vunpack.c.l.b16 %v3955
          %v4166 = vunpack.c.h.b16 %v3955
          %v4167 = vunpack.c.l.b16 %v3956
          %v4168 = vunpack.c.h.b16 %v3956
          %v4169 = vunpack.c.l.b16 %v3957
          %v4170 = vunpack.c.h.b16 %v3957
          %v4171 = vunpack.c.l.b16 %v3958
          %v4172 = vunpack.c.h.b16 %v3958
          %v4173 = vunpack.c.l.b16 %v3959
          %v4174 = vunpack.c.h.b16 %v3959
          %v4175 = vunpack.c.l.b16 %v3960
          %v4176 = vunpack.c.h.b16 %v3960
          %v4177 = vunpack.c.l.b16 %v3961
          %v4178 = vunpack.c.h.b16 %v3961
          %v4179 = vunpack.c.l.b16 %v3962
          %v4180 = vunpack.c.h.b16 %v3962
          %v4181 = vunpack.c.l.b16 %v3963
          %v4182 = vunpack.c.h.b16 %v3963
          %v4183 = vunpack.c.l.b16 %v3964
          %v4184 = vunpack.c.h.b16 %v3964
          %v4185 = vunpack.c.l.b16 %v3965
          %v4186 = vunpack.c.h.b16 %v3965
          %v4187 = vunpack.c.l.b16 %v3966
          %v4188 = vunpack.c.h.b16 %v3966
          %v4189 = vunpack.c.l.b16 %v3967
          %v4190 = vunpack.c.h.b16 %v3967
          %v4191 = vunpack.c.l.b16 %v3968
          %v4192 = vunpack.c.h.b16 %v3968
          %v4193 = vunpack.c.l.b16 %v3969
          %v4194 = vunpack.c.h.b16 %v3969
          %v4195 = vunpack.c.l.b16 %v3970
          %v4196 = vunpack.c.h.b16 %v3970
          %v4197 = vunpack.c.l.b16 %v3971
          %v4198 = vunpack.c.h.b16 %v3971
          %v4199 = vunpack.c.l.b16 %v3972
          %v4200 = vunpack.c.h.b16 %v3972
          %v4201 = vunpack.c.l.b16 %v3973
          %v4202 = vunpack.c.h.b16 %v3973
          %v4203 = vunpack.c.l.b16 %v3974
          %v4204 = vunpack.c.h.b16 %v3974
          %v4205 = vunpack.c.l.b16 %v3975
          %v4206 = vunpack.c.h.b16 %v3975
          %v4207 = vunpack.c.l.b16 %v3976
          %v4208 = vunpack.c.h.b16 %v3976
          %v4209 = vunpack.c.l.b16 %v3977
          %v4210 = vunpack.c.h.b16 %v3977
          %v4211 = vunpack.c.l.b16 %v3978
          %v4212 = vunpack.c.h.b16 %v3978
          %v4213 = vunpack.c.l.b16 %v3979
          %v4214 = vunpack.c.h.b16 %v3979
          %v4215 = vunpack.c.l.b16 %v3980
          %v4216 = vunpack.c.h.b16 %v3980
          %v4217 = vunpack.c.l.b16 %v3981
          %v4218 = vunpack.c.h.b16 %v3981
          %v4219 = vunpack.c.l.b16 %v3982
          %v4220 = vunpack.c.h.b16 %v3982
          %v4221 = vunpack.c.l.b16 %v3983
          %v4222 = vunpack.c.h.b16 %v3983
          %v4223 = vunpack.c.l.b16 %v3984
          %v4224 = vunpack.c.h.b16 %v3984
          %v4225 = vpack.c.b16 %v4075, %v4065
          %v4226 = vpack.c.b16 %v4076, %v4066
          %v4227 = vpack.c.b16 %v4077, %v4067
          %v4228 = vpack.c.b16 %v4078, %v4068
          %v4229 = vpack.c.b16 %v4079, %v4069
          %v4230 = vpack.c.b16 %v4080, %v4070
          %v4231 = vpack.c.b16 %v4081, %v4071
          %v4232 = vpack.c.b16 %v4082, %v4072
          %v4233 = vpack.c.b16 %v4083, %v4073
          %v4234 = vpack.c.b16 %v4084, %v4074
          %v4235 = vpack.c.b16 %v4095, %v4085
          %v4236 = vpack.c.b16 %v4096, %v4086
          %v4237 = vpack.c.b16 %v4097, %v4087
          %v4238 = vpack.c.b16 %v4098, %v4088
          %v4239 = vpack.c.b16 %v4099, %v4089
          %v4240 = vpack.c.b16 %v4100, %v4090
          %v4241 = vpack.c.b16 %v4101, %v4091
          %v4242 = vpack.c.b16 %v4102, %v4092
          %v4243 = vpack.c.b16 %v4103, %v4093
          %v4244 = vpack.c.b16 %v4104, %v4094
          %v4245 = vpack.c.b16 %v4115, %v4105
          %v4246 = vpack.c.b16 %v4116, %v4106
          %v4247 = vpack.c.b16 %v4117, %v4107
          %v4248 = vpack.c.b16 %v4118, %v4108
          %v4249 = vpack.c.b16 %v4119, %v4109
          %v4250 = vpack.c.b16 %v4120, %v4110
          %v4251 = vpack.c.b16 %v4121, %v4111
          %v4252 = vpack.c.b16 %v4122, %v4112
          %v4253 = vpack.c.b16 %v4123, %v4113
          %v4254 = vpack.c.b16 %v4124, %v4114
          %v4255 = vpack.c.b16 %v4135, %v4125
          %v4256 = vpack.c.b16 %v4136, %v4126
          %v4257 = vpack.c.b16 %v4137, %v4127
          %v4258 = vpack.c.b16 %v4138, %v4128
          %v4259 = vpack.c.b16 %v4139, %v4129
          %v4260 = vpack.c.b16 %v4140, %v4130
          %v4261 = vpack.c.b16 %v4141, %v4131
          %v4262 = vpack.c.b16 %v4142, %v4132
          %v4263 = vpack.c.b16 %v4143, %v4133
          %v4264 = vpack.c.b16 %v4144, %v4134
          %v4265 = vpack.c.b16 %v4155, %v4145
          %v4266 = vpack.c.b16 %v4156, %v4146
          %v4267 = vpack.c.b16 %v4157, %v4147
          %v4268 = vpack.c.b16 %v4158, %v4148
          %v4269 = vpack.c.b16 %v4159, %v4149
          %v4270 = vpack.c.b16 %v4160, %v4150
          %v4271 = vpack.c.b16 %v4161, %v4151
          %v4272 = vpack.c.b16 %v4162, %v4152
          %v4273 = vpack.c.b16 %v4163, %v4153
          %v4274 = vpack.c.b16 %v4164, %v4154
          %v4275 = vpack.c.b16 %v4175, %v4165
          %v4276 = vpack.c.b16 %v4176, %v4166
          %v4277 = vpack.c.b16 %v4177, %v4167
          %v4278 = vpack.c.b16 %v4178, %v4168
          %v4279 = vpack.c.b16 %v4179, %v4169
          %v4280 = vpack.c.b16 %v4180, %v4170
          %v4281 = vpack.c.b16 %v4181, %v4171
          %v4282 = vpack.c.b16 %v4182, %v4172
          %v4283 = vpack.c.b16 %v4183, %v4173
          %v4284 = vpack.c.b16 %v4184, %v4174
          %v4285 = vpack.c.b16 %v4195, %v4185
          %v4286 = vpack.c.b16 %v4196, %v4186
          %v4287 = vpack.c.b16 %v4197, %v4187
          %v4288 = vpack.c.b16 %v4198, %v4188
          %v4289 = vpack.c.b16 %v4199, %v4189
          %v4290 = vpack.c.b16 %v4200, %v4190
          %v4291 = vpack.c.b16 %v4201, %v4191
          %v4292 = vpack.c.b16 %v4202, %v4192
          %v4293 = vpack.c.b16 %v4203, %v4193
          %v4294 = vpack.c.b16 %v4204, %v4194
          %v4295 = vpack.c.b16 %v4215, %v4205
          %v4296 = vpack.c.b16 %v4216, %v4206
          %v4297 = vpack.c.b16 %v4217, %v4207
          %v4298 = vpack.c.b16 %v4218, %v4208
          %v4299 = vpack.c.b16 %v4219, %v4209
          %v4300 = vpack.c.b16 %v4220, %v4210
          %v4301 = vpack.c.b16 %v4221, %v4211
          %v4302 = vpack.c.b16 %v4222, %v4212
          %v4303 = vpack.c.b16 %v4223, %v4213
          %v4304 = vpack.c.b16 %v4224, %v4214
          %4385 = vmatprep.subr.bf16.mxu0 %v4296
          %4386 = vmatpush1.bf16.msra.mxu0 %v4295
          %4387 = vmatprep.subr.bf16.mxu0 %v4286
          %4388 = vmatpush1.bf16.msra.mxu0 %v4285
          %4389 = vmatprep.subr.bf16.mxu0 %v4276
          %4390 = vmatpush1.bf16.msra.mxu0 %v4275
          %4391 = vmatprep.subr.bf16.mxu0 %v4266
          %4392 = vmatpush1.bf16.msra.mxu0 %v4265
          %4393 = vmatprep.subr.bf16.mxu0 %v4256
          %4394 = vmatpush1.bf16.msra.mxu0 %v4255
          %4395 = vmatprep.subr.bf16.mxu0 %v4246
          %4396 = vmatpush1.bf16.msra.mxu0 %v4245
          %4397 = vmatprep.subr.bf16.mxu0 %v4236
          %4398 = vmatpush1.bf16.msra.mxu0 %v4235
          %4399 = vmatprep.subr.bf16.mxu0 %v4226
          %4400 = vmatpush1.bf16.msra.mxu0 %v4225
          %4401 = vmatprep.subr.bf16.mxu0 0
          %4402 = vmatpush2.bf16.msra.mxu0 0
          %4403 = vmatprep.subr.bf16.mxu0 0
          %4404 = vmatpush2.bf16.msra.mxu0 0
          %4405 = vmatprep.subr.bf16.mxu0 0
          %4406 = vmatpush2.bf16.msra.mxu0 0
          %4407 = vmatprep.subr.bf16.mxu0 0
          %4408 = vmatpush2.bf16.msra.mxu0 0
          %4409 = vmatprep.subr.bf16.mxu0 0
          %4410 = vmatpush2.bf16.msra.mxu0 0
          %4411 = vmatprep.subr.bf16.mxu0 0
          %4412 = vmatpush2.bf16.msra.mxu0 0
          %4413 = vmatprep.subr.bf16.mxu0 0
          %4414 = vmatpush2.bf16.msra.mxu0 0
          %4415 = vmatprep.subr.bf16.mxu0 0
          %4416 = vmatpush2.bf16.msra.mxu0 0
          %4417 = vmatprep.mubr.bf16.mxu0 0
          %4418 = vmatmul.mubr.bf16.gmra.mxu0 %v3904
          %v4419 = vpop.f32.mrf.mxu0
          %v4420 = vadd.f32 0.0, %v4419
          %v4421 = vpop.f32.mrf.mxu0
          %v4422 = vadd.f32 0.0, %v4421
          %v4423 = vpop.f32.mrf.mxu0
          %v4424 = vpop.f32.mrf.mxu0
          %4425 = vdwg.mxu0
          %4426 = vmatprep.subr.bf16.mxu0 %v4298
          %4427 = vmatpush1.bf16.msra.mxu0 %v4297
          %4428 = vmatprep.subr.bf16.mxu0 %v4288
          %4429 = vmatpush1.bf16.msra.mxu0 %v4287
          %4430 = vmatprep.subr.bf16.mxu0 %v4278
          %4431 = vmatpush1.bf16.msra.mxu0 %v4277
          %4432 = vmatprep.subr.bf16.mxu0 %v4268
          %4433 = vmatpush1.bf16.msra.mxu0 %v4267
          %4434 = vmatprep.subr.bf16.mxu0 %v4258
          %4435 = vmatpush1.bf16.msra.mxu0 %v4257
          %4436 = vmatprep.subr.bf16.mxu0 %v4248
          %4437 = vmatpush1.bf16.msra.mxu0 %v4247
          %4438 = vmatprep.subr.bf16.mxu0 %v4238
          %4439 = vmatpush1.bf16.msra.mxu0 %v4237
          %4440 = vmatprep.subr.bf16.mxu0 %v4228
          %4441 = vmatpush1.bf16.msra.mxu0 %v4227
          %4442 = vmatprep.subr.bf16.mxu0 0
          %4443 = vmatpush2.bf16.msra.mxu0 0
          %4444 = vmatprep.subr.bf16.mxu0 0
          %4445 = vmatpush2.bf16.msra.mxu0 0
          %4446 = vmatprep.subr.bf16.mxu0 0
          %4447 = vmatpush2.bf16.msra.mxu0 0
          %4448 = vmatprep.subr.bf16.mxu0 0
          %4449 = vmatpush2.bf16.msra.mxu0 0
          %4450 = vmatprep.subr.bf16.mxu0 0
          %4451 = vmatpush2.bf16.msra.mxu0 0
          %4452 = vmatprep.subr.bf16.mxu0 0
          %4453 = vmatpush2.bf16.msra.mxu0 0
          %4454 = vmatprep.subr.bf16.mxu0 0
          %4455 = vmatpush2.bf16.msra.mxu0 0
          %4456 = vmatprep.subr.bf16.mxu0 0
          %4457 = vmatpush2.bf16.msra.mxu0 0
          %4458 = vmatprep.mubr.bf16.mxu0 0
          %4459 = vmatmul.mubr.bf16.gmra.mxu0 %v3904
          %v4460 = vpop.f32.mrf.mxu0
          %v4461 = vadd.f32 0.0, %v4460
          %v4462 = vpop.f32.mrf.mxu0
          %v4463 = vadd.f32 0.0, %v4462
          %v4464 = vpop.f32.mrf.mxu0
          %v4465 = vpop.f32.mrf.mxu0
          %4466 = vdwg.mxu0
          %4467 = vmatprep.subr.bf16.mxu0 %v4300
          %4468 = vmatpush1.bf16.msra.mxu0 %v4299
          %4469 = vmatprep.subr.bf16.mxu0 %v4290
          %4470 = vmatpush1.bf16.msra.mxu0 %v4289
          %4471 = vmatprep.subr.bf16.mxu0 %v4280
          %4472 = vmatpush1.bf16.msra.mxu0 %v4279
          %4473 = vmatprep.subr.bf16.mxu0 %v4270
          %4474 = vmatpush1.bf16.msra.mxu0 %v4269
          %4475 = vmatprep.subr.bf16.mxu0 %v4260
          %4476 = vmatpush1.bf16.msra.mxu0 %v4259
          %4477 = vmatprep.subr.bf16.mxu0 %v4250
          %4478 = vmatpush1.bf16.msra.mxu0 %v4249
          %4479 = vmatprep.subr.bf16.mxu0 %v4240
          %4480 = vmatpush1.bf16.msra.mxu0 %v4239
          %4481 = vmatprep.subr.bf16.mxu0 %v4230
          %4482 = vmatpush1.bf16.msra.mxu0 %v4229
          %4483 = vmatprep.subr.bf16.mxu0 0
          %4484 = vmatpush2.bf16.msra.mxu0 0
          %4485 = vmatprep.subr.bf16.mxu0 0
          %4486 = vmatpush2.bf16.msra.mxu0 0
          %4487 = vmatprep.subr.bf16.mxu0 0
          %4488 = vmatpush2.bf16.msra.mxu0 0
          %4489 = vmatprep.subr.bf16.mxu0 0
          %4490 = vmatpush2.bf16.msra.mxu0 0
          %4491 = vmatprep.subr.bf16.mxu0 0
          %4492 = vmatpush2.bf16.msra.mxu0 0
          %4493 = vmatprep.subr.bf16.mxu0 0
          %4494 = vmatpush2.bf16.msra.mxu0 0
          %4495 = vmatprep.subr.bf16.mxu0 0
          %4496 = vmatpush2.bf16.msra.mxu0 0
          %4497 = vmatprep.subr.bf16.mxu0 0
          %4498 = vmatpush2.bf16.msra.mxu0 0
          %4499 = vmatprep.mubr.bf16.mxu0 0
          %4500 = vmatmul.mubr.bf16.gmra.mxu0 %v3904
          %v4501 = vpop.f32.mrf.mxu0
          %v4502 = vadd.f32 0.0, %v4501
          %v4503 = vpop.f32.mrf.mxu0
          %v4504 = vadd.f32 0.0, %v4503
          %v4505 = vpop.f32.mrf.mxu0
          %v4506 = vpop.f32.mrf.mxu0
          %4507 = vdwg.mxu0
          %4508 = vmatprep.subr.bf16.mxu0 %v4302
          %4509 = vmatpush1.bf16.msra.mxu0 %v4301
          %4510 = vmatprep.subr.bf16.mxu0 %v4292
          %4511 = vmatpush1.bf16.msra.mxu0 %v4291
          %4512 = vmatprep.subr.bf16.mxu0 %v4282
          %4513 = vmatpush1.bf16.msra.mxu0 %v4281
          %4514 = vmatprep.subr.bf16.mxu0 %v4272
          %4515 = vmatpush1.bf16.msra.mxu0 %v4271
          %4516 = vmatprep.subr.bf16.mxu0 %v4262
          %4517 = vmatpush1.bf16.msra.mxu0 %v4261
          %4518 = vmatprep.subr.bf16.mxu0 %v4252
          %4519 = vmatpush1.bf16.msra.mxu0 %v4251
          %4520 = vmatprep.subr.bf16.mxu0 %v4242
          %4521 = vmatpush1.bf16.msra.mxu0 %v4241
          %4522 = vmatprep.subr.bf16.mxu0 %v4232
          %4523 = vmatpush1.bf16.msra.mxu0 %v4231
          %4524 = vmatprep.subr.bf16.mxu0 0
          %4525 = vmatpush2.bf16.msra.mxu0 0
          %4526 = vmatprep.subr.bf16.mxu0 0
          %4527 = vmatpush2.bf16.msra.mxu0 0
          %4528 = vmatprep.subr.bf16.mxu0 0
          %4529 = vmatpush2.bf16.msra.mxu0 0
          %4530 = vmatprep.subr.bf16.mxu0 0
          %4531 = vmatpush2.bf16.msra.mxu0 0
          %4532 = vmatprep.subr.bf16.mxu0 0
          %4533 = vmatpush2.bf16.msra.mxu0 0
          %4534 = vmatprep.subr.bf16.mxu0 0
          %4535 = vmatpush2.bf16.msra.mxu0 0
          %4536 = vmatprep.subr.bf16.mxu0 0
          %4537 = vmatpush2.bf16.msra.mxu0 0
          %4538 = vmatprep.subr.bf16.mxu0 0
          %4539 = vmatpush2.bf16.msra.mxu0 0
          %4540 = vmatprep.mubr.bf16.mxu0 0
          %4541 = vmatmul.mubr.bf16.gmra.mxu0 %v3904
          %v4542 = vpop.f32.mrf.mxu0
          %v4543 = vadd.f32 0.0, %v4542
          %v4544 = vpop.f32.mrf.mxu0
          %v4545 = vadd.f32 0.0, %v4544
          %v4546 = vpop.f32.mrf.mxu0
          %v4547 = vpop.f32.mrf.mxu0
          %4548 = vdwg.mxu0
          %4549 = vmatprep.subr.bf16.mxu0 %v4304
          %4550 = vmatpush1.bf16.msra.mxu0 %v4303
          %4551 = vmatprep.subr.bf16.mxu0 %v4294
          %4552 = vmatpush1.bf16.msra.mxu0 %v4293
          %4553 = vmatprep.subr.bf16.mxu0 %v4284
          %4554 = vmatpush1.bf16.msra.mxu0 %v4283
          %4555 = vmatprep.subr.bf16.mxu0 %v4274
          %4556 = vmatpush1.bf16.msra.mxu0 %v4273
          %4557 = vmatprep.subr.bf16.mxu0 %v4264
          %4558 = vmatpush1.bf16.msra.mxu0 %v4263
          %4559 = vmatprep.subr.bf16.mxu0 %v4254
          %4560 = vmatpush1.bf16.msra.mxu0 %v4253
          %4561 = vmatprep.subr.bf16.mxu0 %v4244
          %4562 = vmatpush1.bf16.msra.mxu0 %v4243
          %4563 = vmatprep.subr.bf16.mxu0 %v4234
          %4564 = vmatpush1.bf16.msra.mxu0 %v4233
          %4565 = vmatprep.subr.bf16.mxu0 0
          %4566 = vmatpush2.bf16.msra.mxu0 0
          %4567 = vmatprep.subr.bf16.mxu0 0
          %4568 = vmatpush2.bf16.msra.mxu0 0
          %4569 = vmatprep.subr.bf16.mxu0 0
          %4570 = vmatpush2.bf16.msra.mxu0 0
          %4571 = vmatprep.subr.bf16.mxu0 0
          %4572 = vmatpush2.bf16.msra.mxu0 0
          %4573 = vmatprep.subr.bf16.mxu0 0
          %4574 = vmatpush2.bf16.msra.mxu0 0
          %4575 = vmatprep.subr.bf16.mxu0 0
          %4576 = vmatpush2.bf16.msra.mxu0 0
          %4577 = vmatprep.subr.bf16.mxu0 0
          %4578 = vmatpush2.bf16.msra.mxu0 0
          %4579 = vmatprep.subr.bf16.mxu0 0
          %4580 = vmatpush2.bf16.msra.mxu0 0
          %4581 = vmatprep.mubr.bf16.mxu0 0
          %4582 = vmatmul.mubr.bf16.gmra.mxu0 %v3904
          %v4583 = vpop.f32.mrf.mxu0
          %v4584 = vadd.f32 0.0, %v4583
          %v4585 = vpop.f32.mrf.mxu0
          %v4586 = vadd.f32 0.0, %v4585
          %v4587 = vpop.f32.mrf.mxu0
          %v4588 = vpop.f32.mrf.mxu0
          %4589 = vdwg.mxu0
          %v4600 = vcombine.low %v4420, %v4422
          %v4601 = vcombine.low %v4461, %v4463
          %v4603 = vunpack.c.l.s4 1983009808
          %v4604 = vunpack.c.0.s8 %v4603
          %v4605 = vlaneseq
          %v4606 = vshrl.u32 %v4605, 7
          %v4607 = vsub.s32 %v4604, %v4606
          %v4608 = vrot.slane %v4600, %v4607
          %v4610 = vunpack.c.l.s4 1983009808
          %v4611 = vunpack.c.0.s8 %v4610
          %v4612 = vlaneseq
          %v4613 = vshrl.u32 %v4612, 7
          %v4614 = vsub.s32 %v4611, %v4613
          %v4615 = vrot.slane %v4601, %v4614
          %v4616 = vcombine.low %v4608, %v4615
          %v4617 = vcombine.low %v4502, %v4504
          %v4618 = vcombine.low %v4543, %v4545
          %v4620 = vunpack.c.l.s4 1983009808
          %v4621 = vunpack.c.0.s8 %v4620
          %v4622 = vlaneseq
          %v4623 = vshrl.u32 %v4622, 7
          %v4624 = vsub.s32 %v4621, %v4623
          %v4625 = vrot.slane %v4617, %v4624
          %v4627 = vunpack.c.l.s4 1983009808
          %v4628 = vunpack.c.0.s8 %v4627
          %v4629 = vlaneseq
          %v4630 = vshrl.u32 %v4629, 7
          %v4631 = vsub.s32 %v4628, %v4630
          %v4632 = vrot.slane %v4618, %v4631
          %v4633 = vcombine.low %v4625, %v4632
          %v4634 = vcombine.low %v4584, %v4586
          %v4636 = vunpack.c.l.s4 1983009808
          %v4637 = vunpack.c.0.s8 %v4636
          %v4638 = vlaneseq
          %v4639 = vshrl.u32 %v4638, 7
          %v4640 = vsub.s32 %v4637, %v4639
          %v4641 = vrot.slane %v4634, %v4640
          %4645 = vst [vmem:[#allocation20] sm:$0xff] %v4616
          %4646 = vst [vmem:[#allocation20 + $0x8] sm:$0xff] %v4633
          %4647 = vst [vmem:[#allocation20 + $0x10] sm:$0xf] %v4641
        $region120: #{swav_forward.1} parent=67 // pred_fallthru
          _
        // Predicated region
        $region121: #{swav_forward.1} parent=67 // pred_check
          %p4648 = pneg %p317
        $region122: #{swav_forward.1} parent=67 // pred_check_branch
          %4650 = sbr.rel (%p4648) target = $region124
        $region123: #{swav_forward.1} parent=67 // pred_region
          %s4652 = ssub.s32 320, 320
          %4653 = vsyncadd [#allocation7], %s4652
          %s4655 = sshll.u32 [#allocation20], 4
          %s4656 = int_to_ptr.vmem [resolvable:$true] %s4655
          %4658 = dma.vmem_to_hbm [thread:$0]  %s4656, 320, %s12, [#allocation7]
        $region124: #{swav_forward.1} parent=67 // pred_fallthru
          _
        // Predicated region
        $region125: #{swav_forward.1} parent=67 // pred_check
          %p4659 = pneg %p317
        $region126: #{swav_forward.1} parent=67 // pred_check_branch
          %4661 = sbr.rel (%p4659) target = $region128
        $region127: #{swav_forward.1} parent=67 // pred_region
          %4662 = dma.done [#allocation7], 320
        $region128: #{swav_forward.1} parent=67 // pred_fallthru
          _
      $region68: #{swav_forward.1} parent=5 // pred_fallthru
        _
      %p4663 = scmp.le.s32.totalorder 2, %s22
      // Predicated region
      $region129: #{swav_forward.1} parent=5 // pred_check
        %p4664 = pneg %p4663
      $region130: #{swav_forward.1} parent=5 // pred_check_branch
        %4666 = sbr.rel (%p4664) target = $region132
      $region131: #{swav_forward.1} parent=5 // pred_region
        %s4667 = ssub.s32 %s22, 2
      $region132: #{swav_forward.1} parent=5 // pred_fallthru
        _
    $region6: #{swav_forward.1} parent=1 // loop_footer
      %s26 = sadd.s32 1, %s22
    $region7: #{swav_forward.1} parent=1 // loop_footer_branch
      %21 = sbr.rel target = $region3
    $region8: #{swav_forward.1} parent=1 // loop_exit
      _
    %4668 = vsyncpa [#allocation6], 1
    %s4669 = scalar_lea.sflag [#allocation6], 1
    %4670 = vsyncpa %s4669, 1
    %4671 = vsyncpa [#allocation9], 1
    %4672 = vsyncpa [#allocation12], 1
    %4673 = vsyncpa [#allocation7], 1
    %s4674 = scalar_lea.sflag [#allocation7], 1
    %4675 = vsyncpa %s4674, 1

</llo_original>
